<compile_context>
chip_gen: v7x
topology: tpu7x:2x2x1
jax: 0.10.0
libtpu: 0.0.40
codegen_flags: <defaults>
</compile_context>

<pallas_src>
import jax
import jax.numpy as jnp
from jax import lax
from jax.experimental import pallas as pl
from jax.experimental.pallas import tpu as pltpu


def _round_up(a, b):
    return (a + b - 1) // b * b


def _br_kernel(x_ref, w1_ref, b1_ref, w2_ref, b2_ref, o_ref, xpad_ref, ypad_ref):
    """One block of Nb images per grid step.

    x_ref    : (Nb, H, W, C)          f32   input images (single DMA; also the residual)
    w1_ref   : (3, 3C, C)             bf16  conv1 weight, kx-major, rows (ky, c_in)
    b1_ref   : (1, C)                 f32
    w2_ref   : (3, 3C, C)             bf16  conv2 weight
    b2_ref   : (1, C)                 f32
    o_ref    : (Nb, H, W, C)          f32   output block
    xpad_ref : (Nb, H+2, Wpa, C)      bf16  VMEM scratch: zero-padded x (Wpa = rup(W+2, 8))
    ypad_ref : (Nb, H+2, Wpa, C)      bf16  VMEM scratch: zero-padded relu(conv1(x))
    """
    Nb, H, W, C = x_ref.shape
    Hp = H + 2                       # exact padded height (outer, untiled dim)
    Wpa = xpad_ref.shape[2]          # sublane-aligned padded width (>= W + 2)
    M = Nb * H * W

    # Scratches are uninitialized and persist across grid steps (and per-core on
    # v7x megacore), so the 1-wide halo is zeroed EVERY step — it is only
    # ~2*(Hp + Wpa)*C elements.  Columns beyond W+1 are never read by any tap.
    def zero_halo(pad_ref):
        zrow = jnp.zeros((Nb, 1, Wpa, C), pad_ref.dtype)
        pad_ref[:, 0:1, :, :] = zrow               # top halo row
        pad_ref[:, Hp - 1:Hp, :, :] = zrow         # bottom halo row
        zcol = jnp.zeros((Nb, Hp, 1, C), pad_ref.dtype)
        pad_ref[:, :, 0:1, :] = zcol               # left halo column
        pad_ref[:, :, W + 1:W + 2, :] = zcol       # right halo column

    zero_halo(xpad_ref)
    zero_halo(ypad_ref)

    x = x_ref[...]                                            # (Nb,H,W,C) f32 residual
    # single f32 -> bf16 cast of x, on the interior write (review opt #1)
    xpad_ref[:, 1:H + 1, 1:W + 1, :] = x.astype(jnp.bfloat16)

    def conv3x3(pad_ref, w_ref, b_ref):
        # kx-looped im2col (review opt #2): one sublane-shifted slice per kx, the
        # 3 ky taps are free outer-dim slices of the loaded column; 3 accumulated
        # (M, 3C) @ (3C, C) bf16 matmuls with f32 accumulation.
        acc = jnp.zeros((M, C), jnp.float32)
        for kx in range(3):
            col = pad_ref[:, :, kx:kx + W, :]                 # (Nb, Hp, W, C) bf16
            taps = [col[:, ky:ky + H] for ky in range(3)]     # outer-dim value slices
            p = jnp.concatenate(taps, axis=-1)                # (Nb, H, W, 3C) bf16
            p = p.reshape(M, 3 * C)                           # last dim unchanged: cheap
            acc = acc + jnp.dot(p, w_ref[kx],
                                preferred_element_type=jnp.float32)
        return acc + b_ref[...]                               # (M, C) f32

    # conv1 + ReLU (f32 elementwise), single cast on the ypad interior write
    y = jnp.maximum(conv3x3(xpad_ref, w1_ref, b1_ref), 0.0)   # (M, C) f32
    ypad_ref[:, 1:H + 1, 1:W + 1, :] = y.reshape(Nb, H, W, C).astype(jnp.bfloat16)

    # conv2 + residual add (residual read straight from the single f32 x block)
    r = conv3x3(ypad_ref, w2_ref, b2_ref)                     # (M, C) f32
    o_ref[...] = x + r.reshape(Nb, H, W, C)


def _vmem_bytes_estimate(Nb, H, W, C):
    """Rough per-step VMEM footprint (double-buffered I/O blocks + scratches + temps)."""
    Hp, Wpa = H + 2, _round_up(W + 2, 8)
    x_blk = Nb * H * W * C * 4             # f32 input block
    o_blk = Nb * H * W * C * 4             # f32 output block
    scr = 2 * Nb * Hp * Wpa * C * 2        # two bf16 padded scratches
    wgt = 2 * 2 * 9 * C * C * 2            # two bf16 kx-major weights (double-buffered)
    im2col = Nb * H * W * 3 * C * 2        # peak (M, 3C) bf16 temporary per kx
    acc = Nb * H * W * C * 4               # f32 accumulator
    # inputs/outputs are double-buffered by the pipeline; headroom for compiler temps
    return 2 * (x_blk + o_blk) + scr + wgt + 4 * (im2col + acc)


def _pick_images_per_step(N, H, W, C, budget_bytes=40 * 2**20):
    """Largest divisor of N fitting the VMEM budget, keeping >= 2 grid steps."""
    best = 1
    for nb in range(1, N + 1):
        if N % nb:
            continue
        if N >= 2 and N // nb < 2:      # keep both v7x TensorCores busy / keep pipelining
            continue
        if _vmem_bytes_estimate(nb, H, W, C) <= budget_bytes:
            best = nb
    return best


def br_forward_nhwc(x_nhwc, w1_hwio, b1, w2_hwio, b2, *, images_per_step=None):
    """x_nhwc: (N, H, W, C) f32; weights HWIO (3,3,C,C); biases (C,)."""
    N, H, W, C = x_nhwc.shape
    Hp, Wpa = H + 2, _round_up(W + 2, 8)

    if images_per_step is None:
        images_per_step = _pick_images_per_step(N, H, W, C)
    Nb = images_per_step
    assert N % Nb == 0, "batch must be divisible by images_per_step"
    grid = (N // Nb,)

    # Weight prep once in the wrapper: (ky,kx,ci,co) -> kx-major slabs (3, 3C, C),
    # rows ordered (ky, c_in) to match the kernel's tap concatenation; bf16 for MXU.
    w1_k = jnp.transpose(w1_hwio, (1, 0, 2, 3)).reshape(3, 3 * C, C).astype(jnp.bfloat16)
    w2_k = jnp.transpose(w2_hwio, (1, 0, 2, 3)).reshape(3, 3 * C, C).astype(jnp.bfloat16)
    b1_2d = b1.reshape(1, C).astype(jnp.float32)
    b2_2d = b2.reshape(1, C).astype(jnp.float32)

    # Pin the VMEM budget; cap at 48 MiB so the same kernel fits v7x (64 MiB physical).
    vmem_limit = int(min(48 * 2**20,
                         max(16 * 2**20, 2 * _vmem_bytes_estimate(Nb, H, W, C))))

    out = pl.pallas_call(
        _br_kernel,
        out_shape=jax.ShapeDtypeStruct((N, H, W, C), jnp.float32),
        grid=grid,
        in_specs=[
            pl.BlockSpec((Nb, H, W, C), lambda n: (n, 0, 0, 0)),   # x  (Nb images/step)
            pl.BlockSpec((3, 3 * C, C), lambda n: (0, 0, 0)),      # w1 (kx-major)
            pl.BlockSpec((1, C), lambda n: (0, 0)),                # b1
            pl.BlockSpec((3, 3 * C, C), lambda n: (0, 0, 0)),      # w2
            pl.BlockSpec((1, C), lambda n: (0, 0)),                # b2
        ],
        out_specs=pl.BlockSpec((Nb, H, W, C), lambda n: (n, 0, 0, 0)),
        scratch_shapes=[
            pltpu.VMEM((Nb, Hp, Wpa, C), jnp.bfloat16),            # xpad (bf16, aligned W)
            pltpu.VMEM((Nb, Hp, Wpa, C), jnp.bfloat16),            # ypad
        ],
        compiler_params=pltpu.CompilerParams(
            dimension_semantics=("parallel",),                     # batch axis -> 2 TCs on v7x
            vmem_limit_bytes=vmem_limit,
        ),
    )(x_nhwc, w1_k, b1_2d, w2_k, b2_2d)
    return out


def br_forward_nchw(x_nchw, w1_hwio, b1, w2_hwio, b2):
    """Matches the PyTorch module interface: NCHW in, NCHW out.

    The two transposes below each cost a full HBM read+write of the activation;
    production code should keep the surrounding model NHWC and call
    br_forward_nhwc directly (review opt #7).
    """
    x_nhwc = jnp.transpose(x_nchw, (0, 2, 3, 1))
    y = br_forward_nhwc(x_nhwc, w1_hwio, b1, w2_hwio, b2)
    return jnp.transpose(y, (0, 3, 1, 2))


def _reference_nhwc(x_nhwc, w1, b1, w2, b2):
    """Pure-JAX f32 reference (lax conv) for correctness checking."""
    dn = ("NHWC", "HWIO", "NHWC")
    y = lax.conv_general_dilated(x_nhwc, w1, (1, 1), "SAME", dimension_numbers=dn)
    y = jnp.maximum(y + b1.reshape(1, 1, 1, -1), 0.0)
    y = lax.conv_general_dilated(y, w2, (1, 1), "SAME", dimension_numbers=dn)
    y = y + b2.reshape(1, 1, 1, -1)
    return x_nhwc + y


if __name__ == "__main__":
    N, C, H, W = 2, 4, 16, 16

    key = jax.random.PRNGKey(0)
    kx, kw1, kb1, kw2, kb2 = jax.random.split(key, 5)

    # Synthetic parameters with the shapes of nn.Conv2d(C, C, 3, padding=1),
    # generated directly in HWIO layout.
    x_nchw = jax.random.normal(kx, (N, C, H, W), dtype=jnp.float32)
    w1 = jax.random.normal(kw1, (3, 3, C, C), dtype=jnp.float32) * 0.1
    b1 = jax.random.normal(kb1, (C,), dtype=jnp.float32) * 0.1
    w2 = jax.random.normal(kw2, (3, 3, C, C), dtype=jnp.float32) * 0.1
    b2 = jax.random.normal(kb2, (C,), dtype=jnp.float32) * 0.1

    out = jax.block_until_ready(br_forward_nchw(x_nchw, w1, b1, w2, b2))

    # Correctness check against a pure-JAX f32 reference (kernel feeds the MXU bf16
    # operands with f32 accumulation, hence the loosened tolerance).
    x_nhwc = jnp.transpose(x_nchw, (0, 2, 3, 1))
    ref = jnp.transpose(_reference_nhwc(x_nhwc, w1, b1, w2, b2), (0, 3, 1, 2))
    assert out.shape == (N, C, H, W)
    max_err = jnp.max(jnp.abs(out - ref))
    assert jnp.allclose(out, ref, atol=2e-2, rtol=2e-2), (
        f"mismatch vs reference, max abs err {max_err}")

    print("KERNEL_OK")
</pallas_src>

<mosaic_0001>
module attributes {stable_mosaic.version = 11 : i64} {
  func.func @_br_kernel(%arg0: i32, %arg1: memref<1x16x16x4xf32, #tpu.memory_space<vmem>>, %arg2: memref<3x12x4xbf16, #tpu.memory_space<vmem>>, %arg3: memref<1x4xf32, #tpu.memory_space<vmem>>, %arg4: memref<3x12x4xbf16, #tpu.memory_space<vmem>>, %arg5: memref<1x4xf32, #tpu.memory_space<vmem>>, %arg6: memref<1x16x16x4xf32, #tpu.memory_space<vmem>>, %arg7: memref<1x18x24x4xbf16, #tpu.memory_space<vmem>>, %arg8: memref<1x18x24x4xbf16, #tpu.memory_space<vmem>>) attributes {dimension_semantics = [#tpu.dimension_semantics<parallel>], iteration_bounds = array<i64: 2>, scalar_prefetch = 0 : i64, scratch_operands = 2 : i64, tpu.core_type = #tpu.core_type<tc>, window_params = [{transform_indices = @transform_0, window_bounds = array<i64: 1, 16, 16, 4>}, {pipeline_mode = #tpu.pipeline_mode<synchronous>, transform_indices = @transform_1, window_bounds = array<i64: 3, 12, 4>}, {pipeline_mode = #tpu.pipeline_mode<synchronous>, transform_indices = @transform_2, window_bounds = array<i64: 1, 4>}, {pipeline_mode = #tpu.pipeline_mode<synchronous>, transform_indices = @transform_3, window_bounds = array<i64: 3, 12, 4>}, {pipeline_mode = #tpu.pipeline_mode<synchronous>, transform_indices = @transform_4, window_bounds = array<i64: 1, 4>}, {transform_indices = @transform_5, window_bounds = array<i64: 1, 16, 16, 4>}]} {
    %cst = arith.constant 0.000000e+00 : bf16
    %0 = vector.broadcast %cst : bf16 to vector<1x1x24x4xbf16>
    %c0 = arith.constant 0 : index
    %c0_0 = arith.constant 0 : index
    %c0_1 = arith.constant 0 : index
    %c0_2 = arith.constant 0 : index
    %1 = vector.load %arg7[%c0, %c0_0, %c0_1, %c0_2] : memref<1x18x24x4xbf16, #tpu.memory_space<vmem>>, vector<1x1x24x4xbf16>
    tpu.vector_store %arg7[%c0, %c0_0, %c0_1, %c0_2], %0 {strides = array<i32>} : memref<1x18x24x4xbf16, #tpu.memory_space<vmem>>, vector<1x1x24x4xbf16>,
    %c0_3 = arith.constant 0 : index
    %c17 = arith.constant 17 : index
    %c0_4 = arith.constant 0 : index
    %c0_5 = arith.constant 0 : index
    %2 = vector.load %arg7[%c0_3, %c17, %c0_4, %c0_5] : memref<1x18x24x4xbf16, #tpu.memory_space<vmem>>, vector<1x1x24x4xbf16>
    tpu.vector_store %arg7[%c0_3, %c17, %c0_4, %c0_5], %0 {strides = array<i32>} : memref<1x18x24x4xbf16, #tpu.memory_space<vmem>>, vector<1x1x24x4xbf16>,
    %cst_6 = arith.constant 0.000000e+00 : bf16
    %3 = vector.broadcast %cst_6 : bf16 to vector<1x18x1x4xbf16>
    %c0_7 = arith.constant 0 : index
    %c0_8 = arith.constant 0 : index
    %c0_9 = arith.constant 0 : index
    %c0_10 = arith.constant 0 : index
    %4 = vector.load %arg7[%c0_7, %c0_8, %c0_9, %c0_10] : memref<1x18x24x4xbf16, #tpu.memory_space<vmem>>, vector<1x18x1x4xbf16>
    tpu.vector_store %arg7[%c0_7, %c0_8, %c0_9, %c0_10], %3 {strides = array<i32>} : memref<1x18x24x4xbf16, #tpu.memory_space<vmem>>, vector<1x18x1x4xbf16>,
    %c0_11 = arith.constant 0 : index
    %c0_12 = arith.constant 0 : index
    %c17_13 = arith.constant 17 : index
    %c0_14 = arith.constant 0 : index
    %5 = vector.load %arg7[%c0_11, %c0_12, %c17_13, %c0_14] : memref<1x18x24x4xbf16, #tpu.memory_space<vmem>>, vector<1x18x1x4xbf16>
    tpu.vector_store %arg7[%c0_11, %c0_12, %c17_13, %c0_14], %3 {strides = array<i32>} : memref<1x18x24x4xbf16, #tpu.memory_space<vmem>>, vector<1x18x1x4xbf16>,
    %cst_15 = arith.constant 0.000000e+00 : bf16
    %6 = vector.broadcast %cst_15 : bf16 to vector<1x1x24x4xbf16>
    %c0_16 = arith.constant 0 : index
    %c0_17 = arith.constant 0 : index
    %c0_18 = arith.constant 0 : index
    %c0_19 = arith.constant 0 : index
    %7 = vector.load %arg8[%c0_16, %c0_17, %c0_18, %c0_19] : memref<1x18x24x4xbf16, #tpu.memory_space<vmem>>, vector<1x1x24x4xbf16>
    tpu.vector_store %arg8[%c0_16, %c0_17, %c0_18, %c0_19], %6 {strides = array<i32>} : memref<1x18x24x4xbf16, #tpu.memory_space<vmem>>, vector<1x1x24x4xbf16>,
    %c0_20 = arith.constant 0 : index
    %c17_21 = arith.constant 17 : index
    %c0_22 = arith.constant 0 : index
    %c0_23 = arith.constant 0 : index
    %8 = vector.load %arg8[%c0_20, %c17_21, %c0_22, %c0_23] : memref<1x18x24x4xbf16, #tpu.memory_space<vmem>>, vector<1x1x24x4xbf16>
    tpu.vector_store %arg8[%c0_20, %c17_21, %c0_22, %c0_23], %6 {strides = array<i32>} : memref<1x18x24x4xbf16, #tpu.memory_space<vmem>>, vector<1x1x24x4xbf16>,
    %cst_24 = arith.constant 0.000000e+00 : bf16
    %9 = vector.broadcast %cst_24 : bf16 to vector<1x18x1x4xbf16>
    %c0_25 = arith.constant 0 : index
    %c0_26 = arith.constant 0 : index
    %c0_27 = arith.constant 0 : index
    %c0_28 = arith.constant 0 : index
    %10 = vector.load %arg8[%c0_25, %c0_26, %c0_27, %c0_28] : memref<1x18x24x4xbf16, #tpu.memory_space<vmem>>, vector<1x18x1x4xbf16>
    tpu.vector_store %arg8[%c0_25, %c0_26, %c0_27, %c0_28], %9 {strides = array<i32>} : memref<1x18x24x4xbf16, #tpu.memory_space<vmem>>, vector<1x18x1x4xbf16>,
    %c0_29 = arith.constant 0 : index
    %c0_30 = arith.constant 0 : index
    %c17_31 = arith.constant 17 : index
    %c0_32 = arith.constant 0 : index
    %11 = vector.load %arg8[%c0_29, %c0_30, %c17_31, %c0_32] : memref<1x18x24x4xbf16, #tpu.memory_space<vmem>>, vector<1x18x1x4xbf16>
    tpu.vector_store %arg8[%c0_29, %c0_30, %c17_31, %c0_32], %9 {strides = array<i32>} : memref<1x18x24x4xbf16, #tpu.memory_space<vmem>>, vector<1x18x1x4xbf16>,
    %c0_33 = arith.constant 0 : index
    %c0_34 = arith.constant 0 : index
    %c0_35 = arith.constant 0 : index
    %c0_36 = arith.constant 0 : index
    %12 = vector.load %arg1[%c0_33, %c0_34, %c0_35, %c0_36] : memref<1x16x16x4xf32, #tpu.memory_space<vmem>>, vector<1x16x16x4xf32>
    %13 = arith.truncf %12 : vector<1x16x16x4xf32> to vector<1x16x16x4xbf16>
    %c0_37 = arith.constant 0 : index
    %c1 = arith.constant 1 : index
    %c1_38 = arith.constant 1 : index
    %c0_39 = arith.constant 0 : index
    %14 = vector.load %arg7[%c0_37, %c1, %c1_38, %c0_39] : memref<1x18x24x4xbf16, #tpu.memory_space<vmem>>, vector<1x16x16x4xbf16>
    tpu.vector_store %arg7[%c0_37, %c1, %c1_38, %c0_39], %13 {strides = array<i32>} : memref<1x18x24x4xbf16, #tpu.memory_space<vmem>>, vector<1x16x16x4xbf16>,
    %cst_40 = arith.constant 0.000000e+00 : f32
    %15 = vector.broadcast %cst_40 : f32 to vector<256x4xf32>
    %c0_41 = arith.constant 0 : index
    %c0_42 = arith.constant 0 : index
    %c0_43 = arith.constant 0 : index
    %c0_44 = arith.constant 0 : index
    %16 = vector.load %arg7[%c0_41, %c0_42, %c0_43, %c0_44] : memref<1x18x24x4xbf16, #tpu.memory_space<vmem>>, vector<1x18x16x4xbf16>
    %17 = vector.extract_strided_slice %16 {offsets = [0, 0, 0, 0], sizes = [1, 16, 16, 4], strides = [1, 1, 1, 1]} : vector<1x18x16x4xbf16> to vector<1x16x16x4xbf16>
    %18 = vector.extract_strided_slice %16 {offsets = [0, 1, 0, 0], sizes = [1, 16, 16, 4], strides = [1, 1, 1, 1]} : vector<1x18x16x4xbf16> to vector<1x16x16x4xbf16>
    %19 = vector.extract_strided_slice %16 {offsets = [0, 2, 0, 0], sizes = [1, 16, 16, 4], strides = [1, 1, 1, 1]} : vector<1x18x16x4xbf16> to vector<1x16x16x4xbf16>
    %20 = tpu.concatenate %17, %18, %19 in 3 : vector<1x16x16x4xbf16>, vector<1x16x16x4xbf16>, vector<1x16x16x4xbf16> -> vector<1x16x16x12xbf16>
    %21 = vector.shape_cast %20 : vector<1x16x16x12xbf16> to vector<256x12xbf16>
    %c0_45 = arith.constant 0 : index
    %c0_46 = arith.constant 0 : index
    %c0_47 = arith.constant 0 : index
    %22 = vector.load %arg2[%c0_45, %c0_46, %c0_47] : memref<3x12x4xbf16, #tpu.memory_space<vmem>>, vector<1x12x4xbf16>
    %23 = vector.shape_cast %22 : vector<1x12x4xbf16> to vector<12x4xbf16>
    %cst_48 = arith.constant dense<0.000000e+00> : vector<256x4xf32>
    %24 = tpu.matmul %21, %23, %cst_48 {dimension_numbers = #tpu.dot_dimension_numbers<[1], [0], [0], [1], [0, 0, 1, 1], [], []>} : vector<256x12xbf16>, vector<12x4xbf16>, vector<256x4xf32> -> vector<256x4xf32>
    %25 = arith.addf %15, %24 : vector<256x4xf32>
    %c0_49 = arith.constant 0 : index
    %c0_50 = arith.constant 0 : index
    %c1_51 = arith.constant 1 : index
    %c0_52 = arith.constant 0 : index
    %26 = vector.load %arg7[%c0_49, %c0_50, %c1_51, %c0_52] : memref<1x18x24x4xbf16, #tpu.memory_space<vmem>>, vector<1x18x16x4xbf16>
    %27 = vector.extract_strided_slice %26 {offsets = [0, 0, 0, 0], sizes = [1, 16, 16, 4], strides = [1, 1, 1, 1]} : vector<1x18x16x4xbf16> to vector<1x16x16x4xbf16>
    %28 = vector.extract_strided_slice %26 {offsets = [0, 1, 0, 0], sizes = [1, 16, 16, 4], strides = [1, 1, 1, 1]} : vector<1x18x16x4xbf16> to vector<1x16x16x4xbf16>
    %29 = vector.extract_strided_slice %26 {offsets = [0, 2, 0, 0], sizes = [1, 16, 16, 4], strides = [1, 1, 1, 1]} : vector<1x18x16x4xbf16> to vector<1x16x16x4xbf16>
    %30 = tpu.concatenate %27, %28, %29 in 3 : vector<1x16x16x4xbf16>, vector<1x16x16x4xbf16>, vector<1x16x16x4xbf16> -> vector<1x16x16x12xbf16>
    %31 = vector.shape_cast %30 : vector<1x16x16x12xbf16> to vector<256x12xbf16>
    %c1_53 = arith.constant 1 : index
    %c0_54 = arith.constant 0 : index
    %c0_55 = arith.constant 0 : index
    %32 = vector.load %arg2[%c1_53, %c0_54, %c0_55] : memref<3x12x4xbf16, #tpu.memory_space<vmem>>, vector<1x12x4xbf16>
    %33 = vector.shape_cast %32 : vector<1x12x4xbf16> to vector<12x4xbf16>
    %cst_56 = arith.constant dense<0.000000e+00> : vector<256x4xf32>
    %34 = tpu.matmul %31, %33, %cst_56 {dimension_numbers = #tpu.dot_dimension_numbers<[1], [0], [0], [1], [0, 0, 1, 1], [], []>} : vector<256x12xbf16>, vector<12x4xbf16>, vector<256x4xf32> -> vector<256x4xf32>
    %35 = arith.addf %25, %34 : vector<256x4xf32>
    %c0_57 = arith.constant 0 : index
    %c0_58 = arith.constant 0 : index
    %c2 = arith.constant 2 : index
    %c0_59 = arith.constant 0 : index
    %36 = vector.load %arg7[%c0_57, %c0_58, %c2, %c0_59] : memref<1x18x24x4xbf16, #tpu.memory_space<vmem>>, vector<1x18x16x4xbf16>
    %37 = vector.extract_strided_slice %36 {offsets = [0, 0, 0, 0], sizes = [1, 16, 16, 4], strides = [1, 1, 1, 1]} : vector<1x18x16x4xbf16> to vector<1x16x16x4xbf16>
    %38 = vector.extract_strided_slice %36 {offsets = [0, 1, 0, 0], sizes = [1, 16, 16, 4], strides = [1, 1, 1, 1]} : vector<1x18x16x4xbf16> to vector<1x16x16x4xbf16>
    %39 = vector.extract_strided_slice %36 {offsets = [0, 2, 0, 0], sizes = [1, 16, 16, 4], strides = [1, 1, 1, 1]} : vector<1x18x16x4xbf16> to vector<1x16x16x4xbf16>
    %40 = tpu.concatenate %37, %38, %39 in 3 : vector<1x16x16x4xbf16>, vector<1x16x16x4xbf16>, vector<1x16x16x4xbf16> -> vector<1x16x16x12xbf16>
    %41 = vector.shape_cast %40 : vector<1x16x16x12xbf16> to vector<256x12xbf16>
    %c2_60 = arith.constant 2 : index
    %c0_61 = arith.constant 0 : index
    %c0_62 = arith.constant 0 : index
    %42 = vector.load %arg2[%c2_60, %c0_61, %c0_62] : memref<3x12x4xbf16, #tpu.memory_space<vmem>>, vector<1x12x4xbf16>
    %43 = vector.shape_cast %42 : vector<1x12x4xbf16> to vector<12x4xbf16>
    %cst_63 = arith.constant dense<0.000000e+00> : vector<256x4xf32>
    %44 = tpu.matmul %41, %43, %cst_63 {dimension_numbers = #tpu.dot_dimension_numbers<[1], [0], [0], [1], [0, 0, 1, 1], [], []>} : vector<256x12xbf16>, vector<12x4xbf16>, vector<256x4xf32> -> vector<256x4xf32>
    %45 = arith.addf %35, %44 : vector<256x4xf32>
    %c0_64 = arith.constant 0 : index
    %c0_65 = arith.constant 0 : index
    %46 = vector.load %arg3[%c0_64, %c0_65] : memref<1x4xf32, #tpu.memory_space<vmem>>, vector<1x4xf32>
    %47 = vector.broadcast %46 : vector<1x4xf32> to vector<256x4xf32>
    %48 = arith.addf %45, %47 : vector<256x4xf32>
    %cst_66 = arith.constant 0.000000e+00 : f32
    %49 = vector.broadcast %cst_66 : f32 to vector<256x4xf32>
    %50 = arith.maximumf %48, %49 : vector<256x4xf32>
    %51 = vector.shape_cast %50 : vector<256x4xf32> to vector<1x16x16x4xf32>
    %52 = arith.truncf %51 : vector<1x16x16x4xf32> to vector<1x16x16x4xbf16>
    %c0_67 = arith.constant 0 : index
    %c1_68 = arith.constant 1 : index
    %c1_69 = arith.constant 1 : index
    %c0_70 = arith.constant 0 : index
    %53 = vector.load %arg8[%c0_67, %c1_68, %c1_69, %c0_70] : memref<1x18x24x4xbf16, #tpu.memory_space<vmem>>, vector<1x16x16x4xbf16>
    tpu.vector_store %arg8[%c0_67, %c1_68, %c1_69, %c0_70], %52 {strides = array<i32>} : memref<1x18x24x4xbf16, #tpu.memory_space<vmem>>, vector<1x16x16x4xbf16>,
    %cst_71 = arith.constant 0.000000e+00 : f32
    %54 = vector.broadcast %cst_71 : f32 to vector<256x4xf32>
    %c0_72 = arith.constant 0 : index
    %c0_73 = arith.constant 0 : index
    %c0_74 = arith.constant 0 : index
    %c0_75 = arith.constant 0 : index
    %55 = vector.load %arg8[%c0_72, %c0_73, %c0_74, %c0_75] : memref<1x18x24x4xbf16, #tpu.memory_space<vmem>>, vector<1x18x16x4xbf16>
    %56 = vector.extract_strided_slice %55 {offsets = [0, 0, 0, 0], sizes = [1, 16, 16, 4], strides = [1, 1, 1, 1]} : vector<1x18x16x4xbf16> to vector<1x16x16x4xbf16>
    %57 = vector.extract_strided_slice %55 {offsets = [0, 1, 0, 0], sizes = [1, 16, 16, 4], strides = [1, 1, 1, 1]} : vector<1x18x16x4xbf16> to vector<1x16x16x4xbf16>
    %58 = vector.extract_strided_slice %55 {offsets = [0, 2, 0, 0], sizes = [1, 16, 16, 4], strides = [1, 1, 1, 1]} : vector<1x18x16x4xbf16> to vector<1x16x16x4xbf16>
    %59 = tpu.concatenate %56, %57, %58 in 3 : vector<1x16x16x4xbf16>, vector<1x16x16x4xbf16>, vector<1x16x16x4xbf16> -> vector<1x16x16x12xbf16>
    %60 = vector.shape_cast %59 : vector<1x16x16x12xbf16> to vector<256x12xbf16>
    %c0_76 = arith.constant 0 : index
    %c0_77 = arith.constant 0 : index
    %c0_78 = arith.constant 0 : index
    %61 = vector.load %arg4[%c0_76, %c0_77, %c0_78] : memref<3x12x4xbf16, #tpu.memory_space<vmem>>, vector<1x12x4xbf16>
    %62 = vector.shape_cast %61 : vector<1x12x4xbf16> to vector<12x4xbf16>
    %cst_79 = arith.constant dense<0.000000e+00> : vector<256x4xf32>
    %63 = tpu.matmul %60, %62, %cst_79 {dimension_numbers = #tpu.dot_dimension_numbers<[1], [0], [0], [1], [0, 0, 1, 1], [], []>} : vector<256x12xbf16>, vector<12x4xbf16>, vector<256x4xf32> -> vector<256x4xf32>
    %64 = arith.addf %54, %63 : vector<256x4xf32>
    %c0_80 = arith.constant 0 : index
    %c0_81 = arith.constant 0 : index
    %c1_82 = arith.constant 1 : index
    %c0_83 = arith.constant 0 : index
    %65 = vector.load %arg8[%c0_80, %c0_81, %c1_82, %c0_83] : memref<1x18x24x4xbf16, #tpu.memory_space<vmem>>, vector<1x18x16x4xbf16>
    %66 = vector.extract_strided_slice %65 {offsets = [0, 0, 0, 0], sizes = [1, 16, 16, 4], strides = [1, 1, 1, 1]} : vector<1x18x16x4xbf16> to vector<1x16x16x4xbf16>
    %67 = vector.extract_strided_slice %65 {offsets = [0, 1, 0, 0], sizes = [1, 16, 16, 4], strides = [1, 1, 1, 1]} : vector<1x18x16x4xbf16> to vector<1x16x16x4xbf16>
    %68 = vector.extract_strided_slice %65 {offsets = [0, 2, 0, 0], sizes = [1, 16, 16, 4], strides = [1, 1, 1, 1]} : vector<1x18x16x4xbf16> to vector<1x16x16x4xbf16>
    %69 = tpu.concatenate %66, %67, %68 in 3 : vector<1x16x16x4xbf16>, vector<1x16x16x4xbf16>, vector<1x16x16x4xbf16> -> vector<1x16x16x12xbf16>
    %70 = vector.shape_cast %69 : vector<1x16x16x12xbf16> to vector<256x12xbf16>
    %c1_84 = arith.constant 1 : index
    %c0_85 = arith.constant 0 : index
    %c0_86 = arith.constant 0 : index
    %71 = vector.load %arg4[%c1_84, %c0_85, %c0_86] : memref<3x12x4xbf16, #tpu.memory_space<vmem>>, vector<1x12x4xbf16>
    %72 = vector.shape_cast %71 : vector<1x12x4xbf16> to vector<12x4xbf16>
    %cst_87 = arith.constant dense<0.000000e+00> : vector<256x4xf32>
    %73 = tpu.matmul %70, %72, %cst_87 {dimension_numbers = #tpu.dot_dimension_numbers<[1], [0], [0], [1], [0, 0, 1, 1], [], []>} : vector<256x12xbf16>, vector<12x4xbf16>, vector<256x4xf32> -> vector<256x4xf32>
    %74 = arith.addf %64, %73 : vector<256x4xf32>
    %c0_88 = arith.constant 0 : index
    %c0_89 = arith.constant 0 : index
    %c2_90 = arith.constant 2 : index
    %c0_91 = arith.constant 0 : index
    %75 = vector.load %arg8[%c0_88, %c0_89, %c2_90, %c0_91] : memref<1x18x24x4xbf16, #tpu.memory_space<vmem>>, vector<1x18x16x4xbf16>
    %76 = vector.extract_strided_slice %75 {offsets = [0, 0, 0, 0], sizes = [1, 16, 16, 4], strides = [1, 1, 1, 1]} : vector<1x18x16x4xbf16> to vector<1x16x16x4xbf16>
    %77 = vector.extract_strided_slice %75 {offsets = [0, 1, 0, 0], sizes = [1, 16, 16, 4], strides = [1, 1, 1, 1]} : vector<1x18x16x4xbf16> to vector<1x16x16x4xbf16>
    %78 = vector.extract_strided_slice %75 {offsets = [0, 2, 0, 0], sizes = [1, 16, 16, 4], strides = [1, 1, 1, 1]} : vector<1x18x16x4xbf16> to vector<1x16x16x4xbf16>
    %79 = tpu.concatenate %76, %77, %78 in 3 : vector<1x16x16x4xbf16>, vector<1x16x16x4xbf16>, vector<1x16x16x4xbf16> -> vector<1x16x16x12xbf16>
    %80 = vector.shape_cast %79 : vector<1x16x16x12xbf16> to vector<256x12xbf16>
    %c2_92 = arith.constant 2 : index
    %c0_93 = arith.constant 0 : index
    %c0_94 = arith.constant 0 : index
    %81 = vector.load %arg4[%c2_92, %c0_93, %c0_94] : memref<3x12x4xbf16, #tpu.memory_space<vmem>>, vector<1x12x4xbf16>
    %82 = vector.shape_cast %81 : vector<1x12x4xbf16> to vector<12x4xbf16>
    %cst_95 = arith.constant dense<0.000000e+00> : vector<256x4xf32>
    %83 = tpu.matmul %80, %82, %cst_95 {dimension_numbers = #tpu.dot_dimension_numbers<[1], [0], [0], [1], [0, 0, 1, 1], [], []>} : vector<256x12xbf16>, vector<12x4xbf16>, vector<256x4xf32> -> vector<256x4xf32>
    %84 = arith.addf %74, %83 : vector<256x4xf32>
    %c0_96 = arith.constant 0 : index
    %c0_97 = arith.constant 0 : index
    %85 = vector.load %arg5[%c0_96, %c0_97] : memref<1x4xf32, #tpu.memory_space<vmem>>, vector<1x4xf32>
    %86 = vector.broadcast %85 : vector<1x4xf32> to vector<256x4xf32>
    %87 = arith.addf %84, %86 : vector<256x4xf32>
    %88 = vector.shape_cast %87 : vector<256x4xf32> to vector<1x16x16x4xf32>
    %89 = arith.addf %12, %88 : vector<1x16x16x4xf32>
    %c0_98 = arith.constant 0 : index
    %c0_99 = arith.constant 0 : index
    %c0_100 = arith.constant 0 : index
    %c0_101 = arith.constant 0 : index
    %90 = vector.load %arg6[%c0_98, %c0_99, %c0_100, %c0_101] : memref<1x16x16x4xf32, #tpu.memory_space<vmem>>, vector<1x16x16x4xf32>
    tpu.vector_store %arg6[%c0_98, %c0_99, %c0_100, %c0_101], %89 {strides = array<i32>} : memref<1x16x16x4xf32, #tpu.memory_space<vmem>>, vector<1x16x16x4xf32>,
    return
  }
  func.func @transform_0(%arg0: i32) -> (i32, i32, i32, i32) {
    %c0_i32 = arith.constant 0 : i32
    %c0_i32_0 = arith.constant 0 : i32
    %c0_i32_1 = arith.constant 0 : i32
    %c0_i32_2 = arith.constant 0 : i32
    return %arg0, %c0_i32, %c0_i32_0, %c0_i32_1 : i32, i32, i32, i32
  }
  func.func @transform_1(%arg0: i32) -> (i32, i32, i32) {
    %c0_i32 = arith.constant 0 : i32
    %c0_i32_0 = arith.constant 0 : i32
    %c0_i32_1 = arith.constant 0 : i32
    %c0_i32_2 = arith.constant 0 : i32
    return %c0_i32, %c0_i32_0, %c0_i32_1 : i32, i32, i32
  }
  func.func @transform_2(%arg0: i32) -> (i32, i32) {
    %c0_i32 = arith.constant 0 : i32
    %c0_i32_0 = arith.constant 0 : i32
    %c0_i32_1 = arith.constant 0 : i32
    return %c0_i32, %c0_i32_0 : i32, i32
  }
  func.func @transform_3(%arg0: i32) -> (i32, i32, i32) {
    %c0_i32 = arith.constant 0 : i32
    %c0_i32_0 = arith.constant 0 : i32
    %c0_i32_1 = arith.constant 0 : i32
    %c0_i32_2 = arith.constant 0 : i32
    return %c0_i32, %c0_i32_0, %c0_i32_1 : i32, i32, i32
  }
  func.func @transform_4(%arg0: i32) -> (i32, i32) {
    %c0_i32 = arith.constant 0 : i32
    %c0_i32_0 = arith.constant 0 : i32
    %c0_i32_1 = arith.constant 0 : i32
    return %c0_i32, %c0_i32_0 : i32, i32
  }
  func.func @transform_5(%arg0: i32) -> (i32, i32, i32, i32) {
    %c0_i32 = arith.constant 0 : i32
    %c0_i32_0 = arith.constant 0 : i32
    %c0_i32_1 = arith.constant 0 : i32
    %c0_i32_2 = arith.constant 0 : i32
    return %arg0, %c0_i32, %c0_i32_0, %c0_i32_1 : i32, i32, i32, i32
  }
}

</mosaic_0001>

<llo_original>
// kernel: tpu_custom_call.1
$region0: #{tpu_custom_call.1}
  #allocation0 [shape = 'u32[]', space=smem, size = 0x4, offset = 0x4, fixed_abs, tag = 'smem constant byte address 0x4 - core index']
  #allocation1 [shape = 'u32[144,128]{1,0:T(1,128)}', space=vmem, size = 0x12000, scoped, tag = 'internal scratch']
  #allocation2 [shape = 'bf16[1,18,24,4]{3,2,1,0:T(8,128)(2,1)}', space=vmem, size = 0x1b000, scoped, tag = 'scratch operand']
  #allocation3 [shape = 'bf16[1,18,24,4]{3,2,1,0:T(8,128)(2,1)}', space=vmem, size = 0x1b000, scoped, tag = 'scratch operand']
  %s0 = inlined_call_operand.vmem [shape: f32[2,16,16,4], index: 0, kind: input, shape index: {}]
  %s1 = inlined_call_operand.vmem [shape: bf16[3,12,4], index: 1, kind: input, shape index: {}]
  %s2 = inlined_call_operand.vmem [shape: f32[1,4], index: 2, kind: input, shape index: {}]
  %s3 = inlined_call_operand.vmem [shape: bf16[3,12,4], index: 3, kind: input, shape index: {}]
  %s4 = inlined_call_operand.vmem [shape: f32[1,4], index: 4, kind: input, shape index: {}]
  %s5 = inlined_call_operand.vmem [shape: f32[2,16,16,4], index: 5, kind: output, shape index: {}]
  %s6 = sld [smem:[#allocation0]]
  $region53: #{tpu_custom_call.1} parent=0
    _
  %s8 = ssub.s32 1, %s6
  %s9 = scalar_select 0, %s8, %s6
  loop: start=0, step=1, limit=4
  $region2: #{tpu_custom_call.1} parent=0 // loop_pre_header
    _
  $region3: #{tpu_custom_call.1} parent=0 // loop_header
    %s11 = sphi 0, %s15
    %p12 = scmp.ge.s32.totalorder %s11, 4
    %s21 = sphi 0, %s23
    %s24 = sphi 0, %s21
    %s25 = sphi 0, %s24
    %s41 = sphi 0, %s25
    %s45 = sphi 0, %s45
    %s47 = sphi 0, %s45
    %s48 = sphi 0, %s47
    %s62 = sphi 0, %s48
    %s66 = sphi 0, %s66
    %s68 = sphi 0, %s66
    %s69 = sphi 0, %s68
    %s83 = sphi 0, %s69
    %s87 = sphi 0, %s87
    %s89 = sphi 0, %s87
    %s90 = sphi 0, %s89
    %s104 = sphi 0, %s90
    %s108 = sphi 0, %s108
    %s110 = sphi 0, %s108
    %s111 = sphi 0, %s110
    %s125 = sphi 0, %s111
    %s131 = sphi 0, %s133
    %s134 = sphi 0, %s131
    %s135 = sphi 0, %s134
    %s151 = sphi 0, %s135
  $region4: #{tpu_custom_call.1} parent=0 // loop_header_branch
    %14 = sbr.rel (%p12) target = $region8
  $region5: #{tpu_custom_call.1} parent=0 // loop_body
    %s16 = ssub.s32 %s11, 1
    %s17 = ssub.s32 %s11, 2
    %s18 = sadd.s32 %s11, 1
    %s19 = ssub.s32 %s11, %s18
    %p20 = scmp.eq.s32.totalorder %s19, 0
    %s22 = sadd.s32 %s21, 1
    %s23 = scalar_select %p20, %s21, %s22
    %p26 = pneg %p20
    %p27 = scmp.eq.s32.totalorder %s11, 1
    %p28 = por %p26, %p27
    %p29 = scmp.ne.s32.totalorder %s21, %s24
    %p30 = scmp.eq.s32.totalorder %s11, 0
    %p31 = por %p29, %p30
    %p32 = scmp.ne.s32.totalorder %s21, %s24
    %p33 = scmp.eq.s32.totalorder %s16, 1
    %p34 = por %p32, %p33
    %p35 = scmp.ne.s32.totalorder %s24, %s25
    %p36 = scmp.eq.s32.totalorder %s16, 0
    %p37 = por %p35, %p36
    %p38 = scmp.ne.s32.totalorder %s24, %s25
    %p39 = scmp.eq.s32.totalorder %s17, 1
    %p40 = por %p38, %p39
    %p42 = scmp.ne.s32.totalorder %s25, %s41
    %p43 = scmp.eq.s32.totalorder %s17, 0
    %p44 = por %p42, %p43
    %s46 = sadd.s32 %s45, 1
    %p49 = scmp.eq.s32.totalorder %s11, 1
    %p50 = scmp.ne.s32.totalorder %s45, %s47
    %p51 = scmp.eq.s32.totalorder %s11, 0
    %p52 = por %p50, %p51
    %p53 = scmp.ne.s32.totalorder %s45, %s47
    %p54 = scmp.eq.s32.totalorder %s16, 1
    %p55 = por %p53, %p54
    %p56 = scmp.ne.s32.totalorder %s47, %s48
    %p57 = scmp.eq.s32.totalorder %s16, 0
    %p58 = por %p56, %p57
    %p59 = scmp.ne.s32.totalorder %s47, %s48
    %p60 = scmp.eq.s32.totalorder %s17, 1
    %p61 = por %p59, %p60
    %p63 = scmp.ne.s32.totalorder %s48, %s62
    %p64 = scmp.eq.s32.totalorder %s17, 0
    %p65 = por %p63, %p64
    %s67 = sadd.s32 %s66, 1
    %p70 = scmp.eq.s32.totalorder %s11, 1
    %p71 = scmp.ne.s32.totalorder %s66, %s68
    %p72 = scmp.eq.s32.totalorder %s11, 0
    %p73 = por %p71, %p72
    %p74 = scmp.ne.s32.totalorder %s66, %s68
    %p75 = scmp.eq.s32.totalorder %s16, 1
    %p76 = por %p74, %p75
    %p77 = scmp.ne.s32.totalorder %s68, %s69
    %p78 = scmp.eq.s32.totalorder %s16, 0
    %p79 = por %p77, %p78
    %p80 = scmp.ne.s32.totalorder %s68, %s69
    %p81 = scmp.eq.s32.totalorder %s17, 1
    %p82 = por %p80, %p81
    %p84 = scmp.ne.s32.totalorder %s69, %s83
    %p85 = scmp.eq.s32.totalorder %s17, 0
    %p86 = por %p84, %p85
    %s88 = sadd.s32 %s87, 1
    %p91 = scmp.eq.s32.totalorder %s11, 1
    %p92 = scmp.ne.s32.totalorder %s87, %s89
    %p93 = scmp.eq.s32.totalorder %s11, 0
    %p94 = por %p92, %p93
    %p95 = scmp.ne.s32.totalorder %s87, %s89
    %p96 = scmp.eq.s32.totalorder %s16, 1
    %p97 = por %p95, %p96
    %p98 = scmp.ne.s32.totalorder %s89, %s90
    %p99 = scmp.eq.s32.totalorder %s16, 0
    %p100 = por %p98, %p99
    %p101 = scmp.ne.s32.totalorder %s89, %s90
    %p102 = scmp.eq.s32.totalorder %s17, 1
    %p103 = por %p101, %p102
    %p105 = scmp.ne.s32.totalorder %s90, %s104
    %p106 = scmp.eq.s32.totalorder %s17, 0
    %p107 = por %p105, %p106
    %s109 = sadd.s32 %s108, 1
    %p112 = scmp.eq.s32.totalorder %s11, 1
    %p113 = scmp.ne.s32.totalorder %s108, %s110
    %p114 = scmp.eq.s32.totalorder %s11, 0
    %p115 = por %p113, %p114
    %p116 = scmp.ne.s32.totalorder %s108, %s110
    %p117 = scmp.eq.s32.totalorder %s16, 1
    %p118 = por %p116, %p117
    %p119 = scmp.ne.s32.totalorder %s110, %s111
    %p120 = scmp.eq.s32.totalorder %s16, 0
    %p121 = por %p119, %p120
    %p122 = scmp.ne.s32.totalorder %s110, %s111
    %p123 = scmp.eq.s32.totalorder %s17, 1
    %p124 = por %p122, %p123
    %p126 = scmp.ne.s32.totalorder %s111, %s125
    %p127 = scmp.eq.s32.totalorder %s17, 0
    %p128 = por %p126, %p127
    %s129 = ssub.s32 %s11, %s18
    %p130 = scmp.eq.s32.totalorder %s129, 0
    %s132 = sadd.s32 %s131, 1
    %s133 = scalar_select %p130, %s131, %s132
    %p136 = pneg %p130
    %p137 = scmp.eq.s32.totalorder %s11, 1
    %p138 = por %p136, %p137
    %p139 = scmp.ne.s32.totalorder %s131, %s134
    %p140 = scmp.eq.s32.totalorder %s11, 0
    %p141 = por %p139, %p140
    %p142 = scmp.ne.s32.totalorder %s131, %s134
    %p143 = scmp.eq.s32.totalorder %s16, 1
    %p144 = por %p142, %p143
    %p145 = scmp.ne.s32.totalorder %s134, %s135
    %p146 = scmp.eq.s32.totalorder %s16, 0
    %p147 = por %p145, %p146
    %p148 = scmp.ne.s32.totalorder %s134, %s135
    %p149 = scmp.eq.s32.totalorder %s17, 1
    %p150 = por %p148, %p149
    %p152 = scmp.ne.s32.totalorder %s135, %s151
    %p153 = scmp.eq.s32.totalorder %s17, 0
    %p154 = por %p152, %p153
    %p155 = scmp.le.s32.totalorder 1, %s11
    %p156 = scmp.lt.s32.totalorder %s11, 3
    %p157 = pnand %p155, %p156
    %p158 = pneg %p157
    // Predicated region
    $region9: #{tpu_custom_call.1} parent=5 // pred_check
      _
    $region10: #{tpu_custom_call.1} parent=5 // pred_check_branch
      %160 = sbr.rel (%p157) target = $region12
    $region11: #{tpu_custom_call.1} parent=5 // pred_region
      %s161 = ssub.s32 %s11, 1
      // Predicated region
      $region13: #{tpu_custom_call.1} parent=11 // pred_check
        %p162 = pneg %p58
      $region14: #{tpu_custom_call.1} parent=11 // pred_check_branch
        %164 = sbr.rel (%p162) target = $region16
      $region15: #{tpu_custom_call.1} parent=11 // pred_region
        _
      $region16: #{tpu_custom_call.1} parent=11 // pred_fallthru
        _
      // Predicated region
      $region17: #{tpu_custom_call.1} parent=11 // pred_check
        %p165 = pneg %p79
      $region18: #{tpu_custom_call.1} parent=11 // pred_check_branch
        %167 = sbr.rel (%p165) target = $region20
      $region19: #{tpu_custom_call.1} parent=11 // pred_region
        _
      $region20: #{tpu_custom_call.1} parent=11 // pred_fallthru
        _
      // Predicated region
      $region21: #{tpu_custom_call.1} parent=11 // pred_check
        %p168 = pneg %p100
      $region22: #{tpu_custom_call.1} parent=11 // pred_check_branch
        %170 = sbr.rel (%p168) target = $region24
      $region23: #{tpu_custom_call.1} parent=11 // pred_region
        _
      $region24: #{tpu_custom_call.1} parent=11 // pred_fallthru
        _
      // Predicated region
      $region25: #{tpu_custom_call.1} parent=11 // pred_check
        %p171 = pneg %p121
      $region26: #{tpu_custom_call.1} parent=11 // pred_check_branch
        %173 = sbr.rel (%p171) target = $region28
      $region27: #{tpu_custom_call.1} parent=11 // pred_region
        _
      $region28: #{tpu_custom_call.1} parent=11 // pred_fallthru
        _
    $region12: #{tpu_custom_call.1} parent=5 // pred_fallthru
      _
    %p174 = scmp.lt.s32.totalorder %s11, 2
    // Predicated region
    $region29: #{tpu_custom_call.1} parent=5 // pred_check
      %p175 = pneg %p174
    $region30: #{tpu_custom_call.1} parent=5 // pred_check_branch
      %177 = sbr.rel (%p175) target = $region32
    $region31: #{tpu_custom_call.1} parent=5 // pred_region
      // Predicated region
      $region33: #{tpu_custom_call.1} parent=31 // pred_check
        %p178 = pneg %p31
      $region34: #{tpu_custom_call.1} parent=31 // pred_check_branch
        %180 = sbr.rel (%p178) target = $region36
      $region35: #{tpu_custom_call.1} parent=31 // pred_region
        %p181 = scmp.lt.s32.totalorder %s11, 1
        %s182 = scalar_select %p181, %s11, 1
        %s183 = smul.addr %s182, 32
        %s184 = smul.addr %s183, 8
        %s185 = scalar_lea.vmem %s0, %s184
      $region36: #{tpu_custom_call.1} parent=31 // pred_fallthru
        _
    $region32: #{tpu_custom_call.1} parent=5 // pred_fallthru
      _
    %p186 = scmp.le.s32.totalorder 1, %s11
    %p187 = scmp.lt.s32.totalorder %s11, 3
    %p188 = pnand %p186, %p187
    %p189 = pneg %p188
    // Predicated region
    $region37: #{tpu_custom_call.1} parent=5 // pred_check
      _
    $region38: #{tpu_custom_call.1} parent=5 // pred_check_branch
      %191 = sbr.rel (%p188) target = $region40
    $region39: #{tpu_custom_call.1} parent=5 // pred_region
      %s192 = ssub.s32 %s11, 1
      %p193 = scmp.lt.s32.totalorder %s16, 1
      %s194 = scalar_select %p193, %s16, 1
      %s195 = smul.addr %s194, 32
      %s196 = smul.addr %s195, 8
      %s197 = scalar_lea.vmem %s0, %s196
      %p198 = pneg %p37
      %p199 = pneg %p34
      %p200 = pneg %p58
      %p201 = pneg %p55
      %p202 = pneg %p79
      %p203 = pneg %p76
      %p204 = pneg %p100
      %p205 = pneg %p97
      %p206 = pneg %p121
      %p207 = pneg %p118
      %p208 = pneg %p147
      %p209 = pneg %p144
      %p210 = scmp.lt.s32.totalorder %s16, 1
      %s211 = scalar_select %p210, %s16, 1
      %s212 = smul.addr %s211, 32
      %s213 = smul.addr %s212, 8
      %s214 = scalar_lea.vmem %s5, %s213
      %p215 = scmp.lt.s32.totalorder %s16, 1
      %s216 = scalar_select %p215, %s16, 1
      %s217 = smul.addr %s216, 32
      %s218 = smul.addr %s217, 8
      %s219 = scalar_lea.vmem %s0, %s218
      %p220 = scmp.lt.s32.totalorder %s16, 1
      %s221 = scalar_select %p220, %s16, 1
      %s222 = smul.addr %s221, 32
      %s223 = smul.addr %s222, 8
      %s224 = scalar_lea.vmem %s5, %s223
      %vm226 = vcmask 27648
      %227 = vst.msk [vmem:[#allocation2] sm:$0xf] %vm226, 0
      %228 = vst.msk [vmem:[#allocation2 + $0x4] sm:$0xf] %vm226, 0
      %229 = vst.msk [vmem:[#allocation2 + $0x8] sm:$0xf] %vm226, 0
      %s230 = scalar_lea.vmem [#allocation2], 204
      %231 = vst.msk [vmem:[%s230] sm:$0xf] %vm226, 0
      %232 = vst.msk [vmem:[%s230 + $0x4] sm:$0xf] %vm226, 0
      %233 = vst.msk [vmem:[%s230 + $0x8] sm:$0xf] %vm226, 0
      %vm234 = vcmask 24576
      %vm235 = vsmask.f32 256
      %vm236 = vmand %vm234, %vm235
      %v237 = vld [vmem:[#allocation2] sm:$0x1]
      %v238 = vsel %vm236, 0, %v237
      %239 = vst [vmem:[#allocation2] sm:$0x1] %v238
      %v240 = vld [vmem:[#allocation2 + $0xc] sm:$0x1]
      %v241 = vsel %vm236, 0, %v240
      %242 = vst [vmem:[#allocation2 + $0xc] sm:$0x1] %v241
      %v243 = vld [vmem:[#allocation2 + $0x18] sm:$0x1]
      %v244 = vsel %vm236, 0, %v243
      %245 = vst [vmem:[#allocation2 + $0x18] sm:$0x1] %v244
      %v246 = vld [vmem:[#allocation2 + $0x24] sm:$0x1]
      %v247 = vsel %vm236, 0, %v246
      %248 = vst [vmem:[#allocation2 + $0x24] sm:$0x1] %v247
      %v249 = vld [vmem:[#allocation2 + $0x30] sm:$0x1]
      %v250 = vsel %vm236, 0, %v249
      %251 = vst [vmem:[#allocation2 + $0x30] sm:$0x1] %v250
      %v252 = vld [vmem:[#allocation2 + $0x3c] sm:$0x1]
      %v253 = vsel %vm236, 0, %v252
      %254 = vst [vmem:[#allocation2 + $0x3c] sm:$0x1] %v253
      %v255 = vld [vmem:[#allocation2 + $0x48] sm:$0x1]
      %v256 = vsel %vm236, 0, %v255
      %257 = vst [vmem:[#allocation2 + $0x48] sm:$0x1] %v256
      %v258 = vld [vmem:[#allocation2 + $0x54] sm:$0x1]
      %v259 = vsel %vm236, 0, %v258
      %260 = vst [vmem:[#allocation2 + $0x54] sm:$0x1] %v259
      %v261 = vld [vmem:[#allocation2 + $0x60] sm:$0x1]
      %v262 = vsel %vm236, 0, %v261
      %263 = vst [vmem:[#allocation2 + $0x60] sm:$0x1] %v262
      %v264 = vld [vmem:[#allocation2 + $0x6c] sm:$0x1]
      %v265 = vsel %vm236, 0, %v264
      %266 = vst [vmem:[#allocation2 + $0x6c] sm:$0x1] %v265
      %v267 = vld [vmem:[#allocation2 + $0x78] sm:$0x1]
      %v268 = vsel %vm236, 0, %v267
      %269 = vst [vmem:[#allocation2 + $0x78] sm:$0x1] %v268
      %v270 = vld [vmem:[#allocation2 + $0x84] sm:$0x1]
      %v271 = vsel %vm236, 0, %v270
      %272 = vst [vmem:[#allocation2 + $0x84] sm:$0x1] %v271
      %v273 = vld [vmem:[#allocation2 + $0x90] sm:$0x1]
      %v274 = vsel %vm236, 0, %v273
      %275 = vst [vmem:[#allocation2 + $0x90] sm:$0x1] %v274
      %v276 = vld [vmem:[#allocation2 + $0x9c] sm:$0x1]
      %v277 = vsel %vm236, 0, %v276
      %278 = vst [vmem:[#allocation2 + $0x9c] sm:$0x1] %v277
      %v279 = vld [vmem:[#allocation2 + $0xa8] sm:$0x1]
      %v280 = vsel %vm236, 0, %v279
      %281 = vst [vmem:[#allocation2 + $0xa8] sm:$0x1] %v280
      %v282 = vld [vmem:[#allocation2 + $0xb4] sm:$0x1]
      %v283 = vsel %vm236, 0, %v282
      %284 = vst [vmem:[#allocation2 + $0xb4] sm:$0x1] %v283
      %v285 = vld [vmem:[#allocation2 + $0xc0] sm:$0x1]
      %v286 = vsel %vm236, 0, %v285
      %287 = vst [vmem:[#allocation2 + $0xc0] sm:$0x1] %v286
      %v288 = vld [vmem:[#allocation2 + $0xcc] sm:$0x1]
      %v289 = vsel %vm236, 0, %v288
      %290 = vst [vmem:[#allocation2 + $0xcc] sm:$0x1] %v289
      %vm291 = vsmask.f32 7938
      %vm292 = vmand %vm234, %vm291
      %v293 = vld [vmem:[#allocation2 + $0x8] sm:$0x1]
      %v294 = vsel %vm292, 0, %v293
      %295 = vst [vmem:[#allocation2 + $0x8] sm:$0x1] %v294
      %v296 = vld [vmem:[#allocation2 + $0x14] sm:$0x1]
      %v297 = vsel %vm292, 0, %v296
      %298 = vst [vmem:[#allocation2 + $0x14] sm:$0x1] %v297
      %v299 = vld [vmem:[#allocation2 + $0x20] sm:$0x1]
      %v300 = vsel %vm292, 0, %v299
      %301 = vst [vmem:[#allocation2 + $0x20] sm:$0x1] %v300
      %v302 = vld [vmem:[#allocation2 + $0x2c] sm:$0x1]
      %v303 = vsel %vm292, 0, %v302
      %304 = vst [vmem:[#allocation2 + $0x2c] sm:$0x1] %v303
      %v305 = vld [vmem:[#allocation2 + $0x38] sm:$0x1]
      %v306 = vsel %vm292, 0, %v305
      %307 = vst [vmem:[#allocation2 + $0x38] sm:$0x1] %v306
      %v308 = vld [vmem:[#allocation2 + $0x44] sm:$0x1]
      %v309 = vsel %vm292, 0, %v308
      %310 = vst [vmem:[#allocation2 + $0x44] sm:$0x1] %v309
      %v311 = vld [vmem:[#allocation2 + $0x50] sm:$0x1]
      %v312 = vsel %vm292, 0, %v311
      %313 = vst [vmem:[#allocation2 + $0x50] sm:$0x1] %v312
      %v314 = vld [vmem:[#allocation2 + $0x5c] sm:$0x1]
      %v315 = vsel %vm292, 0, %v314
      %316 = vst [vmem:[#allocation2 + $0x5c] sm:$0x1] %v315
      %v317 = vld [vmem:[#allocation2 + $0x68] sm:$0x1]
      %v318 = vsel %vm292, 0, %v317
      %319 = vst [vmem:[#allocation2 + $0x68] sm:$0x1] %v318
      %v320 = vld [vmem:[#allocation2 + $0x74] sm:$0x1]
      %v321 = vsel %vm292, 0, %v320
      %322 = vst [vmem:[#allocation2 + $0x74] sm:$0x1] %v321
      %v323 = vld [vmem:[#allocation2 + $0x80] sm:$0x1]
      %v324 = vsel %vm292, 0, %v323
      %325 = vst [vmem:[#allocation2 + $0x80] sm:$0x1] %v324
      %v326 = vld [vmem:[#allocation2 + $0x8c] sm:$0x1]
      %v327 = vsel %vm292, 0, %v326
      %328 = vst [vmem:[#allocation2 + $0x8c] sm:$0x1] %v327
      %v329 = vld [vmem:[#allocation2 + $0x98] sm:$0x1]
      %v330 = vsel %vm292, 0, %v329
      %331 = vst [vmem:[#allocation2 + $0x98] sm:$0x1] %v330
      %v332 = vld [vmem:[#allocation2 + $0xa4] sm:$0x1]
      %v333 = vsel %vm292, 0, %v332
      %334 = vst [vmem:[#allocation2 + $0xa4] sm:$0x1] %v333
      %v335 = vld [vmem:[#allocation2 + $0xb0] sm:$0x1]
      %v336 = vsel %vm292, 0, %v335
      %337 = vst [vmem:[#allocation2 + $0xb0] sm:$0x1] %v336
      %v338 = vld [vmem:[#allocation2 + $0xbc] sm:$0x1]
      %v339 = vsel %vm292, 0, %v338
      %340 = vst [vmem:[#allocation2 + $0xbc] sm:$0x1] %v339
      %v341 = vld [vmem:[#allocation2 + $0xc8] sm:$0x1]
      %v342 = vsel %vm292, 0, %v341
      %343 = vst [vmem:[#allocation2 + $0xc8] sm:$0x1] %v342
      %v344 = vld [vmem:[#allocation2 + $0xd4] sm:$0x1]
      %v345 = vsel %vm292, 0, %v344
      %346 = vst [vmem:[#allocation2 + $0xd4] sm:$0x1] %v345
      %347 = vst.msk [vmem:[#allocation3] sm:$0xf] %vm226, 0
      %348 = vst.msk [vmem:[#allocation3 + $0x4] sm:$0xf] %vm226, 0
      %349 = vst.msk [vmem:[#allocation3 + $0x8] sm:$0xf] %vm226, 0
      %s350 = scalar_lea.vmem [#allocation3], 204
      %351 = vst.msk [vmem:[%s350] sm:$0xf] %vm226, 0
      %352 = vst.msk [vmem:[%s350 + $0x4] sm:$0xf] %vm226, 0
      %353 = vst.msk [vmem:[%s350 + $0x8] sm:$0xf] %vm226, 0
      %v354 = vld [vmem:[#allocation3] sm:$0x1]
      %v355 = vsel %vm236, 0, %v354
      %356 = vst [vmem:[#allocation3] sm:$0x1] %v355
      %v357 = vld [vmem:[#allocation3 + $0xc] sm:$0x1]
      %v358 = vsel %vm236, 0, %v357
      %359 = vst [vmem:[#allocation3 + $0xc] sm:$0x1] %v358
      %v360 = vld [vmem:[#allocation3 + $0x18] sm:$0x1]
      %v361 = vsel %vm236, 0, %v360
      %362 = vst [vmem:[#allocation3 + $0x18] sm:$0x1] %v361
      %v363 = vld [vmem:[#allocation3 + $0x24] sm:$0x1]
      %v364 = vsel %vm236, 0, %v363
      %365 = vst [vmem:[#allocation3 + $0x24] sm:$0x1] %v364
      %v366 = vld [vmem:[#allocation3 + $0x30] sm:$0x1]
      %v367 = vsel %vm236, 0, %v366
      %368 = vst [vmem:[#allocation3 + $0x30] sm:$0x1] %v367
      %v369 = vld [vmem:[#allocation3 + $0x3c] sm:$0x1]
      %v370 = vsel %vm236, 0, %v369
      %371 = vst [vmem:[#allocation3 + $0x3c] sm:$0x1] %v370
      %v372 = vld [vmem:[#allocation3 + $0x48] sm:$0x1]
      %v373 = vsel %vm236, 0, %v372
      %374 = vst [vmem:[#allocation3 + $0x48] sm:$0x1] %v373
      %v375 = vld [vmem:[#allocation3 + $0x54] sm:$0x1]
      %v376 = vsel %vm236, 0, %v375
      %377 = vst [vmem:[#allocation3 + $0x54] sm:$0x1] %v376
      %v378 = vld [vmem:[#allocation3 + $0x60] sm:$0x1]
      %v379 = vsel %vm236, 0, %v378
      %380 = vst [vmem:[#allocation3 + $0x60] sm:$0x1] %v379
      %v381 = vld [vmem:[#allocation3 + $0x6c] sm:$0x1]
      %v382 = vsel %vm236, 0, %v381
      %383 = vst [vmem:[#allocation3 + $0x6c] sm:$0x1] %v382
      %v384 = vld [vmem:[#allocation3 + $0x78] sm:$0x1]
      %v385 = vsel %vm236, 0, %v384
      %386 = vst [vmem:[#allocation3 + $0x78] sm:$0x1] %v385
      %v387 = vld [vmem:[#allocation3 + $0x84] sm:$0x1]
      %v388 = vsel %vm236, 0, %v387
      %389 = vst [vmem:[#allocation3 + $0x84] sm:$0x1] %v388
      %v390 = vld [vmem:[#allocation3 + $0x90] sm:$0x1]
      %v391 = vsel %vm236, 0, %v390
      %392 = vst [vmem:[#allocation3 + $0x90] sm:$0x1] %v391
      %v393 = vld [vmem:[#allocation3 + $0x9c] sm:$0x1]
      %v394 = vsel %vm236, 0, %v393
      %395 = vst [vmem:[#allocation3 + $0x9c] sm:$0x1] %v394
      %v396 = vld [vmem:[#allocation3 + $0xa8] sm:$0x1]
      %v397 = vsel %vm236, 0, %v396
      %398 = vst [vmem:[#allocation3 + $0xa8] sm:$0x1] %v397
      %v399 = vld [vmem:[#allocation3 + $0xb4] sm:$0x1]
      %v400 = vsel %vm236, 0, %v399
      %401 = vst [vmem:[#allocation3 + $0xb4] sm:$0x1] %v400
      %v402 = vld [vmem:[#allocation3 + $0xc0] sm:$0x1]
      %v403 = vsel %vm236, 0, %v402
      %404 = vst [vmem:[#allocation3 + $0xc0] sm:$0x1] %v403
      %v405 = vld [vmem:[#allocation3 + $0xcc] sm:$0x1]
      %v406 = vsel %vm236, 0, %v405
      %407 = vst [vmem:[#allocation3 + $0xcc] sm:$0x1] %v406
      %v408 = vld [vmem:[#allocation3 + $0x8] sm:$0x1]
      %v409 = vsel %vm292, 0, %v408
      %410 = vst [vmem:[#allocation3 + $0x8] sm:$0x1] %v409
      %v411 = vld [vmem:[#allocation3 + $0x14] sm:$0x1]
      %v412 = vsel %vm292, 0, %v411
      %413 = vst [vmem:[#allocation3 + $0x14] sm:$0x1] %v412
      %v414 = vld [vmem:[#allocation3 + $0x20] sm:$0x1]
      %v415 = vsel %vm292, 0, %v414
      %416 = vst [vmem:[#allocation3 + $0x20] sm:$0x1] %v415
      %v417 = vld [vmem:[#allocation3 + $0x2c] sm:$0x1]
      %v418 = vsel %vm292, 0, %v417
      %419 = vst [vmem:[#allocation3 + $0x2c] sm:$0x1] %v418
      %v420 = vld [vmem:[#allocation3 + $0x38] sm:$0x1]
      %v421 = vsel %vm292, 0, %v420
      %422 = vst [vmem:[#allocation3 + $0x38] sm:$0x1] %v421
      %v423 = vld [vmem:[#allocation3 + $0x44] sm:$0x1]
      %v424 = vsel %vm292, 0, %v423
      %425 = vst [vmem:[#allocation3 + $0x44] sm:$0x1] %v424
      %v426 = vld [vmem:[#allocation3 + $0x50] sm:$0x1]
      %v427 = vsel %vm292, 0, %v426
      %428 = vst [vmem:[#allocation3 + $0x50] sm:$0x1] %v427
      %v429 = vld [vmem:[#allocation3 + $0x5c] sm:$0x1]
      %v430 = vsel %vm292, 0, %v429
      %431 = vst [vmem:[#allocation3 + $0x5c] sm:$0x1] %v430
      %v432 = vld [vmem:[#allocation3 + $0x68] sm:$0x1]
      %v433 = vsel %vm292, 0, %v432
      %434 = vst [vmem:[#allocation3 + $0x68] sm:$0x1] %v433
      %v435 = vld [vmem:[#allocation3 + $0x74] sm:$0x1]
      %v436 = vsel %vm292, 0, %v435
      %437 = vst [vmem:[#allocation3 + $0x74] sm:$0x1] %v436
      %v438 = vld [vmem:[#allocation3 + $0x80] sm:$0x1]
      %v439 = vsel %vm292, 0, %v438
      %440 = vst [vmem:[#allocation3 + $0x80] sm:$0x1] %v439
      %v441 = vld [vmem:[#allocation3 + $0x8c] sm:$0x1]
      %v442 = vsel %vm292, 0, %v441
      %443 = vst [vmem:[#allocation3 + $0x8c] sm:$0x1] %v442
      %v444 = vld [vmem:[#allocation3 + $0x98] sm:$0x1]
      %v445 = vsel %vm292, 0, %v444
      %446 = vst [vmem:[#allocation3 + $0x98] sm:$0x1] %v445
      %v447 = vld [vmem:[#allocation3 + $0xa4] sm:$0x1]
      %v448 = vsel %vm292, 0, %v447
      %449 = vst [vmem:[#allocation3 + $0xa4] sm:$0x1] %v448
      %v450 = vld [vmem:[#allocation3 + $0xb0] sm:$0x1]
      %v451 = vsel %vm292, 0, %v450
      %452 = vst [vmem:[#allocation3 + $0xb0] sm:$0x1] %v451
      %v453 = vld [vmem:[#allocation3 + $0xbc] sm:$0x1]
      %v454 = vsel %vm292, 0, %v453
      %455 = vst [vmem:[#allocation3 + $0xbc] sm:$0x1] %v454
      %v456 = vld [vmem:[#allocation3 + $0xc8] sm:$0x1]
      %v457 = vsel %vm292, 0, %v456
      %458 = vst [vmem:[#allocation3 + $0xc8] sm:$0x1] %v457
      %v459 = vld [vmem:[#allocation3 + $0xd4] sm:$0x1]
      %v460 = vsel %vm292, 0, %v459
      %461 = vst [vmem:[#allocation3 + $0xd4] sm:$0x1] %v460
      %v462 = vld [vmem:[%s219] sm:$0xff]
      %v463 = vld [vmem:[%s219 + $0x8] sm:$0xff]
      %v464 = vld [vmem:[%s219 + $0x10] sm:$0xff]
      %v465 = vld [vmem:[%s219 + $0x18] sm:$0xff]
      %v466 = vld [vmem:[%s219 + $0x20] sm:$0xff]
      %v467 = vld [vmem:[%s219 + $0x28] sm:$0xff]
      %v468 = vld [vmem:[%s219 + $0x30] sm:$0xff]
      %v469 = vld [vmem:[%s219 + $0x38] sm:$0xff]
      %v470 = vld [vmem:[%s219 + $0x40] sm:$0xff]
      %v471 = vld [vmem:[%s219 + $0x48] sm:$0xff]
      %v472 = vld [vmem:[%s219 + $0x50] sm:$0xff]
      %v473 = vld [vmem:[%s219 + $0x58] sm:$0xff]
      %v474 = vld [vmem:[%s219 + $0x60] sm:$0xff]
      %v475 = vld [vmem:[%s219 + $0x68] sm:$0xff]
      %v476 = vld [vmem:[%s219 + $0x70] sm:$0xff]
      %v477 = vld [vmem:[%s219 + $0x78] sm:$0xff]
      %v478 = vld [vmem:[%s219 + $0x80] sm:$0xff]
      %v479 = vld [vmem:[%s219 + $0x88] sm:$0xff]
      %v480 = vld [vmem:[%s219 + $0x90] sm:$0xff]
      %v481 = vld [vmem:[%s219 + $0x98] sm:$0xff]
      %v482 = vld [vmem:[%s219 + $0xa0] sm:$0xff]
      %v483 = vld [vmem:[%s219 + $0xa8] sm:$0xff]
      %v484 = vld [vmem:[%s219 + $0xb0] sm:$0xff]
      %v485 = vld [vmem:[%s219 + $0xb8] sm:$0xff]
      %v486 = vld [vmem:[%s219 + $0xc0] sm:$0xff]
      %v487 = vld [vmem:[%s219 + $0xc8] sm:$0xff]
      %v488 = vld [vmem:[%s219 + $0xd0] sm:$0xff]
      %v489 = vld [vmem:[%s219 + $0xd8] sm:$0xff]
      %v490 = vld [vmem:[%s219 + $0xe0] sm:$0xff]
      %v491 = vld [vmem:[%s219 + $0xe8] sm:$0xff]
      %v492 = vld [vmem:[%s219 + $0xf0] sm:$0xff]
      %v493 = vld [vmem:[%s219 + $0xf8] sm:$0xff]
      %v494 = vpack.c.bf16 %v463, %v462
      %v495 = vpack.c.bf16 %v465, %v464
      %v496 = vpack.c.bf16 %v467, %v466
      %v497 = vpack.c.bf16 %v469, %v468
      %v498 = vpack.c.bf16 %v471, %v470
      %v499 = vpack.c.bf16 %v473, %v472
      %v500 = vpack.c.bf16 %v475, %v474
      %v501 = vpack.c.bf16 %v477, %v476
      %v502 = vpack.c.bf16 %v479, %v478
      %v503 = vpack.c.bf16 %v481, %v480
      %v504 = vpack.c.bf16 %v483, %v482
      %v505 = vpack.c.bf16 %v485, %v484
      %v506 = vpack.c.bf16 %v487, %v486
      %v507 = vpack.c.bf16 %v489, %v488
      %v508 = vpack.c.bf16 %v491, %v490
      %v509 = vpack.c.bf16 %v493, %v492
      %v526 = vunpack.c.l.b16 %v494
      %v527 = vunpack.c.h.b16 %v494
      %v528 = vunpack.c.l.b16 %v495
      %v529 = vunpack.c.h.b16 %v495
      %v530 = vunpack.c.l.b16 %v496
      %v531 = vunpack.c.h.b16 %v496
      %v532 = vunpack.c.l.b16 %v497
      %v533 = vunpack.c.h.b16 %v497
      %v534 = vunpack.c.l.b16 %v498
      %v535 = vunpack.c.h.b16 %v498
      %v536 = vunpack.c.l.b16 %v499
      %v537 = vunpack.c.h.b16 %v499
      %v538 = vunpack.c.l.b16 %v500
      %v539 = vunpack.c.h.b16 %v500
      %v540 = vunpack.c.l.b16 %v501
      %v541 = vunpack.c.h.b16 %v501
      %v542 = vunpack.c.l.b16 %v502
      %v543 = vunpack.c.h.b16 %v502
      %v544 = vunpack.c.l.b16 %v503
      %v545 = vunpack.c.h.b16 %v503
      %v546 = vunpack.c.l.b16 %v504
      %v547 = vunpack.c.h.b16 %v504
      %v548 = vunpack.c.l.b16 %v505
      %v549 = vunpack.c.h.b16 %v505
      %v550 = vunpack.c.l.b16 %v506
      %v551 = vunpack.c.h.b16 %v506
      %v552 = vunpack.c.l.b16 %v507
      %v553 = vunpack.c.h.b16 %v507
      %v554 = vunpack.c.l.b16 %v508
      %v555 = vunpack.c.h.b16 %v508
      %v556 = vunpack.c.l.b16 %v509
      %v557 = vunpack.c.h.b16 %v509
      %v558 = vpack.c.b16 %v526, %v526
      %v559 = vpack.c.b16 %v527, %v527
      %v560 = vpack.c.b16 %v528, %v528
      %v561 = vpack.c.b16 %v529, %v529
      %v562 = vpack.c.b16 %v530, %v530
      %v563 = vpack.c.b16 %v531, %v531
      %v564 = vpack.c.b16 %v532, %v532
      %v565 = vpack.c.b16 %v533, %v533
      %v566 = vpack.c.b16 %v534, %v534
      %v567 = vpack.c.b16 %v535, %v535
      %v568 = vpack.c.b16 %v536, %v536
      %v569 = vpack.c.b16 %v537, %v537
      %v570 = vpack.c.b16 %v538, %v538
      %v571 = vpack.c.b16 %v539, %v539
      %v572 = vpack.c.b16 %v540, %v540
      %v573 = vpack.c.b16 %v541, %v541
      %v574 = vpack.c.b16 %v542, %v542
      %v575 = vpack.c.b16 %v543, %v543
      %v576 = vpack.c.b16 %v544, %v544
      %v577 = vpack.c.b16 %v545, %v545
      %v578 = vpack.c.b16 %v546, %v546
      %v579 = vpack.c.b16 %v547, %v547
      %v580 = vpack.c.b16 %v548, %v548
      %v581 = vpack.c.b16 %v549, %v549
      %v582 = vpack.c.b16 %v550, %v550
      %v583 = vpack.c.b16 %v551, %v551
      %v584 = vpack.c.b16 %v552, %v552
      %v585 = vpack.c.b16 %v553, %v553
      %v586 = vpack.c.b16 %v554, %v554
      %v587 = vpack.c.b16 %v555, %v555
      %v588 = vpack.c.b16 %v556, %v556
      %v589 = vpack.c.b16 %v557, %v557
      %vm590 = vsmask.f32 4368
      %vm591 = vmor %vm235, %vm590
      %v593 = vshrl.u32 %v558, 16
      %v595 = vrot.slane %v593, 7
      %v596 = vshll.u32 %v558, 16
      %v598 = vor.u32 %v595, %v596
      %v599 = vrot.slane %v595, 4
      %v601 = vshrl.u32 %v559, 16
      %v603 = vrot.slane %v601, 7
      %v604 = vshll.u32 %v559, 16
      %v606 = vor.u32 %v603, %v604
      %v607 = vsel %vm591, %v599, %v606
      %v608 = vrot.slane %v603, 4
      %v610 = vshrl.u32 %v560, 16
      %v612 = vrot.slane %v610, 7
      %v613 = vshll.u32 %v560, 16
      %v615 = vor.u32 %v612, %v613
      %v616 = vrot.slane %v612, 4
      %v618 = vshrl.u32 %v561, 16
      %v620 = vrot.slane %v618, 7
      %v621 = vshll.u32 %v561, 16
      %v623 = vor.u32 %v620, %v621
      %v624 = vsel %vm591, %v616, %v623
      %v625 = vrot.slane %v620, 4
      %v627 = vshrl.u32 %v562, 16
      %v629 = vrot.slane %v627, 7
      %v630 = vshll.u32 %v562, 16
      %v632 = vor.u32 %v629, %v630
      %v633 = vrot.slane %v629, 4
      %v635 = vshrl.u32 %v563, 16
      %v637 = vrot.slane %v635, 7
      %v638 = vshll.u32 %v563, 16
      %v640 = vor.u32 %v637, %v638
      %v641 = vsel %vm591, %v633, %v640
      %v642 = vrot.slane %v637, 4
      %v644 = vshrl.u32 %v564, 16
      %v646 = vrot.slane %v644, 7
      %v647 = vshll.u32 %v564, 16
      %v649 = vor.u32 %v646, %v647
      %v650 = vrot.slane %v646, 4
      %v652 = vshrl.u32 %v565, 16
      %v654 = vrot.slane %v652, 7
      %v655 = vshll.u32 %v565, 16
      %v657 = vor.u32 %v654, %v655
      %v658 = vsel %vm591, %v650, %v657
      %v659 = vrot.slane %v654, 4
      %v661 = vshrl.u32 %v566, 16
      %v663 = vrot.slane %v661, 7
      %v664 = vshll.u32 %v566, 16
      %v666 = vor.u32 %v663, %v664
      %v667 = vrot.slane %v663, 4
      %v669 = vshrl.u32 %v567, 16
      %v671 = vrot.slane %v669, 7
      %v672 = vshll.u32 %v567, 16
      %v674 = vor.u32 %v671, %v672
      %v675 = vsel %vm591, %v667, %v674
      %v676 = vrot.slane %v671, 4
      %v678 = vshrl.u32 %v568, 16
      %v680 = vrot.slane %v678, 7
      %v681 = vshll.u32 %v568, 16
      %v683 = vor.u32 %v680, %v681
      %v684 = vrot.slane %v680, 4
      %v686 = vshrl.u32 %v569, 16
      %v688 = vrot.slane %v686, 7
      %v689 = vshll.u32 %v569, 16
      %v691 = vor.u32 %v688, %v689
      %v692 = vsel %vm591, %v684, %v691
      %v693 = vrot.slane %v688, 4
      %v695 = vshrl.u32 %v570, 16
      %v697 = vrot.slane %v695, 7
      %v698 = vshll.u32 %v570, 16
      %v700 = vor.u32 %v697, %v698
      %v701 = vrot.slane %v697, 4
      %v703 = vshrl.u32 %v571, 16
      %v705 = vrot.slane %v703, 7
      %v706 = vshll.u32 %v571, 16
      %v708 = vor.u32 %v705, %v706
      %v709 = vsel %vm591, %v701, %v708
      %v710 = vrot.slane %v705, 4
      %v712 = vshrl.u32 %v572, 16
      %v714 = vrot.slane %v712, 7
      %v715 = vshll.u32 %v572, 16
      %v717 = vor.u32 %v714, %v715
      %v718 = vrot.slane %v714, 4
      %v720 = vshrl.u32 %v573, 16
      %v722 = vrot.slane %v720, 7
      %v723 = vshll.u32 %v573, 16
      %v725 = vor.u32 %v722, %v723
      %v726 = vsel %vm591, %v718, %v725
      %v727 = vrot.slane %v722, 4
      %v729 = vshrl.u32 %v574, 16
      %v731 = vrot.slane %v729, 7
      %v732 = vshll.u32 %v574, 16
      %v734 = vor.u32 %v731, %v732
      %v735 = vrot.slane %v731, 4
      %v737 = vshrl.u32 %v575, 16
      %v739 = vrot.slane %v737, 7
      %v740 = vshll.u32 %v575, 16
      %v742 = vor.u32 %v739, %v740
      %v743 = vsel %vm591, %v735, %v742
      %v744 = vrot.slane %v739, 4
      %v746 = vshrl.u32 %v576, 16
      %v748 = vrot.slane %v746, 7
      %v749 = vshll.u32 %v576, 16
      %v751 = vor.u32 %v748, %v749
      %v752 = vrot.slane %v748, 4
      %v754 = vshrl.u32 %v577, 16
      %v756 = vrot.slane %v754, 7
      %v757 = vshll.u32 %v577, 16
      %v759 = vor.u32 %v756, %v757
      %v760 = vsel %vm591, %v752, %v759
      %v761 = vrot.slane %v756, 4
      %v763 = vshrl.u32 %v578, 16
      %v765 = vrot.slane %v763, 7
      %v766 = vshll.u32 %v578, 16
      %v768 = vor.u32 %v765, %v766
      %v769 = vrot.slane %v765, 4
      %v771 = vshrl.u32 %v579, 16
      %v773 = vrot.slane %v771, 7
      %v774 = vshll.u32 %v579, 16
      %v776 = vor.u32 %v773, %v774
      %v777 = vsel %vm591, %v769, %v776
      %v778 = vrot.slane %v773, 4
      %v780 = vshrl.u32 %v580, 16
      %v782 = vrot.slane %v780, 7
      %v783 = vshll.u32 %v580, 16
      %v785 = vor.u32 %v782, %v783
      %v786 = vrot.slane %v782, 4
      %v788 = vshrl.u32 %v581, 16
      %v790 = vrot.slane %v788, 7
      %v791 = vshll.u32 %v581, 16
      %v793 = vor.u32 %v790, %v791
      %v794 = vsel %vm591, %v786, %v793
      %v795 = vrot.slane %v790, 4
      %v797 = vshrl.u32 %v582, 16
      %v799 = vrot.slane %v797, 7
      %v800 = vshll.u32 %v582, 16
      %v802 = vor.u32 %v799, %v800
      %v803 = vrot.slane %v799, 4
      %v805 = vshrl.u32 %v583, 16
      %v807 = vrot.slane %v805, 7
      %v808 = vshll.u32 %v583, 16
      %v810 = vor.u32 %v807, %v808
      %v811 = vsel %vm591, %v803, %v810
      %v812 = vrot.slane %v807, 4
      %v814 = vshrl.u32 %v584, 16
      %v816 = vrot.slane %v814, 7
      %v817 = vshll.u32 %v584, 16
      %v819 = vor.u32 %v816, %v817
      %v820 = vrot.slane %v816, 4
      %v822 = vshrl.u32 %v585, 16
      %v824 = vrot.slane %v822, 7
      %v825 = vshll.u32 %v585, 16
      %v827 = vor.u32 %v824, %v825
      %v828 = vsel %vm591, %v820, %v827
      %v829 = vrot.slane %v824, 4
      %v831 = vshrl.u32 %v586, 16
      %v833 = vrot.slane %v831, 7
      %v834 = vshll.u32 %v586, 16
      %v836 = vor.u32 %v833, %v834
      %v837 = vrot.slane %v833, 4
      %v839 = vshrl.u32 %v587, 16
      %v841 = vrot.slane %v839, 7
      %v842 = vshll.u32 %v587, 16
      %v844 = vor.u32 %v841, %v842
      %v845 = vsel %vm591, %v837, %v844
      %v846 = vrot.slane %v841, 4
      %v848 = vshrl.u32 %v588, 16
      %v850 = vrot.slane %v848, 7
      %v851 = vshll.u32 %v588, 16
      %v853 = vor.u32 %v850, %v851
      %v854 = vrot.slane %v850, 4
      %v856 = vshrl.u32 %v589, 16
      %v858 = vrot.slane %v856, 7
      %v859 = vshll.u32 %v589, 16
      %v861 = vor.u32 %v858, %v859
      %v862 = vsel %vm591, %v854, %v861
      %v863 = vrot.slane %v858, 4
      %s912 = scalar_lea.vmem [#allocation2], 12
      %vm913 = vcmask 27648
      %vm914 = vmand %vm913, %vm291
      %v915 = vld [vmem:[%s912] sm:$0xf]
      %v916 = vsel %vm914, %v598, %v915
      %917 = vst [vmem:[%s912] sm:$0xf] %v916
      %918 = vst.msk [vmem:[%s912 + $0x4] sm:$0xf] %vm226, %v607
      %v919 = vld [vmem:[%s912 + $0x8] sm:$0x1]
      %v920 = vsel %vm236, %v608, %v919
      %921 = vst [vmem:[%s912 + $0x8] sm:$0x1] %v920
      %v922 = vld [vmem:[%s912 + $0xc] sm:$0xf]
      %v923 = vsel %vm914, %v615, %v922
      %924 = vst [vmem:[%s912 + $0xc] sm:$0xf] %v923
      %925 = vst.msk [vmem:[%s912 + $0x10] sm:$0xf] %vm226, %v624
      %v926 = vld [vmem:[%s912 + $0x14] sm:$0x1]
      %v927 = vsel %vm236, %v625, %v926
      %928 = vst [vmem:[%s912 + $0x14] sm:$0x1] %v927
      %v929 = vld [vmem:[%s912 + $0x18] sm:$0xf]
      %v930 = vsel %vm914, %v632, %v929
      %931 = vst [vmem:[%s912 + $0x18] sm:$0xf] %v930
      %932 = vst.msk [vmem:[%s912 + $0x1c] sm:$0xf] %vm226, %v641
      %v933 = vld [vmem:[%s912 + $0x20] sm:$0x1]
      %v934 = vsel %vm236, %v642, %v933
      %935 = vst [vmem:[%s912 + $0x20] sm:$0x1] %v934
      %v936 = vld [vmem:[%s912 + $0x24] sm:$0xf]
      %v937 = vsel %vm914, %v649, %v936
      %938 = vst [vmem:[%s912 + $0x24] sm:$0xf] %v937
      %939 = vst.msk [vmem:[%s912 + $0x28] sm:$0xf] %vm226, %v658
      %v940 = vld [vmem:[%s912 + $0x2c] sm:$0x1]
      %v941 = vsel %vm236, %v659, %v940
      %942 = vst [vmem:[%s912 + $0x2c] sm:$0x1] %v941
      %v943 = vld [vmem:[%s912 + $0x30] sm:$0xf]
      %v944 = vsel %vm914, %v666, %v943
      %945 = vst [vmem:[%s912 + $0x30] sm:$0xf] %v944
      %946 = vst.msk [vmem:[%s912 + $0x34] sm:$0xf] %vm226, %v675
      %v947 = vld [vmem:[%s912 + $0x38] sm:$0x1]
      %v948 = vsel %vm236, %v676, %v947
      %949 = vst [vmem:[%s912 + $0x38] sm:$0x1] %v948
      %v950 = vld [vmem:[%s912 + $0x3c] sm:$0xf]
      %v951 = vsel %vm914, %v683, %v950
      %952 = vst [vmem:[%s912 + $0x3c] sm:$0xf] %v951
      %953 = vst.msk [vmem:[%s912 + $0x40] sm:$0xf] %vm226, %v692
      %v954 = vld [vmem:[%s912 + $0x44] sm:$0x1]
      %v955 = vsel %vm236, %v693, %v954
      %956 = vst [vmem:[%s912 + $0x44] sm:$0x1] %v955
      %v957 = vld [vmem:[%s912 + $0x48] sm:$0xf]
      %v958 = vsel %vm914, %v700, %v957
      %959 = vst [vmem:[%s912 + $0x48] sm:$0xf] %v958
      %960 = vst.msk [vmem:[%s912 + $0x4c] sm:$0xf] %vm226, %v709
      %v961 = vld [vmem:[%s912 + $0x50] sm:$0x1]
      %v962 = vsel %vm236, %v710, %v961
      %963 = vst [vmem:[%s912 + $0x50] sm:$0x1] %v962
      %v964 = vld [vmem:[%s912 + $0x54] sm:$0xf]
      %v965 = vsel %vm914, %v717, %v964
      %966 = vst [vmem:[%s912 + $0x54] sm:$0xf] %v965
      %967 = vst.msk [vmem:[%s912 + $0x58] sm:$0xf] %vm226, %v726
      %v968 = vld [vmem:[%s912 + $0x5c] sm:$0x1]
      %v969 = vsel %vm236, %v727, %v968
      %970 = vst [vmem:[%s912 + $0x5c] sm:$0x1] %v969
      %v971 = vld [vmem:[%s912 + $0x60] sm:$0xf]
      %v972 = vsel %vm914, %v734, %v971
      %973 = vst [vmem:[%s912 + $0x60] sm:$0xf] %v972
      %974 = vst.msk [vmem:[%s912 + $0x64] sm:$0xf] %vm226, %v743
      %v975 = vld [vmem:[%s912 + $0x68] sm:$0x1]
      %v976 = vsel %vm236, %v744, %v975
      %977 = vst [vmem:[%s912 + $0x68] sm:$0x1] %v976
      %v978 = vld [vmem:[%s912 + $0x6c] sm:$0xf]
      %v979 = vsel %vm914, %v751, %v978
      %980 = vst [vmem:[%s912 + $0x6c] sm:$0xf] %v979
      %981 = vst.msk [vmem:[%s912 + $0x70] sm:$0xf] %vm226, %v760
      %v982 = vld [vmem:[%s912 + $0x74] sm:$0x1]
      %v983 = vsel %vm236, %v761, %v982
      %984 = vst [vmem:[%s912 + $0x74] sm:$0x1] %v983
      %v985 = vld [vmem:[%s912 + $0x78] sm:$0xf]
      %v986 = vsel %vm914, %v768, %v985
      %987 = vst [vmem:[%s912 + $0x78] sm:$0xf] %v986
      %988 = vst.msk [vmem:[%s912 + $0x7c] sm:$0xf] %vm226, %v777
      %v989 = vld [vmem:[%s912 + $0x80] sm:$0x1]
      %v990 = vsel %vm236, %v778, %v989
      %991 = vst [vmem:[%s912 + $0x80] sm:$0x1] %v990
      %v992 = vld [vmem:[%s912 + $0x84] sm:$0xf]
      %v993 = vsel %vm914, %v785, %v992
      %994 = vst [vmem:[%s912 + $0x84] sm:$0xf] %v993
      %995 = vst.msk [vmem:[%s912 + $0x88] sm:$0xf] %vm226, %v794
      %v996 = vld [vmem:[%s912 + $0x8c] sm:$0x1]
      %v997 = vsel %vm236, %v795, %v996
      %998 = vst [vmem:[%s912 + $0x8c] sm:$0x1] %v997
      %v999 = vld [vmem:[%s912 + $0x90] sm:$0xf]
      %v1000 = vsel %vm914, %v802, %v999
      %1001 = vst [vmem:[%s912 + $0x90] sm:$0xf] %v1000
      %1002 = vst.msk [vmem:[%s912 + $0x94] sm:$0xf] %vm226, %v811
      %v1003 = vld [vmem:[%s912 + $0x98] sm:$0x1]
      %v1004 = vsel %vm236, %v812, %v1003
      %1005 = vst [vmem:[%s912 + $0x98] sm:$0x1] %v1004
      %v1006 = vld [vmem:[%s912 + $0x9c] sm:$0xf]
      %v1007 = vsel %vm914, %v819, %v1006
      %1008 = vst [vmem:[%s912 + $0x9c] sm:$0xf] %v1007
      %1009 = vst.msk [vmem:[%s912 + $0xa0] sm:$0xf] %vm226, %v828
      %v1010 = vld [vmem:[%s912 + $0xa4] sm:$0x1]
      %v1011 = vsel %vm236, %v829, %v1010
      %1012 = vst [vmem:[%s912 + $0xa4] sm:$0x1] %v1011
      %v1013 = vld [vmem:[%s912 + $0xa8] sm:$0xf]
      %v1014 = vsel %vm914, %v836, %v1013
      %1015 = vst [vmem:[%s912 + $0xa8] sm:$0xf] %v1014
      %1016 = vst.msk [vmem:[%s912 + $0xac] sm:$0xf] %vm226, %v845
      %v1017 = vld [vmem:[%s912 + $0xb0] sm:$0x1]
      %v1018 = vsel %vm236, %v846, %v1017
      %1019 = vst [vmem:[%s912 + $0xb0] sm:$0x1] %v1018
      %v1020 = vld [vmem:[%s912 + $0xb4] sm:$0xf]
      %v1021 = vsel %vm914, %v853, %v1020
      %1022 = vst [vmem:[%s912 + $0xb4] sm:$0xf] %v1021
      %1023 = vst.msk [vmem:[%s912 + $0xb8] sm:$0xf] %vm226, %v862
      %v1024 = vld [vmem:[%s912 + $0xbc] sm:$0x1]
      %v1025 = vsel %vm236, %v863, %v1024
      %1026 = vst [vmem:[%s912 + $0xbc] sm:$0x1] %v1025
      %v1027 = vld [vmem:[#allocation2] sm:$0xf]
      %v1028 = vld [vmem:[#allocation2 + $0x4] sm:$0xf]
      %v1029 = vld [vmem:[#allocation2 + $0xc] sm:$0xf]
      %v1030 = vld [vmem:[#allocation2 + $0x10] sm:$0xf]
      %v1031 = vld [vmem:[#allocation2 + $0x18] sm:$0xf]
      %v1032 = vld [vmem:[#allocation2 + $0x1c] sm:$0xf]
      %v1033 = vld [vmem:[#allocation2 + $0x24] sm:$0xf]
      %v1034 = vld [vmem:[#allocation2 + $0x28] sm:$0xf]
      %v1035 = vld [vmem:[#allocation2 + $0x30] sm:$0xf]
      %v1036 = vld [vmem:[#allocation2 + $0x34] sm:$0xf]
      %v1037 = vld [vmem:[#allocation2 + $0x3c] sm:$0xf]
      %v1038 = vld [vmem:[#allocation2 + $0x40] sm:$0xf]
      %v1039 = vld [vmem:[#allocation2 + $0x48] sm:$0xf]
      %v1040 = vld [vmem:[#allocation2 + $0x4c] sm:$0xf]
      %v1041 = vld [vmem:[#allocation2 + $0x54] sm:$0xf]
      %v1042 = vld [vmem:[#allocation2 + $0x58] sm:$0xf]
      %v1043 = vld [vmem:[#allocation2 + $0x60] sm:$0xf]
      %v1044 = vld [vmem:[#allocation2 + $0x64] sm:$0xf]
      %v1045 = vld [vmem:[#allocation2 + $0x6c] sm:$0xf]
      %v1046 = vld [vmem:[#allocation2 + $0x70] sm:$0xf]
      %v1047 = vld [vmem:[#allocation2 + $0x78] sm:$0xf]
      %v1048 = vld [vmem:[#allocation2 + $0x7c] sm:$0xf]
      %v1049 = vld [vmem:[#allocation2 + $0x84] sm:$0xf]
      %v1050 = vld [vmem:[#allocation2 + $0x88] sm:$0xf]
      %v1051 = vld [vmem:[#allocation2 + $0x90] sm:$0xf]
      %v1052 = vld [vmem:[#allocation2 + $0x94] sm:$0xf]
      %v1053 = vld [vmem:[#allocation2 + $0x9c] sm:$0xf]
      %v1054 = vld [vmem:[#allocation2 + $0xa0] sm:$0xf]
      %v1055 = vld [vmem:[#allocation2 + $0xa8] sm:$0xf]
      %v1056 = vld [vmem:[#allocation2 + $0xac] sm:$0xf]
      %v1057 = vld [vmem:[#allocation2 + $0xb4] sm:$0xf]
      %v1058 = vld [vmem:[#allocation2 + $0xb8] sm:$0xf]
      %v1059 = vld [vmem:[#allocation2 + $0xc0] sm:$0xf]
      %v1060 = vld [vmem:[#allocation2 + $0xc4] sm:$0xf]
      %v1061 = vld [vmem:[#allocation2 + $0xcc] sm:$0xf]
      %v1062 = vld [vmem:[#allocation2 + $0xd0] sm:$0xf]
      %v1095 = vunpack.c.l.b16 %v1027
      %v1096 = vunpack.c.l.b16 %v1028
      %v1097 = vunpack.c.l.b16 %v1029
      %v1098 = vunpack.c.l.b16 %v1030
      %v1099 = vunpack.c.l.b16 %v1031
      %v1100 = vunpack.c.l.b16 %v1032
      %v1101 = vunpack.c.l.b16 %v1033
      %v1102 = vunpack.c.l.b16 %v1034
      %v1103 = vunpack.c.l.b16 %v1035
      %v1104 = vunpack.c.l.b16 %v1036
      %v1105 = vunpack.c.l.b16 %v1037
      %v1106 = vunpack.c.l.b16 %v1038
      %v1107 = vunpack.c.l.b16 %v1039
      %v1108 = vunpack.c.l.b16 %v1040
      %v1109 = vunpack.c.l.b16 %v1041
      %v1110 = vunpack.c.l.b16 %v1042
      %v1111 = vunpack.c.l.b16 %v1043
      %v1112 = vunpack.c.l.b16 %v1044
      %v1113 = vunpack.c.l.b16 %v1045
      %v1114 = vunpack.c.l.b16 %v1046
      %v1115 = vunpack.c.l.b16 %v1047
      %v1116 = vunpack.c.l.b16 %v1048
      %v1117 = vunpack.c.l.b16 %v1049
      %v1118 = vunpack.c.l.b16 %v1050
      %v1119 = vunpack.c.l.b16 %v1051
      %v1120 = vunpack.c.l.b16 %v1052
      %v1121 = vunpack.c.l.b16 %v1053
      %v1122 = vunpack.c.l.b16 %v1054
      %v1123 = vunpack.c.l.b16 %v1055
      %v1124 = vunpack.c.l.b16 %v1056
      %v1125 = vunpack.c.l.b16 %v1057
      %v1126 = vunpack.c.l.b16 %v1058
      %v1127 = vpack.c.b16 %v1096, %v1095
      %v1128 = vpack.c.b16 %v1098, %v1097
      %v1129 = vpack.c.b16 %v1100, %v1099
      %v1130 = vpack.c.b16 %v1102, %v1101
      %v1131 = vpack.c.b16 %v1104, %v1103
      %v1132 = vpack.c.b16 %v1106, %v1105
      %v1133 = vpack.c.b16 %v1108, %v1107
      %v1134 = vpack.c.b16 %v1110, %v1109
      %v1135 = vpack.c.b16 %v1112, %v1111
      %v1136 = vpack.c.b16 %v1114, %v1113
      %v1137 = vpack.c.b16 %v1116, %v1115
      %v1138 = vpack.c.b16 %v1118, %v1117
      %v1139 = vpack.c.b16 %v1120, %v1119
      %v1140 = vpack.c.b16 %v1122, %v1121
      %v1141 = vpack.c.b16 %v1124, %v1123
      %v1142 = vpack.c.b16 %v1126, %v1125
      %v1145 = vunpack.c.l.b16 %v1059
      %v1146 = vunpack.c.l.b16 %v1060
      %v1147 = vpack.c.b16 %v1146, %v1145
      %1148 = vrot.lane.b32.xlu0 %v1128, 4
      %v1149 = vpop.permute.xlu0 %1148
      %1150 = vrot.lane.b32.xlu0 %v1129, 4
      %v1151 = vpop.permute.xlu0 %1150
      %1152 = vrot.lane.b32.xlu0 %v1130, 4
      %v1153 = vpop.permute.xlu0 %1152
      %1154 = vrot.lane.b32.xlu0 %v1131, 4
      %v1155 = vpop.permute.xlu0 %1154
      %1156 = vrot.lane.b32.xlu0 %v1132, 4
      %v1157 = vpop.permute.xlu0 %1156
      %1158 = vrot.lane.b32.xlu0 %v1133, 4
      %v1159 = vpop.permute.xlu0 %1158
      %1160 = vrot.lane.b32.xlu0 %v1134, 4
      %v1161 = vpop.permute.xlu0 %1160
      %1162 = vrot.lane.b32.xlu0 %v1135, 4
      %v1163 = vpop.permute.xlu0 %1162
      %1164 = vrot.lane.b32.xlu0 %v1136, 4
      %v1165 = vpop.permute.xlu0 %1164
      %1166 = vrot.lane.b32.xlu0 %v1137, 4
      %v1167 = vpop.permute.xlu0 %1166
      %1168 = vrot.lane.b32.xlu0 %v1138, 4
      %v1169 = vpop.permute.xlu0 %1168
      %1170 = vrot.lane.b32.xlu0 %v1139, 4
      %v1171 = vpop.permute.xlu0 %1170
      %1172 = vrot.lane.b32.xlu0 %v1140, 4
      %v1173 = vpop.permute.xlu0 %1172
      %1174 = vrot.lane.b32.xlu0 %v1141, 4
      %v1175 = vpop.permute.xlu0 %1174
      %1176 = vrot.lane.b32.xlu0 %v1142, 4
      %v1177 = vpop.permute.xlu0 %1176
      %1178 = vrot.lane.b32.xlu0 %v1147, 4
      %v1179 = vpop.permute.xlu0 %1178
      %v1182 = vunpack.c.l.b16 %v1061
      %v1183 = vunpack.c.l.b16 %v1062
      %v1184 = vpack.c.b16 %v1183, %v1182
      %1185 = vrot.lane.b32.xlu0 %v1129, 8
      %v1186 = vpop.permute.xlu0 %1185
      %1187 = vrot.lane.b32.xlu0 %v1130, 8
      %v1188 = vpop.permute.xlu0 %1187
      %1189 = vrot.lane.b32.xlu0 %v1131, 8
      %v1190 = vpop.permute.xlu0 %1189
      %1191 = vrot.lane.b32.xlu0 %v1132, 8
      %v1192 = vpop.permute.xlu0 %1191
      %1193 = vrot.lane.b32.xlu0 %v1133, 8
      %v1194 = vpop.permute.xlu0 %1193
      %1195 = vrot.lane.b32.xlu0 %v1134, 8
      %v1196 = vpop.permute.xlu0 %1195
      %1197 = vrot.lane.b32.xlu0 %v1135, 8
      %v1198 = vpop.permute.xlu0 %1197
      %1199 = vrot.lane.b32.xlu0 %v1136, 8
      %v1200 = vpop.permute.xlu0 %1199
      %1201 = vrot.lane.b32.xlu0 %v1137, 8
      %v1202 = vpop.permute.xlu0 %1201
      %1203 = vrot.lane.b32.xlu0 %v1138, 8
      %v1204 = vpop.permute.xlu0 %1203
      %1205 = vrot.lane.b32.xlu0 %v1139, 8
      %v1206 = vpop.permute.xlu0 %1205
      %1207 = vrot.lane.b32.xlu0 %v1140, 8
      %v1208 = vpop.permute.xlu0 %1207
      %1209 = vrot.lane.b32.xlu0 %v1141, 8
      %v1210 = vpop.permute.xlu0 %1209
      %1211 = vrot.lane.b32.xlu0 %v1142, 8
      %v1212 = vpop.permute.xlu0 %1211
      %1213 = vrot.lane.b32.xlu0 %v1147, 8
      %v1214 = vpop.permute.xlu0 %1213
      %1215 = vrot.lane.b32.xlu0 %v1184, 8
      %v1216 = vpop.permute.xlu0 %1215
      %vm1217 = vcmask 31744
      %v1220 = vsel %vm1217, %v1127, %v1149
      %v1223 = vsel %vm1217, %v1128, %v1151
      %v1226 = vsel %vm1217, %v1129, %v1153
      %v1229 = vsel %vm1217, %v1130, %v1155
      %v1232 = vsel %vm1217, %v1131, %v1157
      %v1235 = vsel %vm1217, %v1132, %v1159
      %v1238 = vsel %vm1217, %v1133, %v1161
      %v1241 = vsel %vm1217, %v1134, %v1163
      %v1244 = vsel %vm1217, %v1135, %v1165
      %v1247 = vsel %vm1217, %v1136, %v1167
      %v1250 = vsel %vm1217, %v1137, %v1169
      %v1253 = vsel %vm1217, %v1138, %v1171
      %v1256 = vsel %vm1217, %v1139, %v1173
      %v1259 = vsel %vm1217, %v1140, %v1175
      %v1262 = vsel %vm1217, %v1141, %v1177
      %v1265 = vsel %vm1217, %v1142, %v1179
      %vm1266 = vcmask 64512
      %v1268 = vsel %vm1266, %v1220, %v1186
      %v1270 = vsel %vm1266, %v1223, %v1188
      %v1272 = vsel %vm1266, %v1226, %v1190
      %v1274 = vsel %vm1266, %v1229, %v1192
      %v1276 = vsel %vm1266, %v1232, %v1194
      %v1278 = vsel %vm1266, %v1235, %v1196
      %v1280 = vsel %vm1266, %v1238, %v1198
      %v1282 = vsel %vm1266, %v1241, %v1200
      %v1284 = vsel %vm1266, %v1244, %v1202
      %v1286 = vsel %vm1266, %v1247, %v1204
      %v1288 = vsel %vm1266, %v1250, %v1206
      %v1290 = vsel %vm1266, %v1253, %v1208
      %v1292 = vsel %vm1266, %v1256, %v1210
      %v1294 = vsel %vm1266, %v1259, %v1212
      %v1296 = vsel %vm1266, %v1262, %v1214
      %v1298 = vsel %vm1266, %v1265, %v1216
      %v1299 = vld [vmem:[%s1] sm:$0xf]
      %v1300 = vld [vmem:[%s1 + $0x4] sm:$0x3]
      %v1301 = vld [vmem:[#allocation2 + $0x8] sm:$0x1]
      %v1302 = vld [vmem:[#allocation2 + $0x14] sm:$0x1]
      %v1303 = vld [vmem:[#allocation2 + $0x20] sm:$0x1]
      %v1304 = vld [vmem:[#allocation2 + $0x2c] sm:$0x1]
      %v1305 = vld [vmem:[#allocation2 + $0x38] sm:$0x1]
      %v1306 = vld [vmem:[#allocation2 + $0x44] sm:$0x1]
      %v1307 = vld [vmem:[#allocation2 + $0x50] sm:$0x1]
      %v1308 = vld [vmem:[#allocation2 + $0x5c] sm:$0x1]
      %v1309 = vld [vmem:[#allocation2 + $0x68] sm:$0x1]
      %v1310 = vld [vmem:[#allocation2 + $0x74] sm:$0x1]
      %v1311 = vld [vmem:[#allocation2 + $0x80] sm:$0x1]
      %v1312 = vld [vmem:[#allocation2 + $0x8c] sm:$0x1]
      %v1313 = vld [vmem:[#allocation2 + $0x98] sm:$0x1]
      %v1314 = vld [vmem:[#allocation2 + $0xa4] sm:$0x1]
      %v1315 = vld [vmem:[#allocation2 + $0xb0] sm:$0x1]
      %v1316 = vld [vmem:[#allocation2 + $0xbc] sm:$0x1]
      %v1317 = vld [vmem:[#allocation2 + $0xc8] sm:$0x1]
      %v1318 = vld [vmem:[#allocation2 + $0xd4] sm:$0x1]
      %v1335 = vunpack.c.l.b16 %v1301
      %v1336 = vunpack.c.l.b16 %v1302
      %v1337 = vunpack.c.l.b16 %v1303
      %v1338 = vunpack.c.l.b16 %v1304
      %v1339 = vunpack.c.l.b16 %v1305
      %v1340 = vunpack.c.l.b16 %v1306
      %v1341 = vunpack.c.l.b16 %v1307
      %v1342 = vunpack.c.l.b16 %v1308
      %v1343 = vunpack.c.l.b16 %v1309
      %v1344 = vunpack.c.l.b16 %v1310
      %v1345 = vunpack.c.l.b16 %v1311
      %v1346 = vunpack.c.l.b16 %v1312
      %v1347 = vunpack.c.l.b16 %v1313
      %v1348 = vunpack.c.l.b16 %v1314
      %v1349 = vunpack.c.l.b16 %v1315
      %v1350 = vunpack.c.l.b16 %v1316
      %v1351 = vpack.c.b16 %v1335, %v1335
      %v1352 = vpack.c.b16 %v1336, %v1336
      %v1353 = vpack.c.b16 %v1337, %v1337
      %v1354 = vpack.c.b16 %v1338, %v1338
      %v1355 = vpack.c.b16 %v1339, %v1339
      %v1356 = vpack.c.b16 %v1340, %v1340
      %v1357 = vpack.c.b16 %v1341, %v1341
      %v1358 = vpack.c.b16 %v1342, %v1342
      %v1359 = vpack.c.b16 %v1343, %v1343
      %v1360 = vpack.c.b16 %v1344, %v1344
      %v1361 = vpack.c.b16 %v1345, %v1345
      %v1362 = vpack.c.b16 %v1346, %v1346
      %v1363 = vpack.c.b16 %v1347, %v1347
      %v1364 = vpack.c.b16 %v1348, %v1348
      %v1365 = vpack.c.b16 %v1349, %v1349
      %v1366 = vpack.c.b16 %v1350, %v1350
      %v1368 = vunpack.c.l.b16 %v1317
      %v1369 = vpack.c.b16 %v1368, %v1368
      %1370 = vrot.lane.b32.xlu0 %v1352, 4
      %v1371 = vpop.permute.xlu0 %1370
      %1372 = vrot.lane.b32.xlu0 %v1353, 4
      %v1373 = vpop.permute.xlu0 %1372
      %1374 = vrot.lane.b32.xlu0 %v1354, 4
      %v1375 = vpop.permute.xlu0 %1374
      %1376 = vrot.lane.b32.xlu0 %v1355, 4
      %v1377 = vpop.permute.xlu0 %1376
      %1378 = vrot.lane.b32.xlu0 %v1356, 4
      %v1379 = vpop.permute.xlu0 %1378
      %1380 = vrot.lane.b32.xlu0 %v1357, 4
      %v1381 = vpop.permute.xlu0 %1380
      %1382 = vrot.lane.b32.xlu0 %v1358, 4
      %v1383 = vpop.permute.xlu0 %1382
      %1384 = vrot.lane.b32.xlu0 %v1359, 4
      %v1385 = vpop.permute.xlu0 %1384
      %1386 = vrot.lane.b32.xlu0 %v1360, 4
      %v1387 = vpop.permute.xlu0 %1386
      %1388 = vrot.lane.b32.xlu0 %v1361, 4
      %v1389 = vpop.permute.xlu0 %1388
      %1390 = vrot.lane.b32.xlu0 %v1362, 4
      %v1391 = vpop.permute.xlu0 %1390
      %1392 = vrot.lane.b32.xlu0 %v1363, 4
      %v1393 = vpop.permute.xlu0 %1392
      %1394 = vrot.lane.b32.xlu0 %v1364, 4
      %v1395 = vpop.permute.xlu0 %1394
      %1396 = vrot.lane.b32.xlu0 %v1365, 4
      %v1397 = vpop.permute.xlu0 %1396
      %1398 = vrot.lane.b32.xlu0 %v1366, 4
      %v1399 = vpop.permute.xlu0 %1398
      %1400 = vrot.lane.b32.xlu0 %v1369, 4
      %v1401 = vpop.permute.xlu0 %1400
      %v1403 = vunpack.c.l.b16 %v1318
      %v1404 = vpack.c.b16 %v1403, %v1403
      %1405 = vrot.lane.b32.xlu0 %v1353, 8
      %v1406 = vpop.permute.xlu0 %1405
      %1407 = vrot.lane.b32.xlu0 %v1354, 8
      %v1408 = vpop.permute.xlu0 %1407
      %1409 = vrot.lane.b32.xlu0 %v1355, 8
      %v1410 = vpop.permute.xlu0 %1409
      %1411 = vrot.lane.b32.xlu0 %v1356, 8
      %v1412 = vpop.permute.xlu0 %1411
      %1413 = vrot.lane.b32.xlu0 %v1357, 8
      %v1414 = vpop.permute.xlu0 %1413
      %1415 = vrot.lane.b32.xlu0 %v1358, 8
      %v1416 = vpop.permute.xlu0 %1415
      %1417 = vrot.lane.b32.xlu0 %v1359, 8
      %v1418 = vpop.permute.xlu0 %1417
      %1419 = vrot.lane.b32.xlu0 %v1360, 8
      %v1420 = vpop.permute.xlu0 %1419
      %1421 = vrot.lane.b32.xlu0 %v1361, 8
      %v1422 = vpop.permute.xlu0 %1421
      %1423 = vrot.lane.b32.xlu0 %v1362, 8
      %v1424 = vpop.permute.xlu0 %1423
      %1425 = vrot.lane.b32.xlu0 %v1363, 8
      %v1426 = vpop.permute.xlu0 %1425
      %1427 = vrot.lane.b32.xlu0 %v1364, 8
      %v1428 = vpop.permute.xlu0 %1427
      %1429 = vrot.lane.b32.xlu0 %v1365, 8
      %v1430 = vpop.permute.xlu0 %1429
      %1431 = vrot.lane.b32.xlu0 %v1366, 8
      %v1432 = vpop.permute.xlu0 %1431
      %1433 = vrot.lane.b32.xlu0 %v1369, 8
      %v1434 = vpop.permute.xlu0 %1433
      %1435 = vrot.lane.b32.xlu0 %v1404, 8
      %v1436 = vpop.permute.xlu0 %1435
      %v1439 = vsel %vm1217, %v1351, %v1371
      %v1442 = vsel %vm1217, %v1352, %v1373
      %v1445 = vsel %vm1217, %v1353, %v1375
      %v1448 = vsel %vm1217, %v1354, %v1377
      %v1451 = vsel %vm1217, %v1355, %v1379
      %v1454 = vsel %vm1217, %v1356, %v1381
      %v1457 = vsel %vm1217, %v1357, %v1383
      %v1460 = vsel %vm1217, %v1358, %v1385
      %v1463 = vsel %vm1217, %v1359, %v1387
      %v1466 = vsel %vm1217, %v1360, %v1389
      %v1469 = vsel %vm1217, %v1361, %v1391
      %v1472 = vsel %vm1217, %v1362, %v1393
      %v1475 = vsel %vm1217, %v1363, %v1395
      %v1478 = vsel %vm1217, %v1364, %v1397
      %v1481 = vsel %vm1217, %v1365, %v1399
      %v1484 = vsel %vm1217, %v1366, %v1401
      %v1486 = vsel %vm1266, %v1439, %v1406
      %v1488 = vsel %vm1266, %v1442, %v1408
      %v1490 = vsel %vm1266, %v1445, %v1410
      %v1492 = vsel %vm1266, %v1448, %v1412
      %v1494 = vsel %vm1266, %v1451, %v1414
      %v1496 = vsel %vm1266, %v1454, %v1416
      %v1498 = vsel %vm1266, %v1457, %v1418
      %v1500 = vsel %vm1266, %v1460, %v1420
      %v1502 = vsel %vm1266, %v1463, %v1422
      %v1504 = vsel %vm1266, %v1466, %v1424
      %v1506 = vsel %vm1266, %v1469, %v1426
      %v1508 = vsel %vm1266, %v1472, %v1428
      %v1510 = vsel %vm1266, %v1475, %v1430
      %v1512 = vsel %vm1266, %v1478, %v1432
      %v1514 = vsel %vm1266, %v1481, %v1434
      %v1516 = vsel %vm1266, %v1484, %v1436
      %vm1517 = vsmask.f32 7424
      %v1518 = vshrl.u32 %v1268, 16
      %v1520 = vshll.u32 %v1268, 16
      %v1522 = vrot.slane %v1520, 1
      %v1523 = vor.u32 %v1518, %v1522
      %v1524 = vshll.u32 %v1486, 16
      %v1526 = vrot.slane %v1524, 1
      %v1527 = vsel %vm1517, %v1523, %v1526
      %v1528 = vshrl.u32 %v1270, 16
      %v1530 = vshll.u32 %v1270, 16
      %v1532 = vrot.slane %v1530, 1
      %v1533 = vor.u32 %v1528, %v1532
      %v1534 = vshll.u32 %v1488, 16
      %v1536 = vrot.slane %v1534, 1
      %v1537 = vsel %vm1517, %v1533, %v1536
      %v1538 = vshrl.u32 %v1272, 16
      %v1540 = vshll.u32 %v1272, 16
      %v1542 = vrot.slane %v1540, 1
      %v1543 = vor.u32 %v1538, %v1542
      %v1544 = vshll.u32 %v1490, 16
      %v1546 = vrot.slane %v1544, 1
      %v1547 = vsel %vm1517, %v1543, %v1546
      %v1548 = vshrl.u32 %v1274, 16
      %v1550 = vshll.u32 %v1274, 16
      %v1552 = vrot.slane %v1550, 1
      %v1553 = vor.u32 %v1548, %v1552
      %v1554 = vshll.u32 %v1492, 16
      %v1556 = vrot.slane %v1554, 1
      %v1557 = vsel %vm1517, %v1553, %v1556
      %v1558 = vshrl.u32 %v1276, 16
      %v1560 = vshll.u32 %v1276, 16
      %v1562 = vrot.slane %v1560, 1
      %v1563 = vor.u32 %v1558, %v1562
      %v1564 = vshll.u32 %v1494, 16
      %v1566 = vrot.slane %v1564, 1
      %v1567 = vsel %vm1517, %v1563, %v1566
      %v1568 = vshrl.u32 %v1278, 16
      %v1570 = vshll.u32 %v1278, 16
      %v1572 = vrot.slane %v1570, 1
      %v1573 = vor.u32 %v1568, %v1572
      %v1574 = vshll.u32 %v1496, 16
      %v1576 = vrot.slane %v1574, 1
      %v1577 = vsel %vm1517, %v1573, %v1576
      %v1578 = vshrl.u32 %v1280, 16
      %v1580 = vshll.u32 %v1280, 16
      %v1582 = vrot.slane %v1580, 1
      %v1583 = vor.u32 %v1578, %v1582
      %v1584 = vshll.u32 %v1498, 16
      %v1586 = vrot.slane %v1584, 1
      %v1587 = vsel %vm1517, %v1583, %v1586
      %v1588 = vshrl.u32 %v1282, 16
      %v1590 = vshll.u32 %v1282, 16
      %v1592 = vrot.slane %v1590, 1
      %v1593 = vor.u32 %v1588, %v1592
      %v1594 = vshll.u32 %v1500, 16
      %v1596 = vrot.slane %v1594, 1
      %v1597 = vsel %vm1517, %v1593, %v1596
      %v1598 = vshrl.u32 %v1284, 16
      %v1600 = vshll.u32 %v1284, 16
      %v1602 = vrot.slane %v1600, 1
      %v1603 = vor.u32 %v1598, %v1602
      %v1604 = vshll.u32 %v1502, 16
      %v1606 = vrot.slane %v1604, 1
      %v1607 = vsel %vm1517, %v1603, %v1606
      %v1608 = vshrl.u32 %v1286, 16
      %v1610 = vshll.u32 %v1286, 16
      %v1612 = vrot.slane %v1610, 1
      %v1613 = vor.u32 %v1608, %v1612
      %v1614 = vshll.u32 %v1504, 16
      %v1616 = vrot.slane %v1614, 1
      %v1617 = vsel %vm1517, %v1613, %v1616
      %v1618 = vshrl.u32 %v1288, 16
      %v1620 = vshll.u32 %v1288, 16
      %v1622 = vrot.slane %v1620, 1
      %v1623 = vor.u32 %v1618, %v1622
      %v1624 = vshll.u32 %v1506, 16
      %v1626 = vrot.slane %v1624, 1
      %v1627 = vsel %vm1517, %v1623, %v1626
      %v1628 = vshrl.u32 %v1290, 16
      %v1630 = vshll.u32 %v1290, 16
      %v1632 = vrot.slane %v1630, 1
      %v1633 = vor.u32 %v1628, %v1632
      %v1634 = vshll.u32 %v1508, 16
      %v1636 = vrot.slane %v1634, 1
      %v1637 = vsel %vm1517, %v1633, %v1636
      %v1638 = vshrl.u32 %v1292, 16
      %v1640 = vshll.u32 %v1292, 16
      %v1642 = vrot.slane %v1640, 1
      %v1643 = vor.u32 %v1638, %v1642
      %v1644 = vshll.u32 %v1510, 16
      %v1646 = vrot.slane %v1644, 1
      %v1647 = vsel %vm1517, %v1643, %v1646
      %v1648 = vshrl.u32 %v1294, 16
      %v1650 = vshll.u32 %v1294, 16
      %v1652 = vrot.slane %v1650, 1
      %v1653 = vor.u32 %v1648, %v1652
      %v1654 = vshll.u32 %v1512, 16
      %v1656 = vrot.slane %v1654, 1
      %v1657 = vsel %vm1517, %v1653, %v1656
      %v1658 = vshrl.u32 %v1296, 16
      %v1660 = vshll.u32 %v1296, 16
      %v1662 = vrot.slane %v1660, 1
      %v1663 = vor.u32 %v1658, %v1662
      %v1664 = vshll.u32 %v1514, 16
      %v1666 = vrot.slane %v1664, 1
      %v1667 = vsel %vm1517, %v1663, %v1666
      %v1668 = vshrl.u32 %v1298, 16
      %v1670 = vshll.u32 %v1298, 16
      %v1672 = vrot.slane %v1670, 1
      %v1673 = vor.u32 %v1668, %v1672
      %v1674 = vshll.u32 %v1516, 16
      %v1676 = vrot.slane %v1674, 1
      %v1677 = vsel %vm1517, %v1673, %v1676
      %s1678 = scalar_lea.vmem %s1, 8
      %v1679 = vld [vmem:[%s1678] sm:$0xf]
      %v1680 = vld [vmem:[%s1678 + $0x4] sm:$0x3]
      %v1683 = vunpack.c.l.b16 %v1679
      %v1684 = vunpack.c.l.b16 %v1680
      %v1685 = vpack.c.b16 %v1684, %v1683
      %vm1686 = vcmask 97280
      %v1688 = vsel %vm1686, %v1527, 0
      %v1691 = vsel %vm1686, %v1537, 0
      %v1694 = vsel %vm1686, %v1547, 0
      %v1697 = vsel %vm1686, %v1557, 0
      %v1700 = vsel %vm1686, %v1567, 0
      %v1703 = vsel %vm1686, %v1577, 0
      %v1706 = vsel %vm1686, %v1587, 0
      %v1709 = vsel %vm1686, %v1597, 0
      %v1712 = vsel %vm1686, %v1607, 0
      %v1715 = vsel %vm1686, %v1617, 0
      %v1718 = vsel %vm1686, %v1627, 0
      %v1721 = vsel %vm1686, %v1637, 0
      %v1724 = vsel %vm1686, %v1647, 0
      %v1727 = vsel %vm1686, %v1657, 0
      %v1730 = vsel %vm1686, %v1667, 0
      %v1733 = vsel %vm1686, %v1677, 0
      %vm1735 = vcmask 1045504
      %v1737 = vsel %vm1735, %v1685, 0
      %1739 = vmatprep.subr.bf16.mxu0 0
      %1740 = vmatpush1.bf16.msra.mxu0 %v1737
      %1741 = vmatprep.subr.bf16.mxu0 0
      %1742 = vmatpush1.bf16.msra.mxu0 0
      %1743 = vmatprep.subr.bf16.mxu0 0
      %1744 = vmatpush1.bf16.msra.mxu0 0
      %1745 = vmatprep.subr.bf16.mxu0 0
      %1746 = vmatpush1.bf16.msra.mxu0 0
      %1747 = vmatprep.subr.bf16.mxu0 0
      %1748 = vmatpush1.bf16.msra.mxu0 0
      %1749 = vmatprep.subr.bf16.mxu0 0
      %1750 = vmatpush1.bf16.msra.mxu0 0
      %1751 = vmatprep.subr.bf16.mxu0 0
      %1752 = vmatpush1.bf16.msra.mxu0 0
      %1753 = vmatprep.subr.bf16.mxu0 0
      %1754 = vmatpush1.bf16.msra.mxu0 0
      %1755 = vmatprep.subr.bf16.mxu0 0
      %1756 = vmatpush1.bf16.msra.mxu0 0
      %1757 = vmatprep.subr.bf16.mxu0 0
      %1758 = vmatpush1.bf16.msra.mxu0 0
      %1759 = vmatprep.subr.bf16.mxu0 0
      %1760 = vmatpush1.bf16.msra.mxu0 0
      %1761 = vmatprep.subr.bf16.mxu0 0
      %1762 = vmatpush1.bf16.msra.mxu0 0
      %1763 = vmatprep.subr.bf16.mxu0 0
      %1764 = vmatpush1.bf16.msra.mxu0 0
      %1765 = vmatprep.subr.bf16.mxu0 0
      %1766 = vmatpush1.bf16.msra.mxu0 0
      %1767 = vmatprep.subr.bf16.mxu0 0
      %1768 = vmatpush1.bf16.msra.mxu0 0
      %1769 = vmatprep.subr.bf16.mxu0 0
      %1770 = vmatpush1.bf16.msra.mxu0 0
      %1771 = vmatprep.mubr.bf16.mxu0 0
      %1772 = vmatmul.mubr.bf16.gmra.mrb[0].mxu0 %v1688
      %v1773 = vpop.f32.mrb[0].mxu0
      %v1774 = vadd.f32 0.0, %v1773
      %v1775 = vpop.f32.mrb[0].mxu0
      %v1776 = vpop.f32.mrb[0].mxu0
      %v1777 = vadd.f32 0.0, %v1776
      %v1778 = vpop.f32.mrb[0].mxu0
      %1779 = vmatprep.mubr.bf16.mxu0 0
      %1780 = vmatmul.mubr.bf16.gmra.mrb[0].mxu0 %v1691
      %v1781 = vpop.f32.mrb[0].mxu0
      %v1782 = vadd.f32 0.0, %v1781
      %v1783 = vpop.f32.mrb[0].mxu0
      %v1784 = vpop.f32.mrb[0].mxu0
      %v1785 = vadd.f32 0.0, %v1784
      %v1786 = vpop.f32.mrb[0].mxu0
      %1787 = vmatprep.mubr.bf16.mxu0 0
      %1788 = vmatmul.mubr.bf16.gmra.mrb[0].mxu0 %v1694
      %v1789 = vpop.f32.mrb[0].mxu0
      %v1790 = vadd.f32 0.0, %v1789
      %v1791 = vpop.f32.mrb[0].mxu0
      %v1792 = vpop.f32.mrb[0].mxu0
      %v1793 = vadd.f32 0.0, %v1792
      %v1794 = vpop.f32.mrb[0].mxu0
      %1795 = vmatprep.mubr.bf16.mxu0 0
      %1796 = vmatmul.mubr.bf16.gmra.mrb[0].mxu0 %v1697
      %v1797 = vpop.f32.mrb[0].mxu0
      %v1798 = vadd.f32 0.0, %v1797
      %v1799 = vpop.f32.mrb[0].mxu0
      %v1800 = vpop.f32.mrb[0].mxu0
      %v1801 = vadd.f32 0.0, %v1800
      %v1802 = vpop.f32.mrb[0].mxu0
      %1803 = vmatprep.mubr.bf16.mxu0 0
      %1804 = vmatmul.mubr.bf16.gmra.mrb[0].mxu0 %v1700
      %v1805 = vpop.f32.mrb[0].mxu0
      %v1806 = vadd.f32 0.0, %v1805
      %v1807 = vpop.f32.mrb[0].mxu0
      %v1808 = vpop.f32.mrb[0].mxu0
      %v1809 = vadd.f32 0.0, %v1808
      %v1810 = vpop.f32.mrb[0].mxu0
      %1811 = vmatprep.mubr.bf16.mxu0 0
      %1812 = vmatmul.mubr.bf16.gmra.mrb[0].mxu0 %v1703
      %v1813 = vpop.f32.mrb[0].mxu0
      %v1814 = vadd.f32 0.0, %v1813
      %v1815 = vpop.f32.mrb[0].mxu0
      %v1816 = vpop.f32.mrb[0].mxu0
      %v1817 = vadd.f32 0.0, %v1816
      %v1818 = vpop.f32.mrb[0].mxu0
      %1819 = vmatprep.mubr.bf16.mxu0 0
      %1820 = vmatmul.mubr.bf16.gmra.mrb[0].mxu0 %v1706
      %v1821 = vpop.f32.mrb[0].mxu0
      %v1822 = vadd.f32 0.0, %v1821
      %v1823 = vpop.f32.mrb[0].mxu0
      %v1824 = vpop.f32.mrb[0].mxu0
      %v1825 = vadd.f32 0.0, %v1824
      %v1826 = vpop.f32.mrb[0].mxu0
      %1827 = vmatprep.mubr.bf16.mxu0 0
      %1828 = vmatmul.mubr.bf16.gmra.mrb[0].mxu0 %v1709
      %v1829 = vpop.f32.mrb[0].mxu0
      %v1830 = vadd.f32 0.0, %v1829
      %v1831 = vpop.f32.mrb[0].mxu0
      %v1832 = vpop.f32.mrb[0].mxu0
      %v1833 = vadd.f32 0.0, %v1832
      %v1834 = vpop.f32.mrb[0].mxu0
      %1835 = vmatprep.mubr.bf16.mxu0 0
      %1836 = vmatmul.mubr.bf16.gmra.mrb[0].mxu0 %v1712
      %v1837 = vpop.f32.mrb[0].mxu0
      %v1838 = vadd.f32 0.0, %v1837
      %v1839 = vpop.f32.mrb[0].mxu0
      %v1840 = vpop.f32.mrb[0].mxu0
      %v1841 = vadd.f32 0.0, %v1840
      %v1842 = vpop.f32.mrb[0].mxu0
      %1843 = vmatprep.mubr.bf16.mxu0 0
      %1844 = vmatmul.mubr.bf16.gmra.mrb[0].mxu0 %v1715
      %v1845 = vpop.f32.mrb[0].mxu0
      %v1846 = vadd.f32 0.0, %v1845
      %v1847 = vpop.f32.mrb[0].mxu0
      %v1848 = vpop.f32.mrb[0].mxu0
      %v1849 = vadd.f32 0.0, %v1848
      %v1850 = vpop.f32.mrb[0].mxu0
      %1851 = vmatprep.mubr.bf16.mxu0 0
      %1852 = vmatmul.mubr.bf16.gmra.mrb[0].mxu0 %v1718
      %v1853 = vpop.f32.mrb[0].mxu0
      %v1854 = vadd.f32 0.0, %v1853
      %v1855 = vpop.f32.mrb[0].mxu0
      %v1856 = vpop.f32.mrb[0].mxu0
      %v1857 = vadd.f32 0.0, %v1856
      %v1858 = vpop.f32.mrb[0].mxu0
      %1859 = vmatprep.mubr.bf16.mxu0 0
      %1860 = vmatmul.mubr.bf16.gmra.mrb[0].mxu0 %v1721
      %v1861 = vpop.f32.mrb[0].mxu0
      %v1862 = vadd.f32 0.0, %v1861
      %v1863 = vpop.f32.mrb[0].mxu0
      %v1864 = vpop.f32.mrb[0].mxu0
      %v1865 = vadd.f32 0.0, %v1864
      %v1866 = vpop.f32.mrb[0].mxu0
      %1867 = vmatprep.mubr.bf16.mxu0 0
      %1868 = vmatmul.mubr.bf16.gmra.mrb[0].mxu0 %v1724
      %v1869 = vpop.f32.mrb[0].mxu0
      %v1870 = vadd.f32 0.0, %v1869
      %v1871 = vpop.f32.mrb[0].mxu0
      %v1872 = vpop.f32.mrb[0].mxu0
      %v1873 = vadd.f32 0.0, %v1872
      %v1874 = vpop.f32.mrb[0].mxu0
      %1875 = vmatprep.mubr.bf16.mxu0 0
      %1876 = vmatmul.mubr.bf16.gmra.mrb[0].mxu0 %v1727
      %v1877 = vpop.f32.mrb[0].mxu0
      %v1878 = vadd.f32 0.0, %v1877
      %v1879 = vpop.f32.mrb[0].mxu0
      %v1880 = vpop.f32.mrb[0].mxu0
      %v1881 = vadd.f32 0.0, %v1880
      %v1882 = vpop.f32.mrb[0].mxu0
      %1883 = vmatprep.mubr.bf16.mxu0 0
      %1884 = vmatmul.mubr.bf16.gmra.mrb[0].mxu0 %v1730
      %v1885 = vpop.f32.mrb[0].mxu0
      %v1886 = vadd.f32 0.0, %v1885
      %v1887 = vpop.f32.mrb[0].mxu0
      %v1888 = vpop.f32.mrb[0].mxu0
      %v1889 = vadd.f32 0.0, %v1888
      %v1890 = vpop.f32.mrb[0].mxu0
      %1891 = vmatprep.mubr.bf16.mxu0 0
      %1892 = vmatmul.mubr.bf16.gmra.mrb[0].mxu0 %v1733
      %v1893 = vpop.f32.mrb[0].mxu0
      %v1894 = vadd.f32 0.0, %v1893
      %v1895 = vpop.f32.mrb[0].mxu0
      %v1896 = vpop.f32.mrb[0].mxu0
      %v1897 = vadd.f32 0.0, %v1896
      %v1898 = vpop.f32.mrb[0].mxu0
      %1899 = vdwg.mxu0
      %v1902 = vunpack.c.l.b16 %v1299
      %v1903 = vunpack.c.l.b16 %v1300
      %v1904 = vpack.c.b16 %v1903, %v1902
      %v1905 = vsel %vm1686, %v1268, 0
      %v1907 = vsel %vm1686, %v1270, 0
      %v1909 = vsel %vm1686, %v1272, 0
      %v1911 = vsel %vm1686, %v1274, 0
      %v1913 = vsel %vm1686, %v1276, 0
      %v1915 = vsel %vm1686, %v1278, 0
      %v1917 = vsel %vm1686, %v1280, 0
      %v1919 = vsel %vm1686, %v1282, 0
      %v1921 = vsel %vm1686, %v1284, 0
      %v1923 = vsel %vm1686, %v1286, 0
      %v1925 = vsel %vm1686, %v1288, 0
      %v1927 = vsel %vm1686, %v1290, 0
      %v1929 = vsel %vm1686, %v1292, 0
      %v1931 = vsel %vm1686, %v1294, 0
      %v1933 = vsel %vm1686, %v1296, 0
      %v1935 = vsel %vm1686, %v1298, 0
      %v1938 = vsel %vm1735, %v1904, 0
      %1940 = vmatprep.subr.bf16.mxu0 0
      %1941 = vmatpush1.bf16.msra.mxu0 %v1938
      %1942 = vmatprep.subr.bf16.mxu0 0
      %1943 = vmatpush1.bf16.msra.mxu0 0
      %1944 = vmatprep.subr.bf16.mxu0 0
      %1945 = vmatpush1.bf16.msra.mxu0 0
      %1946 = vmatprep.subr.bf16.mxu0 0
      %1947 = vmatpush1.bf16.msra.mxu0 0
      %1948 = vmatprep.subr.bf16.mxu0 0
      %1949 = vmatpush1.bf16.msra.mxu0 0
      %1950 = vmatprep.subr.bf16.mxu0 0
      %1951 = vmatpush1.bf16.msra.mxu0 0
      %1952 = vmatprep.subr.bf16.mxu0 0
      %1953 = vmatpush1.bf16.msra.mxu0 0
      %1954 = vmatprep.subr.bf16.mxu0 0
      %1955 = vmatpush1.bf16.msra.mxu0 0
      %1956 = vmatprep.subr.bf16.mxu0 0
      %1957 = vmatpush1.bf16.msra.mxu0 0
      %1958 = vmatprep.subr.bf16.mxu0 0
      %1959 = vmatpush1.bf16.msra.mxu0 0
      %1960 = vmatprep.subr.bf16.mxu0 0
      %1961 = vmatpush1.bf16.msra.mxu0 0
      %1962 = vmatprep.subr.bf16.mxu0 0
      %1963 = vmatpush1.bf16.msra.mxu0 0
      %1964 = vmatprep.subr.bf16.mxu0 0
      %1965 = vmatpush1.bf16.msra.mxu0 0
      %1966 = vmatprep.subr.bf16.mxu0 0
      %1967 = vmatpush1.bf16.msra.mxu0 0
      %1968 = vmatprep.subr.bf16.mxu0 0
      %1969 = vmatpush1.bf16.msra.mxu0 0
      %1970 = vmatprep.subr.bf16.mxu0 0
      %1971 = vmatpush1.bf16.msra.mxu0 0
      %1972 = vmatprep.mubr.bf16.mxu0 0
      %1973 = vmatmul.mubr.bf16.gmra.mrb[0].mxu0 %v1905
      %v1974 = vpop.f32.mrb[0].mxu0
      %v1975 = vadd.f32 %v1774, %v1974
      %v1976 = vpop.f32.mrb[0].mxu0
      %v1977 = vpop.f32.mrb[0].mxu0
      %v1978 = vadd.f32 %v1777, %v1977
      %v1979 = vpop.f32.mrb[0].mxu0
      %1980 = vmatprep.mubr.bf16.mxu0 0
      %1981 = vmatmul.mubr.bf16.gmra.mrb[0].mxu0 %v1907
      %v1982 = vpop.f32.mrb[0].mxu0
      %v1983 = vadd.f32 %v1782, %v1982
      %v1984 = vpop.f32.mrb[0].mxu0
      %v1985 = vpop.f32.mrb[0].mxu0
      %v1986 = vadd.f32 %v1785, %v1985
      %v1987 = vpop.f32.mrb[0].mxu0
      %1988 = vmatprep.mubr.bf16.mxu0 0
      %1989 = vmatmul.mubr.bf16.gmra.mrb[0].mxu0 %v1909
      %v1990 = vpop.f32.mrb[0].mxu0
      %v1991 = vadd.f32 %v1790, %v1990
      %v1992 = vpop.f32.mrb[0].mxu0
      %v1993 = vpop.f32.mrb[0].mxu0
      %v1994 = vadd.f32 %v1793, %v1993
      %v1995 = vpop.f32.mrb[0].mxu0
      %1996 = vmatprep.mubr.bf16.mxu0 0
      %1997 = vmatmul.mubr.bf16.gmra.mrb[0].mxu0 %v1911
      %v1998 = vpop.f32.mrb[0].mxu0
      %v1999 = vadd.f32 %v1798, %v1998
      %v2000 = vpop.f32.mrb[0].mxu0
      %v2001 = vpop.f32.mrb[0].mxu0
      %v2002 = vadd.f32 %v1801, %v2001
      %v2003 = vpop.f32.mrb[0].mxu0
      %2004 = vmatprep.mubr.bf16.mxu0 0
      %2005 = vmatmul.mubr.bf16.gmra.mrb[0].mxu0 %v1913
      %v2006 = vpop.f32.mrb[0].mxu0
      %v2007 = vadd.f32 %v1806, %v2006
      %v2008 = vpop.f32.mrb[0].mxu0
      %v2009 = vpop.f32.mrb[0].mxu0
      %v2010 = vadd.f32 %v1809, %v2009
      %v2011 = vpop.f32.mrb[0].mxu0
      %2012 = vmatprep.mubr.bf16.mxu0 0
      %2013 = vmatmul.mubr.bf16.gmra.mrb[0].mxu0 %v1915
      %v2014 = vpop.f32.mrb[0].mxu0
      %v2015 = vadd.f32 %v1814, %v2014
      %v2016 = vpop.f32.mrb[0].mxu0
      %v2017 = vpop.f32.mrb[0].mxu0
      %v2018 = vadd.f32 %v1817, %v2017
      %v2019 = vpop.f32.mrb[0].mxu0
      %2020 = vmatprep.mubr.bf16.mxu0 0
      %2021 = vmatmul.mubr.bf16.gmra.mrb[0].mxu0 %v1917
      %v2022 = vpop.f32.mrb[0].mxu0
      %v2023 = vadd.f32 %v1822, %v2022
      %v2024 = vpop.f32.mrb[0].mxu0
      %v2025 = vpop.f32.mrb[0].mxu0
      %v2026 = vadd.f32 %v1825, %v2025
      %v2027 = vpop.f32.mrb[0].mxu0
      %2028 = vmatprep.mubr.bf16.mxu0 0
      %2029 = vmatmul.mubr.bf16.gmra.mrb[0].mxu0 %v1919
      %v2030 = vpop.f32.mrb[0].mxu0
      %v2031 = vadd.f32 %v1830, %v2030
      %v2032 = vpop.f32.mrb[0].mxu0
      %v2033 = vpop.f32.mrb[0].mxu0
      %v2034 = vadd.f32 %v1833, %v2033
      %v2035 = vpop.f32.mrb[0].mxu0
      %2036 = vmatprep.mubr.bf16.mxu0 0
      %2037 = vmatmul.mubr.bf16.gmra.mrb[0].mxu0 %v1921
      %v2038 = vpop.f32.mrb[0].mxu0
      %v2039 = vadd.f32 %v1838, %v2038
      %v2040 = vpop.f32.mrb[0].mxu0
      %v2041 = vpop.f32.mrb[0].mxu0
      %v2042 = vadd.f32 %v1841, %v2041
      %v2043 = vpop.f32.mrb[0].mxu0
      %2044 = vmatprep.mubr.bf16.mxu0 0
      %2045 = vmatmul.mubr.bf16.gmra.mrb[0].mxu0 %v1923
      %v2046 = vpop.f32.mrb[0].mxu0
      %v2047 = vadd.f32 %v1846, %v2046
      %v2048 = vpop.f32.mrb[0].mxu0
      %v2049 = vpop.f32.mrb[0].mxu0
      %v2050 = vadd.f32 %v1849, %v2049
      %v2051 = vpop.f32.mrb[0].mxu0
      %2052 = vmatprep.mubr.bf16.mxu0 0
      %2053 = vmatmul.mubr.bf16.gmra.mrb[0].mxu0 %v1925
      %v2054 = vpop.f32.mrb[0].mxu0
      %v2055 = vadd.f32 %v1854, %v2054
      %v2056 = vpop.f32.mrb[0].mxu0
      %v2057 = vpop.f32.mrb[0].mxu0
      %v2058 = vadd.f32 %v1857, %v2057
      %v2059 = vpop.f32.mrb[0].mxu0
      %2060 = vmatprep.mubr.bf16.mxu0 0
      %2061 = vmatmul.mubr.bf16.gmra.mrb[0].mxu0 %v1927
      %v2062 = vpop.f32.mrb[0].mxu0
      %v2063 = vadd.f32 %v1862, %v2062
      %v2064 = vpop.f32.mrb[0].mxu0
      %v2065 = vpop.f32.mrb[0].mxu0
      %v2066 = vadd.f32 %v1865, %v2065
      %v2067 = vpop.f32.mrb[0].mxu0
      %2068 = vmatprep.mubr.bf16.mxu0 0
      %2069 = vmatmul.mubr.bf16.gmra.mrb[0].mxu0 %v1929
      %v2070 = vpop.f32.mrb[0].mxu0
      %v2071 = vadd.f32 %v1870, %v2070
      %v2072 = vpop.f32.mrb[0].mxu0
      %v2073 = vpop.f32.mrb[0].mxu0
      %v2074 = vadd.f32 %v1873, %v2073
      %v2075 = vpop.f32.mrb[0].mxu0
      %2076 = vmatprep.mubr.bf16.mxu0 0
      %2077 = vmatmul.mubr.bf16.gmra.mrb[0].mxu0 %v1931
      %v2078 = vpop.f32.mrb[0].mxu0
      %v2079 = vadd.f32 %v1878, %v2078
      %v2080 = vpop.f32.mrb[0].mxu0
      %v2081 = vpop.f32.mrb[0].mxu0
      %v2082 = vadd.f32 %v1881, %v2081
      %v2083 = vpop.f32.mrb[0].mxu0
      %2084 = vmatprep.mubr.bf16.mxu0 0
      %2085 = vmatmul.mubr.bf16.gmra.mrb[0].mxu0 %v1933
      %v2086 = vpop.f32.mrb[0].mxu0
      %v2087 = vadd.f32 %v1886, %v2086
      %v2088 = vpop.f32.mrb[0].mxu0
      %v2089 = vpop.f32.mrb[0].mxu0
      %v2090 = vadd.f32 %v1889, %v2089
      %v2091 = vpop.f32.mrb[0].mxu0
      %2092 = vmatprep.mubr.bf16.mxu0 0
      %2093 = vmatmul.mubr.bf16.gmra.mrb[0].mxu0 %v1935
      %v2094 = vpop.f32.mrb[0].mxu0
      %v2095 = vadd.f32 %v1894, %v2094
      %v2096 = vpop.f32.mrb[0].mxu0
      %v2097 = vpop.f32.mrb[0].mxu0
      %v2098 = vadd.f32 %v1897, %v2097
      %v2099 = vpop.f32.mrb[0].mxu0
      %2100 = vdwg.mxu0
      %v2101 = vld [vmem:[#allocation2] sm:$0xe]
      %v2102 = vld [vmem:[#allocation2 + $0xc] sm:$0xe]
      %v2103 = vld [vmem:[#allocation2 + $0x18] sm:$0xe]
      %v2104 = vld [vmem:[#allocation2 + $0x24] sm:$0xe]
      %v2105 = vld [vmem:[#allocation2 + $0x30] sm:$0xe]
      %v2106 = vld [vmem:[#allocation2 + $0x3c] sm:$0xe]
      %v2107 = vld [vmem:[#allocation2 + $0x48] sm:$0xe]
      %v2108 = vld [vmem:[#allocation2 + $0x54] sm:$0xe]
      %v2109 = vld [vmem:[#allocation2 + $0x60] sm:$0xe]
      %v2110 = vld [vmem:[#allocation2 + $0x6c] sm:$0xe]
      %v2111 = vld [vmem:[#allocation2 + $0x78] sm:$0xe]
      %v2112 = vld [vmem:[#allocation2 + $0x84] sm:$0xe]
      %v2113 = vld [vmem:[#allocation2 + $0x90] sm:$0xe]
      %v2114 = vld [vmem:[#allocation2 + $0x9c] sm:$0xe]
      %v2115 = vld [vmem:[#allocation2 + $0xa8] sm:$0xe]
      %v2116 = vld [vmem:[#allocation2 + $0xb4] sm:$0xe]
      %v2117 = vld [vmem:[#allocation2 + $0xc0] sm:$0xe]
      %v2118 = vld [vmem:[#allocation2 + $0xcc] sm:$0xe]
      %v2135 = vunpack.c.l.b16 %v2101
      %v2136 = vunpack.c.l.b16 %v2102
      %v2137 = vunpack.c.l.b16 %v2103
      %v2138 = vunpack.c.l.b16 %v2104
      %v2139 = vunpack.c.l.b16 %v2105
      %v2140 = vunpack.c.l.b16 %v2106
      %v2141 = vunpack.c.l.b16 %v2107
      %v2142 = vunpack.c.l.b16 %v2108
      %v2143 = vunpack.c.l.b16 %v2109
      %v2144 = vunpack.c.l.b16 %v2110
      %v2145 = vunpack.c.l.b16 %v2111
      %v2146 = vunpack.c.l.b16 %v2112
      %v2147 = vunpack.c.l.b16 %v2113
      %v2148 = vunpack.c.l.b16 %v2114
      %v2149 = vunpack.c.l.b16 %v2115
      %v2150 = vunpack.c.l.b16 %v2116
      %v2151 = vpack.c.b16 %v1096, %v2135
      %v2152 = vpack.c.b16 %v1098, %v2136
      %v2153 = vpack.c.b16 %v1100, %v2137
      %v2154 = vpack.c.b16 %v1102, %v2138
      %v2155 = vpack.c.b16 %v1104, %v2139
      %v2156 = vpack.c.b16 %v1106, %v2140
      %v2157 = vpack.c.b16 %v1108, %v2141
      %v2158 = vpack.c.b16 %v1110, %v2142
      %v2159 = vpack.c.b16 %v1112, %v2143
      %v2160 = vpack.c.b16 %v1114, %v2144
      %v2161 = vpack.c.b16 %v1116, %v2145
      %v2162 = vpack.c.b16 %v1118, %v2146
      %v2163 = vpack.c.b16 %v1120, %v2147
      %v2164 = vpack.c.b16 %v1122, %v2148
      %v2165 = vpack.c.b16 %v1124, %v2149
      %v2166 = vpack.c.b16 %v1126, %v2150
      %v2168 = vunpack.c.l.b16 %v2117
      %v2169 = vpack.c.b16 %v1146, %v2168
      %2170 = vrot.lane.b32.xlu0 %v2152, 4
      %v2171 = vpop.permute.xlu0 %2170
      %2172 = vrot.lane.b32.xlu0 %v2153, 4
      %v2173 = vpop.permute.xlu0 %2172
      %2174 = vrot.lane.b32.xlu0 %v2154, 4
      %v2175 = vpop.permute.xlu0 %2174
      %2176 = vrot.lane.b32.xlu0 %v2155, 4
      %v2177 = vpop.permute.xlu0 %2176
      %2178 = vrot.lane.b32.xlu0 %v2156, 4
      %v2179 = vpop.permute.xlu0 %2178
      %2180 = vrot.lane.b32.xlu0 %v2157, 4
      %v2181 = vpop.permute.xlu0 %2180
      %2182 = vrot.lane.b32.xlu0 %v2158, 4
      %v2183 = vpop.permute.xlu0 %2182
      %2184 = vrot.lane.b32.xlu0 %v2159, 4
      %v2185 = vpop.permute.xlu0 %2184
      %2186 = vrot.lane.b32.xlu0 %v2160, 4
      %v2187 = vpop.permute.xlu0 %2186
      %2188 = vrot.lane.b32.xlu0 %v2161, 4
      %v2189 = vpop.permute.xlu0 %2188
      %2190 = vrot.lane.b32.xlu0 %v2162, 4
      %v2191 = vpop.permute.xlu0 %2190
      %2192 = vrot.lane.b32.xlu0 %v2163, 4
      %v2193 = vpop.permute.xlu0 %2192
      %2194 = vrot.lane.b32.xlu0 %v2164, 4
      %v2195 = vpop.permute.xlu0 %2194
      %2196 = vrot.lane.b32.xlu0 %v2165, 4
      %v2197 = vpop.permute.xlu0 %2196
      %2198 = vrot.lane.b32.xlu0 %v2166, 4
      %v2199 = vpop.permute.xlu0 %2198
      %2200 = vrot.lane.b32.xlu0 %v2169, 4
      %v2201 = vpop.permute.xlu0 %2200
      %v2203 = vunpack.c.l.b16 %v2118
      %v2204 = vpack.c.b16 %v1183, %v2203
      %2205 = vrot.lane.b32.xlu0 %v2153, 8
      %v2206 = vpop.permute.xlu0 %2205
      %2207 = vrot.lane.b32.xlu0 %v2154, 8
      %v2208 = vpop.permute.xlu0 %2207
      %2209 = vrot.lane.b32.xlu0 %v2155, 8
      %v2210 = vpop.permute.xlu0 %2209
      %2211 = vrot.lane.b32.xlu0 %v2156, 8
      %v2212 = vpop.permute.xlu0 %2211
      %2213 = vrot.lane.b32.xlu0 %v2157, 8
      %v2214 = vpop.permute.xlu0 %2213
      %2215 = vrot.lane.b32.xlu0 %v2158, 8
      %v2216 = vpop.permute.xlu0 %2215
      %2217 = vrot.lane.b32.xlu0 %v2159, 8
      %v2218 = vpop.permute.xlu0 %2217
      %2219 = vrot.lane.b32.xlu0 %v2160, 8
      %v2220 = vpop.permute.xlu0 %2219
      %2221 = vrot.lane.b32.xlu0 %v2161, 8
      %v2222 = vpop.permute.xlu0 %2221
      %2223 = vrot.lane.b32.xlu0 %v2162, 8
      %v2224 = vpop.permute.xlu0 %2223
      %2225 = vrot.lane.b32.xlu0 %v2163, 8
      %v2226 = vpop.permute.xlu0 %2225
      %2227 = vrot.lane.b32.xlu0 %v2164, 8
      %v2228 = vpop.permute.xlu0 %2227
      %2229 = vrot.lane.b32.xlu0 %v2165, 8
      %v2230 = vpop.permute.xlu0 %2229
      %2231 = vrot.lane.b32.xlu0 %v2166, 8
      %v2232 = vpop.permute.xlu0 %2231
      %2233 = vrot.lane.b32.xlu0 %v2169, 8
      %v2234 = vpop.permute.xlu0 %2233
      %2235 = vrot.lane.b32.xlu0 %v2204, 8
      %v2236 = vpop.permute.xlu0 %2235
      %v2239 = vsel %vm1217, %v2151, %v2171
      %v2242 = vsel %vm1217, %v2152, %v2173
      %v2245 = vsel %vm1217, %v2153, %v2175
      %v2248 = vsel %vm1217, %v2154, %v2177
      %v2251 = vsel %vm1217, %v2155, %v2179
      %v2254 = vsel %vm1217, %v2156, %v2181
      %v2257 = vsel %vm1217, %v2157, %v2183
      %v2260 = vsel %vm1217, %v2158, %v2185
      %v2263 = vsel %vm1217, %v2159, %v2187
      %v2266 = vsel %vm1217, %v2160, %v2189
      %v2269 = vsel %vm1217, %v2161, %v2191
      %v2272 = vsel %vm1217, %v2162, %v2193
      %v2275 = vsel %vm1217, %v2163, %v2195
      %v2278 = vsel %vm1217, %v2164, %v2197
      %v2281 = vsel %vm1217, %v2165, %v2199
      %v2284 = vsel %vm1217, %v2166, %v2201
      %v2286 = vsel %vm1266, %v2239, %v2206
      %v2288 = vsel %vm1266, %v2242, %v2208
      %v2290 = vsel %vm1266, %v2245, %v2210
      %v2292 = vsel %vm1266, %v2248, %v2212
      %v2294 = vsel %vm1266, %v2251, %v2214
      %v2296 = vsel %vm1266, %v2254, %v2216
      %v2298 = vsel %vm1266, %v2257, %v2218
      %v2300 = vsel %vm1266, %v2260, %v2220
      %v2302 = vsel %vm1266, %v2263, %v2222
      %v2304 = vsel %vm1266, %v2266, %v2224
      %v2306 = vsel %vm1266, %v2269, %v2226
      %v2308 = vsel %vm1266, %v2272, %v2228
      %v2310 = vsel %vm1266, %v2275, %v2230
      %v2312 = vsel %vm1266, %v2278, %v2232
      %v2314 = vsel %vm1266, %v2281, %v2234
      %v2316 = vsel %vm1266, %v2284, %v2236
      %vm2349 = vcmask 1046528
      %v2350 = vrot.slane %v2286, 1
      %v2351 = vrot.slane %v1486, 1
      %v2352 = vsel %vm2349, %v2350, %v2351
      %v2353 = vrot.slane %v2288, 1
      %v2354 = vrot.slane %v1488, 1
      %v2355 = vsel %vm2349, %v2353, %v2354
      %v2356 = vrot.slane %v2290, 1
      %v2357 = vrot.slane %v1490, 1
      %v2358 = vsel %vm2349, %v2356, %v2357
      %v2359 = vrot.slane %v2292, 1
      %v2360 = vrot.slane %v1492, 1
      %v2361 = vsel %vm2349, %v2359, %v2360
      %v2362 = vrot.slane %v2294, 1
      %v2363 = vrot.slane %v1494, 1
      %v2364 = vsel %vm2349, %v2362, %v2363
      %v2365 = vrot.slane %v2296, 1
      %v2366 = vrot.slane %v1496, 1
      %v2367 = vsel %vm2349, %v2365, %v2366
      %v2368 = vrot.slane %v2298, 1
      %v2369 = vrot.slane %v1498, 1
      %v2370 = vsel %vm2349, %v2368, %v2369
      %v2371 = vrot.slane %v2300, 1
      %v2372 = vrot.slane %v1500, 1
      %v2373 = vsel %vm2349, %v2371, %v2372
      %v2374 = vrot.slane %v2302, 1
      %v2375 = vrot.slane %v1502, 1
      %v2376 = vsel %vm2349, %v2374, %v2375
      %v2377 = vrot.slane %v2304, 1
      %v2378 = vrot.slane %v1504, 1
      %v2379 = vsel %vm2349, %v2377, %v2378
      %v2380 = vrot.slane %v2306, 1
      %v2381 = vrot.slane %v1506, 1
      %v2382 = vsel %vm2349, %v2380, %v2381
      %v2383 = vrot.slane %v2308, 1
      %v2384 = vrot.slane %v1508, 1
      %v2385 = vsel %vm2349, %v2383, %v2384
      %v2386 = vrot.slane %v2310, 1
      %v2387 = vrot.slane %v1510, 1
      %v2388 = vsel %vm2349, %v2386, %v2387
      %v2389 = vrot.slane %v2312, 1
      %v2390 = vrot.slane %v1512, 1
      %v2391 = vsel %vm2349, %v2389, %v2390
      %v2392 = vrot.slane %v2314, 1
      %v2393 = vrot.slane %v1514, 1
      %v2394 = vsel %vm2349, %v2392, %v2393
      %v2395 = vrot.slane %v2316, 1
      %v2396 = vrot.slane %v1516, 1
      %v2397 = vsel %vm2349, %v2395, %v2396
      %s2398 = scalar_lea.vmem %s1, 16
      %v2399 = vld [vmem:[%s2398] sm:$0xf]
      %v2400 = vld [vmem:[%s2398 + $0x4] sm:$0x3]
      %v2403 = vunpack.c.l.b16 %v2399
      %v2404 = vunpack.c.l.b16 %v2400
      %v2405 = vpack.c.b16 %v2404, %v2403
      %v2407 = vsel %vm1686, %v2352, 0
      %v2410 = vsel %vm1686, %v2355, 0
      %v2413 = vsel %vm1686, %v2358, 0
      %v2416 = vsel %vm1686, %v2361, 0
      %v2419 = vsel %vm1686, %v2364, 0
      %v2422 = vsel %vm1686, %v2367, 0
      %v2425 = vsel %vm1686, %v2370, 0
      %v2428 = vsel %vm1686, %v2373, 0
      %v2431 = vsel %vm1686, %v2376, 0
      %v2434 = vsel %vm1686, %v2379, 0
      %v2437 = vsel %vm1686, %v2382, 0
      %v2440 = vsel %vm1686, %v2385, 0
      %v2443 = vsel %vm1686, %v2388, 0
      %v2446 = vsel %vm1686, %v2391, 0
      %v2449 = vsel %vm1686, %v2394, 0
      %v2452 = vsel %vm1686, %v2397, 0
      %v2455 = vsel %vm1735, %v2405, 0
      %2457 = vmatprep.subr.bf16.mxu0 0
      %2458 = vmatpush1.bf16.msra.mxu0 %v2455
      %2459 = vmatprep.subr.bf16.mxu0 0
      %2460 = vmatpush1.bf16.msra.mxu0 0
      %2461 = vmatprep.subr.bf16.mxu0 0
      %2462 = vmatpush1.bf16.msra.mxu0 0
      %2463 = vmatprep.subr.bf16.mxu0 0
      %2464 = vmatpush1.bf16.msra.mxu0 0
      %2465 = vmatprep.subr.bf16.mxu0 0
      %2466 = vmatpush1.bf16.msra.mxu0 0
      %2467 = vmatprep.subr.bf16.mxu0 0
      %2468 = vmatpush1.bf16.msra.mxu0 0
      %2469 = vmatprep.subr.bf16.mxu0 0
      %2470 = vmatpush1.bf16.msra.mxu0 0
      %2471 = vmatprep.subr.bf16.mxu0 0
      %2472 = vmatpush1.bf16.msra.mxu0 0
      %2473 = vmatprep.subr.bf16.mxu0 0
      %2474 = vmatpush1.bf16.msra.mxu0 0
      %2475 = vmatprep.subr.bf16.mxu0 0
      %2476 = vmatpush1.bf16.msra.mxu0 0
      %2477 = vmatprep.subr.bf16.mxu0 0
      %2478 = vmatpush1.bf16.msra.mxu0 0
      %2479 = vmatprep.subr.bf16.mxu0 0
      %2480 = vmatpush1.bf16.msra.mxu0 0
      %2481 = vmatprep.subr.bf16.mxu0 0
      %2482 = vmatpush1.bf16.msra.mxu0 0
      %2483 = vmatprep.subr.bf16.mxu0 0
      %2484 = vmatpush1.bf16.msra.mxu0 0
      %2485 = vmatprep.subr.bf16.mxu0 0
      %2486 = vmatpush1.bf16.msra.mxu0 0
      %2487 = vmatprep.subr.bf16.mxu0 0
      %2488 = vmatpush1.bf16.msra.mxu0 0
      %2489 = vmatprep.mubr.bf16.mxu0 0
      %2490 = vmatmul.mubr.bf16.gmra.mrb[0].mxu0 %v2407
      %v2491 = vpop.f32.mrb[0].mxu0
      %v2492 = vadd.f32 0.0, %v2491
      %v2493 = vpop.f32.mrb[0].mxu0
      %v2494 = vpop.f32.mrb[0].mxu0
      %v2495 = vadd.f32 0.0, %v2494
      %v2496 = vpop.f32.mrb[0].mxu0
      %2497 = vmatprep.mubr.bf16.mxu0 0
      %2498 = vmatmul.mubr.bf16.gmra.mrb[0].mxu0 %v2410
      %v2499 = vpop.f32.mrb[0].mxu0
      %v2500 = vadd.f32 0.0, %v2499
      %v2501 = vpop.f32.mrb[0].mxu0
      %v2502 = vpop.f32.mrb[0].mxu0
      %v2503 = vadd.f32 0.0, %v2502
      %v2504 = vpop.f32.mrb[0].mxu0
      %2505 = vmatprep.mubr.bf16.mxu0 0
      %2506 = vmatmul.mubr.bf16.gmra.mrb[0].mxu0 %v2413
      %v2507 = vpop.f32.mrb[0].mxu0
      %v2508 = vadd.f32 0.0, %v2507
      %v2509 = vpop.f32.mrb[0].mxu0
      %v2510 = vpop.f32.mrb[0].mxu0
      %v2511 = vadd.f32 0.0, %v2510
      %v2512 = vpop.f32.mrb[0].mxu0
      %2513 = vmatprep.mubr.bf16.mxu0 0
      %2514 = vmatmul.mubr.bf16.gmra.mrb[0].mxu0 %v2416
      %v2515 = vpop.f32.mrb[0].mxu0
      %v2516 = vadd.f32 0.0, %v2515
      %v2517 = vpop.f32.mrb[0].mxu0
      %v2518 = vpop.f32.mrb[0].mxu0
      %v2519 = vadd.f32 0.0, %v2518
      %v2520 = vpop.f32.mrb[0].mxu0
      %2521 = vmatprep.mubr.bf16.mxu0 0
      %2522 = vmatmul.mubr.bf16.gmra.mrb[0].mxu0 %v2419
      %v2523 = vpop.f32.mrb[0].mxu0
      %v2524 = vadd.f32 0.0, %v2523
      %v2525 = vpop.f32.mrb[0].mxu0
      %v2526 = vpop.f32.mrb[0].mxu0
      %v2527 = vadd.f32 0.0, %v2526
      %v2528 = vpop.f32.mrb[0].mxu0
      %2529 = vmatprep.mubr.bf16.mxu0 0
      %2530 = vmatmul.mubr.bf16.gmra.mrb[0].mxu0 %v2422
      %v2531 = vpop.f32.mrb[0].mxu0
      %v2532 = vadd.f32 0.0, %v2531
      %v2533 = vpop.f32.mrb[0].mxu0
      %v2534 = vpop.f32.mrb[0].mxu0
      %v2535 = vadd.f32 0.0, %v2534
      %v2536 = vpop.f32.mrb[0].mxu0
      %2537 = vmatprep.mubr.bf16.mxu0 0
      %2538 = vmatmul.mubr.bf16.gmra.mrb[0].mxu0 %v2425
      %v2539 = vpop.f32.mrb[0].mxu0
      %v2540 = vadd.f32 0.0, %v2539
      %v2541 = vpop.f32.mrb[0].mxu0
      %v2542 = vpop.f32.mrb[0].mxu0
      %v2543 = vadd.f32 0.0, %v2542
      %v2544 = vpop.f32.mrb[0].mxu0
      %2545 = vmatprep.mubr.bf16.mxu0 0
      %2546 = vmatmul.mubr.bf16.gmra.mrb[0].mxu0 %v2428
      %v2547 = vpop.f32.mrb[0].mxu0
      %v2548 = vadd.f32 0.0, %v2547
      %v2549 = vpop.f32.mrb[0].mxu0
      %v2550 = vpop.f32.mrb[0].mxu0
      %v2551 = vadd.f32 0.0, %v2550
      %v2552 = vpop.f32.mrb[0].mxu0
      %2553 = vmatprep.mubr.bf16.mxu0 0
      %2554 = vmatmul.mubr.bf16.gmra.mrb[0].mxu0 %v2431
      %v2555 = vpop.f32.mrb[0].mxu0
      %v2556 = vadd.f32 0.0, %v2555
      %v2557 = vpop.f32.mrb[0].mxu0
      %v2558 = vpop.f32.mrb[0].mxu0
      %v2559 = vadd.f32 0.0, %v2558
      %v2560 = vpop.f32.mrb[0].mxu0
      %2561 = vmatprep.mubr.bf16.mxu0 0
      %2562 = vmatmul.mubr.bf16.gmra.mrb[0].mxu0 %v2434
      %v2563 = vpop.f32.mrb[0].mxu0
      %v2564 = vadd.f32 0.0, %v2563
      %v2565 = vpop.f32.mrb[0].mxu0
      %v2566 = vpop.f32.mrb[0].mxu0
      %v2567 = vadd.f32 0.0, %v2566
      %v2568 = vpop.f32.mrb[0].mxu0
      %2569 = vmatprep.mubr.bf16.mxu0 0
      %2570 = vmatmul.mubr.bf16.gmra.mrb[0].mxu0 %v2437
      %v2571 = vpop.f32.mrb[0].mxu0
      %v2572 = vadd.f32 0.0, %v2571
      %v2573 = vpop.f32.mrb[0].mxu0
      %v2574 = vpop.f32.mrb[0].mxu0
      %v2575 = vadd.f32 0.0, %v2574
      %v2576 = vpop.f32.mrb[0].mxu0
      %2577 = vmatprep.mubr.bf16.mxu0 0
      %2578 = vmatmul.mubr.bf16.gmra.mrb[0].mxu0 %v2440
      %v2579 = vpop.f32.mrb[0].mxu0
      %v2580 = vadd.f32 0.0, %v2579
      %v2581 = vpop.f32.mrb[0].mxu0
      %v2582 = vpop.f32.mrb[0].mxu0
      %v2583 = vadd.f32 0.0, %v2582
      %v2584 = vpop.f32.mrb[0].mxu0
      %2585 = vmatprep.mubr.bf16.mxu0 0
      %2586 = vmatmul.mubr.bf16.gmra.mrb[0].mxu0 %v2443
      %v2587 = vpop.f32.mrb[0].mxu0
      %v2588 = vadd.f32 0.0, %v2587
      %v2589 = vpop.f32.mrb[0].mxu0
      %v2590 = vpop.f32.mrb[0].mxu0
      %v2591 = vadd.f32 0.0, %v2590
      %v2592 = vpop.f32.mrb[0].mxu0
      %2593 = vmatprep.mubr.bf16.mxu0 0
      %2594 = vmatmul.mubr.bf16.gmra.mrb[0].mxu0 %v2446
      %v2595 = vpop.f32.mrb[0].mxu0
      %v2596 = vadd.f32 0.0, %v2595
      %v2597 = vpop.f32.mrb[0].mxu0
      %v2598 = vpop.f32.mrb[0].mxu0
      %v2599 = vadd.f32 0.0, %v2598
      %v2600 = vpop.f32.mrb[0].mxu0
      %2601 = vmatprep.mubr.bf16.mxu0 0
      %2602 = vmatmul.mubr.bf16.gmra.mrb[0].mxu0 %v2449
      %v2603 = vpop.f32.mrb[0].mxu0
      %v2604 = vadd.f32 0.0, %v2603
      %v2605 = vpop.f32.mrb[0].mxu0
      %v2606 = vpop.f32.mrb[0].mxu0
      %v2607 = vadd.f32 0.0, %v2606
      %v2608 = vpop.f32.mrb[0].mxu0
      %2609 = vmatprep.mubr.bf16.mxu0 0
      %2610 = vmatmul.mubr.bf16.gmra.mrb[0].mxu0 %v2452
      %v2611 = vpop.f32.mrb[0].mxu0
      %v2612 = vadd.f32 0.0, %v2611
      %v2613 = vpop.f32.mrb[0].mxu0
      %v2614 = vpop.f32.mrb[0].mxu0
      %v2615 = vadd.f32 0.0, %v2614
      %v2616 = vpop.f32.mrb[0].mxu0
      %2617 = vdwg.mxu0
      %v2618 = vadd.f32 %v1975, %v2492
      %v2619 = vadd.f32 %v1978, %v2495
      %v2620 = vadd.f32 %v1983, %v2500
      %v2621 = vadd.f32 %v1986, %v2503
      %v2622 = vadd.f32 %v1991, %v2508
      %v2623 = vadd.f32 %v1994, %v2511
      %v2624 = vadd.f32 %v1999, %v2516
      %v2625 = vadd.f32 %v2002, %v2519
      %v2626 = vadd.f32 %v2007, %v2524
      %v2627 = vadd.f32 %v2010, %v2527
      %v2628 = vadd.f32 %v2015, %v2532
      %v2629 = vadd.f32 %v2018, %v2535
      %v2630 = vadd.f32 %v2023, %v2540
      %v2631 = vadd.f32 %v2026, %v2543
      %v2632 = vadd.f32 %v2031, %v2548
      %v2633 = vadd.f32 %v2034, %v2551
      %v2634 = vadd.f32 %v2039, %v2556
      %v2635 = vadd.f32 %v2042, %v2559
      %v2636 = vadd.f32 %v2047, %v2564
      %v2637 = vadd.f32 %v2050, %v2567
      %v2638 = vadd.f32 %v2055, %v2572
      %v2639 = vadd.f32 %v2058, %v2575
      %v2640 = vadd.f32 %v2063, %v2580
      %v2641 = vadd.f32 %v2066, %v2583
      %v2642 = vadd.f32 %v2071, %v2588
      %v2643 = vadd.f32 %v2074, %v2591
      %v2644 = vadd.f32 %v2079, %v2596
      %v2645 = vadd.f32 %v2082, %v2599
      %v2646 = vadd.f32 %v2087, %v2604
      %v2647 = vadd.f32 %v2090, %v2607
      %v2648 = vadd.f32 %v2095, %v2612
      %v2649 = vadd.f32 %v2098, %v2615
      %v2650 = vld [vmem:[%s2] sm:$0x1]
      %v2652 = vlaneseq
      %v2653 = vshrl.u32 %v2652, 7
      %v2654 = vsub.s32 0, %v2653
      %v2655 = vrot.slane %v2650, %v2654
      %v2657 = vadd.f32 %v2618, %v2655
      %v2658 = vadd.f32 %v2619, %v2655
      %v2659 = vadd.f32 %v2620, %v2655
      %v2660 = vadd.f32 %v2621, %v2655
      %v2661 = vadd.f32 %v2622, %v2655
      %v2662 = vadd.f32 %v2623, %v2655
      %v2663 = vadd.f32 %v2624, %v2655
      %v2664 = vadd.f32 %v2625, %v2655
      %v2665 = vadd.f32 %v2626, %v2655
      %v2666 = vadd.f32 %v2627, %v2655
      %v2667 = vadd.f32 %v2628, %v2655
      %v2668 = vadd.f32 %v2629, %v2655
      %v2669 = vadd.f32 %v2630, %v2655
      %v2670 = vadd.f32 %v2631, %v2655
      %v2671 = vadd.f32 %v2632, %v2655
      %v2672 = vadd.f32 %v2633, %v2655
      %v2673 = vadd.f32 %v2634, %v2655
      %v2674 = vadd.f32 %v2635, %v2655
      %v2675 = vadd.f32 %v2636, %v2655
      %v2676 = vadd.f32 %v2637, %v2655
      %v2677 = vadd.f32 %v2638, %v2655
      %v2678 = vadd.f32 %v2639, %v2655
      %v2679 = vadd.f32 %v2640, %v2655
      %v2680 = vadd.f32 %v2641, %v2655
      %v2681 = vadd.f32 %v2642, %v2655
      %v2682 = vadd.f32 %v2643, %v2655
      %v2683 = vadd.f32 %v2644, %v2655
      %v2684 = vadd.f32 %v2645, %v2655
      %v2685 = vadd.f32 %v2646, %v2655
      %v2686 = vadd.f32 %v2647, %v2655
      %v2687 = vadd.f32 %v2648, %v2655
      %v2688 = vadd.f32 %v2649, %v2655
      %v2689 = vmax.f32 %v2657, 0.0
      %v2690 = vmax.f32 %v2658, 0.0
      %v2691 = vmax.f32 %v2659, 0.0
      %v2692 = vmax.f32 %v2660, 0.0
      %v2693 = vmax.f32 %v2661, 0.0
      %v2694 = vmax.f32 %v2662, 0.0
      %v2695 = vmax.f32 %v2663, 0.0
      %v2696 = vmax.f32 %v2664, 0.0
      %v2697 = vmax.f32 %v2665, 0.0
      %v2698 = vmax.f32 %v2666, 0.0
      %v2699 = vmax.f32 %v2667, 0.0
      %v2700 = vmax.f32 %v2668, 0.0
      %v2701 = vmax.f32 %v2669, 0.0
      %v2702 = vmax.f32 %v2670, 0.0
      %v2703 = vmax.f32 %v2671, 0.0
      %v2704 = vmax.f32 %v2672, 0.0
      %v2705 = vmax.f32 %v2673, 0.0
      %v2706 = vmax.f32 %v2674, 0.0
      %v2707 = vmax.f32 %v2675, 0.0
      %v2708 = vmax.f32 %v2676, 0.0
      %v2709 = vmax.f32 %v2677, 0.0
      %v2710 = vmax.f32 %v2678, 0.0
      %v2711 = vmax.f32 %v2679, 0.0
      %v2712 = vmax.f32 %v2680, 0.0
      %v2713 = vmax.f32 %v2681, 0.0
      %v2714 = vmax.f32 %v2682, 0.0
      %v2715 = vmax.f32 %v2683, 0.0
      %v2716 = vmax.f32 %v2684, 0.0
      %v2717 = vmax.f32 %v2685, 0.0
      %v2718 = vmax.f32 %v2686, 0.0
      %v2719 = vmax.f32 %v2687, 0.0
      %v2720 = vmax.f32 %v2688, 0.0
      %v2721 = vpack.c.bf16 %v2690, %v2689
      %v2722 = vpack.c.bf16 %v2692, %v2691
      %v2723 = vpack.c.bf16 %v2694, %v2693
      %v2724 = vpack.c.bf16 %v2696, %v2695
      %v2725 = vpack.c.bf16 %v2698, %v2697
      %v2726 = vpack.c.bf16 %v2700, %v2699
      %v2727 = vpack.c.bf16 %v2702, %v2701
      %v2728 = vpack.c.bf16 %v2704, %v2703
      %v2729 = vpack.c.bf16 %v2706, %v2705
      %v2730 = vpack.c.bf16 %v2708, %v2707
      %v2731 = vpack.c.bf16 %v2710, %v2709
      %v2732 = vpack.c.bf16 %v2712, %v2711
      %v2733 = vpack.c.bf16 %v2714, %v2713
      %v2734 = vpack.c.bf16 %v2716, %v2715
      %v2735 = vpack.c.bf16 %v2718, %v2717
      %v2736 = vpack.c.bf16 %v2720, %v2719
      %v2753 = vunpack.c.l.b16 %v2721
      %v2754 = vunpack.c.h.b16 %v2721
      %v2755 = vunpack.c.l.b16 %v2722
      %v2756 = vunpack.c.h.b16 %v2722
      %v2757 = vunpack.c.l.b16 %v2723
      %v2758 = vunpack.c.h.b16 %v2723
      %v2759 = vunpack.c.l.b16 %v2724
      %v2760 = vunpack.c.h.b16 %v2724
      %v2761 = vunpack.c.l.b16 %v2725
      %v2762 = vunpack.c.h.b16 %v2725
      %v2763 = vunpack.c.l.b16 %v2726
      %v2764 = vunpack.c.h.b16 %v2726
      %v2765 = vunpack.c.l.b16 %v2727
      %v2766 = vunpack.c.h.b16 %v2727
      %v2767 = vunpack.c.l.b16 %v2728
      %v2768 = vunpack.c.h.b16 %v2728
      %v2769 = vunpack.c.l.b16 %v2729
      %v2770 = vunpack.c.h.b16 %v2729
      %v2771 = vunpack.c.l.b16 %v2730
      %v2772 = vunpack.c.h.b16 %v2730
      %v2773 = vunpack.c.l.b16 %v2731
      %v2774 = vunpack.c.h.b16 %v2731
      %v2775 = vunpack.c.l.b16 %v2732
      %v2776 = vunpack.c.h.b16 %v2732
      %v2777 = vunpack.c.l.b16 %v2733
      %v2778 = vunpack.c.h.b16 %v2733
      %v2779 = vunpack.c.l.b16 %v2734
      %v2780 = vunpack.c.h.b16 %v2734
      %v2781 = vunpack.c.l.b16 %v2735
      %v2782 = vunpack.c.h.b16 %v2735
      %v2783 = vunpack.c.l.b16 %v2736
      %v2784 = vunpack.c.h.b16 %v2736
      %v2785 = vpack.c.b16 %v2753, %v2753
      %v2786 = vpack.c.b16 %v2754, %v2754
      %v2787 = vpack.c.b16 %v2755, %v2755
      %v2788 = vpack.c.b16 %v2756, %v2756
      %v2789 = vpack.c.b16 %v2757, %v2757
      %v2790 = vpack.c.b16 %v2758, %v2758
      %v2791 = vpack.c.b16 %v2759, %v2759
      %v2792 = vpack.c.b16 %v2760, %v2760
      %v2793 = vpack.c.b16 %v2761, %v2761
      %v2794 = vpack.c.b16 %v2762, %v2762
      %v2795 = vpack.c.b16 %v2763, %v2763
      %v2796 = vpack.c.b16 %v2764, %v2764
      %v2797 = vpack.c.b16 %v2765, %v2765
      %v2798 = vpack.c.b16 %v2766, %v2766
      %v2799 = vpack.c.b16 %v2767, %v2767
      %v2800 = vpack.c.b16 %v2768, %v2768
      %v2801 = vpack.c.b16 %v2769, %v2769
      %v2802 = vpack.c.b16 %v2770, %v2770
      %v2803 = vpack.c.b16 %v2771, %v2771
      %v2804 = vpack.c.b16 %v2772, %v2772
      %v2805 = vpack.c.b16 %v2773, %v2773
      %v2806 = vpack.c.b16 %v2774, %v2774
      %v2807 = vpack.c.b16 %v2775, %v2775
      %v2808 = vpack.c.b16 %v2776, %v2776
      %v2809 = vpack.c.b16 %v2777, %v2777
      %v2810 = vpack.c.b16 %v2778, %v2778
      %v2811 = vpack.c.b16 %v2779, %v2779
      %v2812 = vpack.c.b16 %v2780, %v2780
      %v2813 = vpack.c.b16 %v2781, %v2781
      %v2814 = vpack.c.b16 %v2782, %v2782
      %v2815 = vpack.c.b16 %v2783, %v2783
      %v2816 = vpack.c.b16 %v2784, %v2784
      %v2818 = vshrl.u32 %v2785, 16
      %v2820 = vrot.slane %v2818, 7
      %v2821 = vshll.u32 %v2785, 16
      %v2823 = vor.u32 %v2820, %v2821
      %v2824 = vrot.slane %v2820, 4
      %v2826 = vshrl.u32 %v2786, 16
      %v2828 = vrot.slane %v2826, 7
      %v2829 = vshll.u32 %v2786, 16
      %v2831 = vor.u32 %v2828, %v2829
      %v2832 = vsel %vm591, %v2824, %v2831
      %v2833 = vrot.slane %v2828, 4
      %v2835 = vshrl.u32 %v2787, 16
      %v2837 = vrot.slane %v2835, 7
      %v2838 = vshll.u32 %v2787, 16
      %v2840 = vor.u32 %v2837, %v2838
      %v2841 = vrot.slane %v2837, 4
      %v2843 = vshrl.u32 %v2788, 16
      %v2845 = vrot.slane %v2843, 7
      %v2846 = vshll.u32 %v2788, 16
      %v2848 = vor.u32 %v2845, %v2846
      %v2849 = vsel %vm591, %v2841, %v2848
      %v2850 = vrot.slane %v2845, 4
      %v2852 = vshrl.u32 %v2789, 16
      %v2854 = vrot.slane %v2852, 7
      %v2855 = vshll.u32 %v2789, 16
      %v2857 = vor.u32 %v2854, %v2855
      %v2858 = vrot.slane %v2854, 4
      %v2860 = vshrl.u32 %v2790, 16
      %v2862 = vrot.slane %v2860, 7
      %v2863 = vshll.u32 %v2790, 16
      %v2865 = vor.u32 %v2862, %v2863
      %v2866 = vsel %vm591, %v2858, %v2865
      %v2867 = vrot.slane %v2862, 4
      %v2869 = vshrl.u32 %v2791, 16
      %v2871 = vrot.slane %v2869, 7
      %v2872 = vshll.u32 %v2791, 16
      %v2874 = vor.u32 %v2871, %v2872
      %v2875 = vrot.slane %v2871, 4
      %v2877 = vshrl.u32 %v2792, 16
      %v2879 = vrot.slane %v2877, 7
      %v2880 = vshll.u32 %v2792, 16
      %v2882 = vor.u32 %v2879, %v2880
      %v2883 = vsel %vm591, %v2875, %v2882
      %v2884 = vrot.slane %v2879, 4
      %v2886 = vshrl.u32 %v2793, 16
      %v2888 = vrot.slane %v2886, 7
      %v2889 = vshll.u32 %v2793, 16
      %v2891 = vor.u32 %v2888, %v2889
      %v2892 = vrot.slane %v2888, 4
      %v2894 = vshrl.u32 %v2794, 16
      %v2896 = vrot.slane %v2894, 7
      %v2897 = vshll.u32 %v2794, 16
      %v2899 = vor.u32 %v2896, %v2897
      %v2900 = vsel %vm591, %v2892, %v2899
      %v2901 = vrot.slane %v2896, 4
      %v2903 = vshrl.u32 %v2795, 16
      %v2905 = vrot.slane %v2903, 7
      %v2906 = vshll.u32 %v2795, 16
      %v2908 = vor.u32 %v2905, %v2906
      %v2909 = vrot.slane %v2905, 4
      %v2911 = vshrl.u32 %v2796, 16
      %v2913 = vrot.slane %v2911, 7
      %v2914 = vshll.u32 %v2796, 16
      %v2916 = vor.u32 %v2913, %v2914
      %v2917 = vsel %vm591, %v2909, %v2916
      %v2918 = vrot.slane %v2913, 4
      %v2920 = vshrl.u32 %v2797, 16
      %v2922 = vrot.slane %v2920, 7
      %v2923 = vshll.u32 %v2797, 16
      %v2925 = vor.u32 %v2922, %v2923
      %v2926 = vrot.slane %v2922, 4
      %v2928 = vshrl.u32 %v2798, 16
      %v2930 = vrot.slane %v2928, 7
      %v2931 = vshll.u32 %v2798, 16
      %v2933 = vor.u32 %v2930, %v2931
      %v2934 = vsel %vm591, %v2926, %v2933
      %v2935 = vrot.slane %v2930, 4
      %v2937 = vshrl.u32 %v2799, 16
      %v2939 = vrot.slane %v2937, 7
      %v2940 = vshll.u32 %v2799, 16
      %v2942 = vor.u32 %v2939, %v2940
      %v2943 = vrot.slane %v2939, 4
      %v2945 = vshrl.u32 %v2800, 16
      %v2947 = vrot.slane %v2945, 7
      %v2948 = vshll.u32 %v2800, 16
      %v2950 = vor.u32 %v2947, %v2948
      %v2951 = vsel %vm591, %v2943, %v2950
      %v2952 = vrot.slane %v2947, 4
      %v2954 = vshrl.u32 %v2801, 16
      %v2956 = vrot.slane %v2954, 7
      %v2957 = vshll.u32 %v2801, 16
      %v2959 = vor.u32 %v2956, %v2957
      %v2960 = vrot.slane %v2956, 4
      %v2962 = vshrl.u32 %v2802, 16
      %v2964 = vrot.slane %v2962, 7
      %v2965 = vshll.u32 %v2802, 16
      %v2967 = vor.u32 %v2964, %v2965
      %v2968 = vsel %vm591, %v2960, %v2967
      %v2969 = vrot.slane %v2964, 4
      %v2971 = vshrl.u32 %v2803, 16
      %v2973 = vrot.slane %v2971, 7
      %v2974 = vshll.u32 %v2803, 16
      %v2976 = vor.u32 %v2973, %v2974
      %v2977 = vrot.slane %v2973, 4
      %v2979 = vshrl.u32 %v2804, 16
      %v2981 = vrot.slane %v2979, 7
      %v2982 = vshll.u32 %v2804, 16
      %v2984 = vor.u32 %v2981, %v2982
      %v2985 = vsel %vm591, %v2977, %v2984
      %v2986 = vrot.slane %v2981, 4
      %v2988 = vshrl.u32 %v2805, 16
      %v2990 = vrot.slane %v2988, 7
      %v2991 = vshll.u32 %v2805, 16
      %v2993 = vor.u32 %v2990, %v2991
      %v2994 = vrot.slane %v2990, 4
      %v2996 = vshrl.u32 %v2806, 16
      %v2998 = vrot.slane %v2996, 7
      %v2999 = vshll.u32 %v2806, 16
      %v3001 = vor.u32 %v2998, %v2999
      %v3002 = vsel %vm591, %v2994, %v3001
      %v3003 = vrot.slane %v2998, 4
      %v3005 = vshrl.u32 %v2807, 16
      %v3007 = vrot.slane %v3005, 7
      %v3008 = vshll.u32 %v2807, 16
      %v3010 = vor.u32 %v3007, %v3008
      %v3011 = vrot.slane %v3007, 4
      %v3013 = vshrl.u32 %v2808, 16
      %v3015 = vrot.slane %v3013, 7
      %v3016 = vshll.u32 %v2808, 16
      %v3018 = vor.u32 %v3015, %v3016
      %v3019 = vsel %vm591, %v3011, %v3018
      %v3020 = vrot.slane %v3015, 4
      %v3022 = vshrl.u32 %v2809, 16
      %v3024 = vrot.slane %v3022, 7
      %v3025 = vshll.u32 %v2809, 16
      %v3027 = vor.u32 %v3024, %v3025
      %v3028 = vrot.slane %v3024, 4
      %v3030 = vshrl.u32 %v2810, 16
      %v3032 = vrot.slane %v3030, 7
      %v3033 = vshll.u32 %v2810, 16
      %v3035 = vor.u32 %v3032, %v3033
      %v3036 = vsel %vm591, %v3028, %v3035
      %v3037 = vrot.slane %v3032, 4
      %v3039 = vshrl.u32 %v2811, 16
      %v3041 = vrot.slane %v3039, 7
      %v3042 = vshll.u32 %v2811, 16
      %v3044 = vor.u32 %v3041, %v3042
      %v3045 = vrot.slane %v3041, 4
      %v3047 = vshrl.u32 %v2812, 16
      %v3049 = vrot.slane %v3047, 7
      %v3050 = vshll.u32 %v2812, 16
      %v3052 = vor.u32 %v3049, %v3050
      %v3053 = vsel %vm591, %v3045, %v3052
      %v3054 = vrot.slane %v3049, 4
      %v3056 = vshrl.u32 %v2813, 16
      %v3058 = vrot.slane %v3056, 7
      %v3059 = vshll.u32 %v2813, 16
      %v3061 = vor.u32 %v3058, %v3059
      %v3062 = vrot.slane %v3058, 4
      %v3064 = vshrl.u32 %v2814, 16
      %v3066 = vrot.slane %v3064, 7
      %v3067 = vshll.u32 %v2814, 16
      %v3069 = vor.u32 %v3066, %v3067
      %v3070 = vsel %vm591, %v3062, %v3069
      %v3071 = vrot.slane %v3066, 4
      %v3073 = vshrl.u32 %v2815, 16
      %v3075 = vrot.slane %v3073, 7
      %v3076 = vshll.u32 %v2815, 16
      %v3078 = vor.u32 %v3075, %v3076
      %v3079 = vrot.slane %v3075, 4
      %v3081 = vshrl.u32 %v2816, 16
      %v3083 = vrot.slane %v3081, 7
      %v3084 = vshll.u32 %v2816, 16
      %v3086 = vor.u32 %v3083, %v3084
      %v3087 = vsel %vm591, %v3079, %v3086
      %v3088 = vrot.slane %v3083, 4
      %s3137 = scalar_lea.vmem [#allocation3], 12
      %v3138 = vld [vmem:[%s3137] sm:$0xf]
      %v3139 = vsel %vm914, %v2823, %v3138
      %3140 = vst [vmem:[%s3137] sm:$0xf] %v3139
      %3141 = vst.msk [vmem:[%s3137 + $0x4] sm:$0xf] %vm226, %v2832
      %v3142 = vld [vmem:[%s3137 + $0x8] sm:$0x1]
      %v3143 = vsel %vm236, %v2833, %v3142
      %3144 = vst [vmem:[%s3137 + $0x8] sm:$0x1] %v3143
      %v3145 = vld [vmem:[%s3137 + $0xc] sm:$0xf]
      %v3146 = vsel %vm914, %v2840, %v3145
      %3147 = vst [vmem:[%s3137 + $0xc] sm:$0xf] %v3146
      %3148 = vst.msk [vmem:[%s3137 + $0x10] sm:$0xf] %vm226, %v2849
      %v3149 = vld [vmem:[%s3137 + $0x14] sm:$0x1]
      %v3150 = vsel %vm236, %v2850, %v3149
      %3151 = vst [vmem:[%s3137 + $0x14] sm:$0x1] %v3150
      %v3152 = vld [vmem:[%s3137 + $0x18] sm:$0xf]
      %v3153 = vsel %vm914, %v2857, %v3152
      %3154 = vst [vmem:[%s3137 + $0x18] sm:$0xf] %v3153
      %3155 = vst.msk [vmem:[%s3137 + $0x1c] sm:$0xf] %vm226, %v2866
      %v3156 = vld [vmem:[%s3137 + $0x20] sm:$0x1]
      %v3157 = vsel %vm236, %v2867, %v3156
      %3158 = vst [vmem:[%s3137 + $0x20] sm:$0x1] %v3157
      %v3159 = vld [vmem:[%s3137 + $0x24] sm:$0xf]
      %v3160 = vsel %vm914, %v2874, %v3159
      %3161 = vst [vmem:[%s3137 + $0x24] sm:$0xf] %v3160
      %3162 = vst.msk [vmem:[%s3137 + $0x28] sm:$0xf] %vm226, %v2883
      %v3163 = vld [vmem:[%s3137 + $0x2c] sm:$0x1]
      %v3164 = vsel %vm236, %v2884, %v3163
      %3165 = vst [vmem:[%s3137 + $0x2c] sm:$0x1] %v3164
      %v3166 = vld [vmem:[%s3137 + $0x30] sm:$0xf]
      %v3167 = vsel %vm914, %v2891, %v3166
      %3168 = vst [vmem:[%s3137 + $0x30] sm:$0xf] %v3167
      %3169 = vst.msk [vmem:[%s3137 + $0x34] sm:$0xf] %vm226, %v2900
      %v3170 = vld [vmem:[%s3137 + $0x38] sm:$0x1]
      %v3171 = vsel %vm236, %v2901, %v3170
      %3172 = vst [vmem:[%s3137 + $0x38] sm:$0x1] %v3171
      %v3173 = vld [vmem:[%s3137 + $0x3c] sm:$0xf]
      %v3174 = vsel %vm914, %v2908, %v3173
      %3175 = vst [vmem:[%s3137 + $0x3c] sm:$0xf] %v3174
      %3176 = vst.msk [vmem:[%s3137 + $0x40] sm:$0xf] %vm226, %v2917
      %v3177 = vld [vmem:[%s3137 + $0x44] sm:$0x1]
      %v3178 = vsel %vm236, %v2918, %v3177
      %3179 = vst [vmem:[%s3137 + $0x44] sm:$0x1] %v3178
      %v3180 = vld [vmem:[%s3137 + $0x48] sm:$0xf]
      %v3181 = vsel %vm914, %v2925, %v3180
      %3182 = vst [vmem:[%s3137 + $0x48] sm:$0xf] %v3181
      %3183 = vst.msk [vmem:[%s3137 + $0x4c] sm:$0xf] %vm226, %v2934
      %v3184 = vld [vmem:[%s3137 + $0x50] sm:$0x1]
      %v3185 = vsel %vm236, %v2935, %v3184
      %3186 = vst [vmem:[%s3137 + $0x50] sm:$0x1] %v3185
      %v3187 = vld [vmem:[%s3137 + $0x54] sm:$0xf]
      %v3188 = vsel %vm914, %v2942, %v3187
      %3189 = vst [vmem:[%s3137 + $0x54] sm:$0xf] %v3188
      %3190 = vst.msk [vmem:[%s3137 + $0x58] sm:$0xf] %vm226, %v2951
      %v3191 = vld [vmem:[%s3137 + $0x5c] sm:$0x1]
      %v3192 = vsel %vm236, %v2952, %v3191
      %3193 = vst [vmem:[%s3137 + $0x5c] sm:$0x1] %v3192
      %v3194 = vld [vmem:[%s3137 + $0x60] sm:$0xf]
      %v3195 = vsel %vm914, %v2959, %v3194
      %3196 = vst [vmem:[%s3137 + $0x60] sm:$0xf] %v3195
      %3197 = vst.msk [vmem:[%s3137 + $0x64] sm:$0xf] %vm226, %v2968
      %v3198 = vld [vmem:[%s3137 + $0x68] sm:$0x1]
      %v3199 = vsel %vm236, %v2969, %v3198
      %3200 = vst [vmem:[%s3137 + $0x68] sm:$0x1] %v3199
      %v3201 = vld [vmem:[%s3137 + $0x6c] sm:$0xf]
      %v3202 = vsel %vm914, %v2976, %v3201
      %3203 = vst [vmem:[%s3137 + $0x6c] sm:$0xf] %v3202
      %3204 = vst.msk [vmem:[%s3137 + $0x70] sm:$0xf] %vm226, %v2985
      %v3205 = vld [vmem:[%s3137 + $0x74] sm:$0x1]
      %v3206 = vsel %vm236, %v2986, %v3205
      %3207 = vst [vmem:[%s3137 + $0x74] sm:$0x1] %v3206
      %v3208 = vld [vmem:[%s3137 + $0x78] sm:$0xf]
      %v3209 = vsel %vm914, %v2993, %v3208
      %3210 = vst [vmem:[%s3137 + $0x78] sm:$0xf] %v3209
      %3211 = vst.msk [vmem:[%s3137 + $0x7c] sm:$0xf] %vm226, %v3002
      %v3212 = vld [vmem:[%s3137 + $0x80] sm:$0x1]
      %v3213 = vsel %vm236, %v3003, %v3212
      %3214 = vst [vmem:[%s3137 + $0x80] sm:$0x1] %v3213
      %v3215 = vld [vmem:[%s3137 + $0x84] sm:$0xf]
      %v3216 = vsel %vm914, %v3010, %v3215
      %3217 = vst [vmem:[%s3137 + $0x84] sm:$0xf] %v3216
      %3218 = vst.msk [vmem:[%s3137 + $0x88] sm:$0xf] %vm226, %v3019
      %v3219 = vld [vmem:[%s3137 + $0x8c] sm:$0x1]
      %v3220 = vsel %vm236, %v3020, %v3219
      %3221 = vst [vmem:[%s3137 + $0x8c] sm:$0x1] %v3220
      %v3222 = vld [vmem:[%s3137 + $0x90] sm:$0xf]
      %v3223 = vsel %vm914, %v3027, %v3222
      %3224 = vst [vmem:[%s3137 + $0x90] sm:$0xf] %v3223
      %3225 = vst.msk [vmem:[%s3137 + $0x94] sm:$0xf] %vm226, %v3036
      %v3226 = vld [vmem:[%s3137 + $0x98] sm:$0x1]
      %v3227 = vsel %vm236, %v3037, %v3226
      %3228 = vst [vmem:[%s3137 + $0x98] sm:$0x1] %v3227
      %v3229 = vld [vmem:[%s3137 + $0x9c] sm:$0xf]
      %v3230 = vsel %vm914, %v3044, %v3229
      %3231 = vst [vmem:[%s3137 + $0x9c] sm:$0xf] %v3230
      %3232 = vst.msk [vmem:[%s3137 + $0xa0] sm:$0xf] %vm226, %v3053
      %v3233 = vld [vmem:[%s3137 + $0xa4] sm:$0x1]
      %v3234 = vsel %vm236, %v3054, %v3233
      %3235 = vst [vmem:[%s3137 + $0xa4] sm:$0x1] %v3234
      %v3236 = vld [vmem:[%s3137 + $0xa8] sm:$0xf]
      %v3237 = vsel %vm914, %v3061, %v3236
      %3238 = vst [vmem:[%s3137 + $0xa8] sm:$0xf] %v3237
      %3239 = vst.msk [vmem:[%s3137 + $0xac] sm:$0xf] %vm226, %v3070
      %v3240 = vld [vmem:[%s3137 + $0xb0] sm:$0x1]
      %v3241 = vsel %vm236, %v3071, %v3240
      %3242 = vst [vmem:[%s3137 + $0xb0] sm:$0x1] %v3241
      %v3243 = vld [vmem:[%s3137 + $0xb4] sm:$0xf]
      %v3244 = vsel %vm914, %v3078, %v3243
      %3245 = vst [vmem:[%s3137 + $0xb4] sm:$0xf] %v3244
      %3246 = vst.msk [vmem:[%s3137 + $0xb8] sm:$0xf] %vm226, %v3087
      %v3247 = vld [vmem:[%s3137 + $0xbc] sm:$0x1]
      %v3248 = vsel %vm236, %v3088, %v3247
      %3249 = vst [vmem:[%s3137 + $0xbc] sm:$0x1] %v3248
      %v3250 = vld [vmem:[#allocation3] sm:$0xf]
      %v3251 = vld [vmem:[#allocation3 + $0x4] sm:$0xf]
      %v3252 = vld [vmem:[#allocation3 + $0xc] sm:$0xf]
      %v3253 = vld [vmem:[#allocation3 + $0x10] sm:$0xf]
      %v3254 = vld [vmem:[#allocation3 + $0x18] sm:$0xf]
      %v3255 = vld [vmem:[#allocation3 + $0x1c] sm:$0xf]
      %v3256 = vld [vmem:[#allocation3 + $0x24] sm:$0xf]
      %v3257 = vld [vmem:[#allocation3 + $0x28] sm:$0xf]
      %v3258 = vld [vmem:[#allocation3 + $0x30] sm:$0xf]
      %v3259 = vld [vmem:[#allocation3 + $0x34] sm:$0xf]
      %v3260 = vld [vmem:[#allocation3 + $0x3c] sm:$0xf]
      %v3261 = vld [vmem:[#allocation3 + $0x40] sm:$0xf]
      %v3262 = vld [vmem:[#allocation3 + $0x48] sm:$0xf]
      %v3263 = vld [vmem:[#allocation3 + $0x4c] sm:$0xf]
      %v3264 = vld [vmem:[#allocation3 + $0x54] sm:$0xf]
      %v3265 = vld [vmem:[#allocation3 + $0x58] sm:$0xf]
      %v3266 = vld [vmem:[#allocation3 + $0x60] sm:$0xf]
      %v3267 = vld [vmem:[#allocation3 + $0x64] sm:$0xf]
      %v3268 = vld [vmem:[#allocation3 + $0x6c] sm:$0xf]
      %v3269 = vld [vmem:[#allocation3 + $0x70] sm:$0xf]
      %v3270 = vld [vmem:[#allocation3 + $0x78] sm:$0xf]
      %v3271 = vld [vmem:[#allocation3 + $0x7c] sm:$0xf]
      %v3272 = vld [vmem:[#allocation3 + $0x84] sm:$0xf]
      %v3273 = vld [vmem:[#allocation3 + $0x88] sm:$0xf]
      %v3274 = vld [vmem:[#allocation3 + $0x90] sm:$0xf]
      %v3275 = vld [vmem:[#allocation3 + $0x94] sm:$0xf]
      %v3276 = vld [vmem:[#allocation3 + $0x9c] sm:$0xf]
      %v3277 = vld [vmem:[#allocation3 + $0xa0] sm:$0xf]
      %v3278 = vld [vmem:[#allocation3 + $0xa8] sm:$0xf]
      %v3279 = vld [vmem:[#allocation3 + $0xac] sm:$0xf]
      %v3280 = vld [vmem:[#allocation3 + $0xb4] sm:$0xf]
      %v3281 = vld [vmem:[#allocation3 + $0xb8] sm:$0xf]
      %v3282 = vld [vmem:[#allocation3 + $0xc0] sm:$0xf]
      %v3283 = vld [vmem:[#allocation3 + $0xc4] sm:$0xf]
      %v3284 = vld [vmem:[#allocation3 + $0xcc] sm:$0xf]
      %v3285 = vld [vmem:[#allocation3 + $0xd0] sm:$0xf]
      %v3318 = vunpack.c.l.b16 %v3250
      %v3319 = vunpack.c.l.b16 %v3251
      %v3320 = vunpack.c.l.b16 %v3252
      %v3321 = vunpack.c.l.b16 %v3253
      %v3322 = vunpack.c.l.b16 %v3254
      %v3323 = vunpack.c.l.b16 %v3255
      %v3324 = vunpack.c.l.b16 %v3256
      %v3325 = vunpack.c.l.b16 %v3257
      %v3326 = vunpack.c.l.b16 %v3258
      %v3327 = vunpack.c.l.b16 %v3259
      %v3328 = vunpack.c.l.b16 %v3260
      %v3329 = vunpack.c.l.b16 %v3261
      %v3330 = vunpack.c.l.b16 %v3262
      %v3331 = vunpack.c.l.b16 %v3263
      %v3332 = vunpack.c.l.b16 %v3264
      %v3333 = vunpack.c.l.b16 %v3265
      %v3334 = vunpack.c.l.b16 %v3266
      %v3335 = vunpack.c.l.b16 %v3267
      %v3336 = vunpack.c.l.b16 %v3268
      %v3337 = vunpack.c.l.b16 %v3269
      %v3338 = vunpack.c.l.b16 %v3270
      %v3339 = vunpack.c.l.b16 %v3271
      %v3340 = vunpack.c.l.b16 %v3272
      %v3341 = vunpack.c.l.b16 %v3273
      %v3342 = vunpack.c.l.b16 %v3274
      %v3343 = vunpack.c.l.b16 %v3275
      %v3344 = vunpack.c.l.b16 %v3276
      %v3345 = vunpack.c.l.b16 %v3277
      %v3346 = vunpack.c.l.b16 %v3278
      %v3347 = vunpack.c.l.b16 %v3279
      %v3348 = vunpack.c.l.b16 %v3280
      %v3349 = vunpack.c.l.b16 %v3281
      %v3350 = vpack.c.b16 %v3319, %v3318
      %v3351 = vpack.c.b16 %v3321, %v3320
      %v3352 = vpack.c.b16 %v3323, %v3322
      %v3353 = vpack.c.b16 %v3325, %v3324
      %v3354 = vpack.c.b16 %v3327, %v3326
      %v3355 = vpack.c.b16 %v3329, %v3328
      %v3356 = vpack.c.b16 %v3331, %v3330
      %v3357 = vpack.c.b16 %v3333, %v3332
      %v3358 = vpack.c.b16 %v3335, %v3334
      %v3359 = vpack.c.b16 %v3337, %v3336
      %v3360 = vpack.c.b16 %v3339, %v3338
      %v3361 = vpack.c.b16 %v3341, %v3340
      %v3362 = vpack.c.b16 %v3343, %v3342
      %v3363 = vpack.c.b16 %v3345, %v3344
      %v3364 = vpack.c.b16 %v3347, %v3346
      %v3365 = vpack.c.b16 %v3349, %v3348
      %v3368 = vunpack.c.l.b16 %v3282
      %v3369 = vunpack.c.l.b16 %v3283
      %v3370 = vpack.c.b16 %v3369, %v3368
      %3371 = vrot.lane.b32.xlu0 %v3351, 4
      %v3372 = vpop.permute.xlu0 %3371
      %3373 = vrot.lane.b32.xlu0 %v3352, 4
      %v3374 = vpop.permute.xlu0 %3373
      %3375 = vrot.lane.b32.xlu0 %v3353, 4
      %v3376 = vpop.permute.xlu0 %3375
      %3377 = vrot.lane.b32.xlu0 %v3354, 4
      %v3378 = vpop.permute.xlu0 %3377
      %3379 = vrot.lane.b32.xlu0 %v3355, 4
      %v3380 = vpop.permute.xlu0 %3379
      %3381 = vrot.lane.b32.xlu0 %v3356, 4
      %v3382 = vpop.permute.xlu0 %3381
      %3383 = vrot.lane.b32.xlu0 %v3357, 4
      %v3384 = vpop.permute.xlu0 %3383
      %3385 = vrot.lane.b32.xlu0 %v3358, 4
      %v3386 = vpop.permute.xlu0 %3385
      %3387 = vrot.lane.b32.xlu0 %v3359, 4
      %v3388 = vpop.permute.xlu0 %3387
      %3389 = vrot.lane.b32.xlu0 %v3360, 4
      %v3390 = vpop.permute.xlu0 %3389
      %3391 = vrot.lane.b32.xlu0 %v3361, 4
      %v3392 = vpop.permute.xlu0 %3391
      %3393 = vrot.lane.b32.xlu0 %v3362, 4
      %v3394 = vpop.permute.xlu0 %3393
      %3395 = vrot.lane.b32.xlu0 %v3363, 4
      %v3396 = vpop.permute.xlu0 %3395
      %3397 = vrot.lane.b32.xlu0 %v3364, 4
      %v3398 = vpop.permute.xlu0 %3397
      %3399 = vrot.lane.b32.xlu0 %v3365, 4
      %v3400 = vpop.permute.xlu0 %3399
      %3401 = vrot.lane.b32.xlu0 %v3370, 4
      %v3402 = vpop.permute.xlu0 %3401
      %v3405 = vunpack.c.l.b16 %v3284
      %v3406 = vunpack.c.l.b16 %v3285
      %v3407 = vpack.c.b16 %v3406, %v3405
      %3408 = vrot.lane.b32.xlu0 %v3352, 8
      %v3409 = vpop.permute.xlu0 %3408
      %3410 = vrot.lane.b32.xlu0 %v3353, 8
      %v3411 = vpop.permute.xlu0 %3410
      %3412 = vrot.lane.b32.xlu0 %v3354, 8
      %v3413 = vpop.permute.xlu0 %3412
      %3414 = vrot.lane.b32.xlu0 %v3355, 8
      %v3415 = vpop.permute.xlu0 %3414
      %3416 = vrot.lane.b32.xlu0 %v3356, 8
      %v3417 = vpop.permute.xlu0 %3416
      %3418 = vrot.lane.b32.xlu0 %v3357, 8
      %v3419 = vpop.permute.xlu0 %3418
      %3420 = vrot.lane.b32.xlu0 %v3358, 8
      %v3421 = vpop.permute.xlu0 %3420
      %3422 = vrot.lane.b32.xlu0 %v3359, 8
      %v3423 = vpop.permute.xlu0 %3422
      %3424 = vrot.lane.b32.xlu0 %v3360, 8
      %v3425 = vpop.permute.xlu0 %3424
      %3426 = vrot.lane.b32.xlu0 %v3361, 8
      %v3427 = vpop.permute.xlu0 %3426
      %3428 = vrot.lane.b32.xlu0 %v3362, 8
      %v3429 = vpop.permute.xlu0 %3428
      %3430 = vrot.lane.b32.xlu0 %v3363, 8
      %v3431 = vpop.permute.xlu0 %3430
      %3432 = vrot.lane.b32.xlu0 %v3364, 8
      %v3433 = vpop.permute.xlu0 %3432
      %3434 = vrot.lane.b32.xlu0 %v3365, 8
      %v3435 = vpop.permute.xlu0 %3434
      %3436 = vrot.lane.b32.xlu0 %v3370, 8
      %v3437 = vpop.permute.xlu0 %3436
      %3438 = vrot.lane.b32.xlu0 %v3407, 8
      %v3439 = vpop.permute.xlu0 %3438
      %v3442 = vsel %vm1217, %v3350, %v3372
      %v3445 = vsel %vm1217, %v3351, %v3374
      %v3448 = vsel %vm1217, %v3352, %v3376
      %v3451 = vsel %vm1217, %v3353, %v3378
      %v3454 = vsel %vm1217, %v3354, %v3380
      %v3457 = vsel %vm1217, %v3355, %v3382
      %v3460 = vsel %vm1217, %v3356, %v3384
      %v3463 = vsel %vm1217, %v3357, %v3386
      %v3466 = vsel %vm1217, %v3358, %v3388
      %v3469 = vsel %vm1217, %v3359, %v3390
      %v3472 = vsel %vm1217, %v3360, %v3392
      %v3475 = vsel %vm1217, %v3361, %v3394
      %v3478 = vsel %vm1217, %v3362, %v3396
      %v3481 = vsel %vm1217, %v3363, %v3398
      %v3484 = vsel %vm1217, %v3364, %v3400
      %v3487 = vsel %vm1217, %v3365, %v3402
      %v3489 = vsel %vm1266, %v3442, %v3409
      %v3491 = vsel %vm1266, %v3445, %v3411
      %v3493 = vsel %vm1266, %v3448, %v3413
      %v3495 = vsel %vm1266, %v3451, %v3415
      %v3497 = vsel %vm1266, %v3454, %v3417
      %v3499 = vsel %vm1266, %v3457, %v3419
      %v3501 = vsel %vm1266, %v3460, %v3421
      %v3503 = vsel %vm1266, %v3463, %v3423
      %v3505 = vsel %vm1266, %v3466, %v3425
      %v3507 = vsel %vm1266, %v3469, %v3427
      %v3509 = vsel %vm1266, %v3472, %v3429
      %v3511 = vsel %vm1266, %v3475, %v3431
      %v3513 = vsel %vm1266, %v3478, %v3433
      %v3515 = vsel %vm1266, %v3481, %v3435
      %v3517 = vsel %vm1266, %v3484, %v3437
      %v3519 = vsel %vm1266, %v3487, %v3439
      %v3520 = vld [vmem:[%s3] sm:$0xf]
      %v3521 = vld [vmem:[%s3 + $0x4] sm:$0x3]
      %v3522 = vld [vmem:[#allocation3 + $0x8] sm:$0x1]
      %v3523 = vld [vmem:[#allocation3 + $0x14] sm:$0x1]
      %v3524 = vld [vmem:[#allocation3 + $0x20] sm:$0x1]
      %v3525 = vld [vmem:[#allocation3 + $0x2c] sm:$0x1]
      %v3526 = vld [vmem:[#allocation3 + $0x38] sm:$0x1]
      %v3527 = vld [vmem:[#allocation3 + $0x44] sm:$0x1]
      %v3528 = vld [vmem:[#allocation3 + $0x50] sm:$0x1]
      %v3529 = vld [vmem:[#allocation3 + $0x5c] sm:$0x1]
      %v3530 = vld [vmem:[#allocation3 + $0x68] sm:$0x1]
      %v3531 = vld [vmem:[#allocation3 + $0x74] sm:$0x1]
      %v3532 = vld [vmem:[#allocation3 + $0x80] sm:$0x1]
      %v3533 = vld [vmem:[#allocation3 + $0x8c] sm:$0x1]
      %v3534 = vld [vmem:[#allocation3 + $0x98] sm:$0x1]
      %v3535 = vld [vmem:[#allocation3 + $0xa4] sm:$0x1]
      %v3536 = vld [vmem:[#allocation3 + $0xb0] sm:$0x1]
      %v3537 = vld [vmem:[#allocation3 + $0xbc] sm:$0x1]
      %v3538 = vld [vmem:[#allocation3 + $0xc8] sm:$0x1]
      %v3539 = vld [vmem:[#allocation3 + $0xd4] sm:$0x1]
      %v3556 = vunpack.c.l.b16 %v3522
      %v3557 = vunpack.c.l.b16 %v3523
      %v3558 = vunpack.c.l.b16 %v3524
      %v3559 = vunpack.c.l.b16 %v3525
      %v3560 = vunpack.c.l.b16 %v3526
      %v3561 = vunpack.c.l.b16 %v3527
      %v3562 = vunpack.c.l.b16 %v3528
      %v3563 = vunpack.c.l.b16 %v3529
      %v3564 = vunpack.c.l.b16 %v3530
      %v3565 = vunpack.c.l.b16 %v3531
      %v3566 = vunpack.c.l.b16 %v3532
      %v3567 = vunpack.c.l.b16 %v3533
      %v3568 = vunpack.c.l.b16 %v3534
      %v3569 = vunpack.c.l.b16 %v3535
      %v3570 = vunpack.c.l.b16 %v3536
      %v3571 = vunpack.c.l.b16 %v3537
      %v3572 = vpack.c.b16 %v3556, %v3556
      %v3573 = vpack.c.b16 %v3557, %v3557
      %v3574 = vpack.c.b16 %v3558, %v3558
      %v3575 = vpack.c.b16 %v3559, %v3559
      %v3576 = vpack.c.b16 %v3560, %v3560
      %v3577 = vpack.c.b16 %v3561, %v3561
      %v3578 = vpack.c.b16 %v3562, %v3562
      %v3579 = vpack.c.b16 %v3563, %v3563
      %v3580 = vpack.c.b16 %v3564, %v3564
      %v3581 = vpack.c.b16 %v3565, %v3565
      %v3582 = vpack.c.b16 %v3566, %v3566
      %v3583 = vpack.c.b16 %v3567, %v3567
      %v3584 = vpack.c.b16 %v3568, %v3568
      %v3585 = vpack.c.b16 %v3569, %v3569
      %v3586 = vpack.c.b16 %v3570, %v3570
      %v3587 = vpack.c.b16 %v3571, %v3571
      %v3589 = vunpack.c.l.b16 %v3538
      %v3590 = vpack.c.b16 %v3589, %v3589
      %3591 = vrot.lane.b32.xlu0 %v3573, 4
      %v3592 = vpop.permute.xlu0 %3591
      %3593 = vrot.lane.b32.xlu0 %v3574, 4
      %v3594 = vpop.permute.xlu0 %3593
      %3595 = vrot.lane.b32.xlu0 %v3575, 4
      %v3596 = vpop.permute.xlu0 %3595
      %3597 = vrot.lane.b32.xlu0 %v3576, 4
      %v3598 = vpop.permute.xlu0 %3597
      %3599 = vrot.lane.b32.xlu0 %v3577, 4
      %v3600 = vpop.permute.xlu0 %3599
      %3601 = vrot.lane.b32.xlu0 %v3578, 4
      %v3602 = vpop.permute.xlu0 %3601
      %3603 = vrot.lane.b32.xlu0 %v3579, 4
      %v3604 = vpop.permute.xlu0 %3603
      %3605 = vrot.lane.b32.xlu0 %v3580, 4
      %v3606 = vpop.permute.xlu0 %3605
      %3607 = vrot.lane.b32.xlu0 %v3581, 4
      %v3608 = vpop.permute.xlu0 %3607
      %3609 = vrot.lane.b32.xlu0 %v3582, 4
      %v3610 = vpop.permute.xlu0 %3609
      %3611 = vrot.lane.b32.xlu0 %v3583, 4
      %v3612 = vpop.permute.xlu0 %3611
      %3613 = vrot.lane.b32.xlu0 %v3584, 4
      %v3614 = vpop.permute.xlu0 %3613
      %3615 = vrot.lane.b32.xlu0 %v3585, 4
      %v3616 = vpop.permute.xlu0 %3615
      %3617 = vrot.lane.b32.xlu0 %v3586, 4
      %v3618 = vpop.permute.xlu0 %3617
      %3619 = vrot.lane.b32.xlu0 %v3587, 4
      %v3620 = vpop.permute.xlu0 %3619
      %3621 = vrot.lane.b32.xlu0 %v3590, 4
      %v3622 = vpop.permute.xlu0 %3621
      %v3624 = vunpack.c.l.b16 %v3539
      %v3625 = vpack.c.b16 %v3624, %v3624
      %3626 = vrot.lane.b32.xlu0 %v3574, 8
      %v3627 = vpop.permute.xlu0 %3626
      %3628 = vrot.lane.b32.xlu0 %v3575, 8
      %v3629 = vpop.permute.xlu0 %3628
      %3630 = vrot.lane.b32.xlu0 %v3576, 8
      %v3631 = vpop.permute.xlu0 %3630
      %3632 = vrot.lane.b32.xlu0 %v3577, 8
      %v3633 = vpop.permute.xlu0 %3632
      %3634 = vrot.lane.b32.xlu0 %v3578, 8
      %v3635 = vpop.permute.xlu0 %3634
      %3636 = vrot.lane.b32.xlu0 %v3579, 8
      %v3637 = vpop.permute.xlu0 %3636
      %3638 = vrot.lane.b32.xlu0 %v3580, 8
      %v3639 = vpop.permute.xlu0 %3638
      %3640 = vrot.lane.b32.xlu0 %v3581, 8
      %v3641 = vpop.permute.xlu0 %3640
      %3642 = vrot.lane.b32.xlu0 %v3582, 8
      %v3643 = vpop.permute.xlu0 %3642
      %3644 = vrot.lane.b32.xlu0 %v3583, 8
      %v3645 = vpop.permute.xlu0 %3644
      %3646 = vrot.lane.b32.xlu0 %v3584, 8
      %v3647 = vpop.permute.xlu0 %3646
      %3648 = vrot.lane.b32.xlu0 %v3585, 8
      %v3649 = vpop.permute.xlu0 %3648
      %3650 = vrot.lane.b32.xlu0 %v3586, 8
      %v3651 = vpop.permute.xlu0 %3650
      %3652 = vrot.lane.b32.xlu0 %v3587, 8
      %v3653 = vpop.permute.xlu0 %3652
      %3654 = vrot.lane.b32.xlu0 %v3590, 8
      %v3655 = vpop.permute.xlu0 %3654
      %3656 = vrot.lane.b32.xlu0 %v3625, 8
      %v3657 = vpop.permute.xlu0 %3656
      %v3660 = vsel %vm1217, %v3572, %v3592
      %v3663 = vsel %vm1217, %v3573, %v3594
      %v3666 = vsel %vm1217, %v3574, %v3596
      %v3669 = vsel %vm1217, %v3575, %v3598
      %v3672 = vsel %vm1217, %v3576, %v3600
      %v3675 = vsel %vm1217, %v3577, %v3602
      %v3678 = vsel %vm1217, %v3578, %v3604
      %v3681 = vsel %vm1217, %v3579, %v3606
      %v3684 = vsel %vm1217, %v3580, %v3608
      %v3687 = vsel %vm1217, %v3581, %v3610
      %v3690 = vsel %vm1217, %v3582, %v3612
      %v3693 = vsel %vm1217, %v3583, %v3614
      %v3696 = vsel %vm1217, %v3584, %v3616
      %v3699 = vsel %vm1217, %v3585, %v3618
      %v3702 = vsel %vm1217, %v3586, %v3620
      %v3705 = vsel %vm1217, %v3587, %v3622
      %v3707 = vsel %vm1266, %v3660, %v3627
      %v3709 = vsel %vm1266, %v3663, %v3629
      %v3711 = vsel %vm1266, %v3666, %v3631
      %v3713 = vsel %vm1266, %v3669, %v3633
      %v3715 = vsel %vm1266, %v3672, %v3635
      %v3717 = vsel %vm1266, %v3675, %v3637
      %v3719 = vsel %vm1266, %v3678, %v3639
      %v3721 = vsel %vm1266, %v3681, %v3641
      %v3723 = vsel %vm1266, %v3684, %v3643
      %v3725 = vsel %vm1266, %v3687, %v3645
      %v3727 = vsel %vm1266, %v3690, %v3647
      %v3729 = vsel %vm1266, %v3693, %v3649
      %v3731 = vsel %vm1266, %v3696, %v3651
      %v3733 = vsel %vm1266, %v3699, %v3653
      %v3735 = vsel %vm1266, %v3702, %v3655
      %v3737 = vsel %vm1266, %v3705, %v3657
      %v3738 = vshrl.u32 %v3489, 16
      %v3740 = vshll.u32 %v3489, 16
      %v3742 = vrot.slane %v3740, 1
      %v3743 = vor.u32 %v3738, %v3742
      %v3744 = vshll.u32 %v3707, 16
      %v3746 = vrot.slane %v3744, 1
      %v3747 = vsel %vm1517, %v3743, %v3746
      %v3748 = vshrl.u32 %v3491, 16
      %v3750 = vshll.u32 %v3491, 16
      %v3752 = vrot.slane %v3750, 1
      %v3753 = vor.u32 %v3748, %v3752
      %v3754 = vshll.u32 %v3709, 16
      %v3756 = vrot.slane %v3754, 1
      %v3757 = vsel %vm1517, %v3753, %v3756
      %v3758 = vshrl.u32 %v3493, 16
      %v3760 = vshll.u32 %v3493, 16
      %v3762 = vrot.slane %v3760, 1
      %v3763 = vor.u32 %v3758, %v3762
      %v3764 = vshll.u32 %v3711, 16
      %v3766 = vrot.slane %v3764, 1
      %v3767 = vsel %vm1517, %v3763, %v3766
      %v3768 = vshrl.u32 %v3495, 16
      %v3770 = vshll.u32 %v3495, 16
      %v3772 = vrot.slane %v3770, 1
      %v3773 = vor.u32 %v3768, %v3772
      %v3774 = vshll.u32 %v3713, 16
      %v3776 = vrot.slane %v3774, 1
      %v3777 = vsel %vm1517, %v3773, %v3776
      %v3778 = vshrl.u32 %v3497, 16
      %v3780 = vshll.u32 %v3497, 16
      %v3782 = vrot.slane %v3780, 1
      %v3783 = vor.u32 %v3778, %v3782
      %v3784 = vshll.u32 %v3715, 16
      %v3786 = vrot.slane %v3784, 1
      %v3787 = vsel %vm1517, %v3783, %v3786
      %v3788 = vshrl.u32 %v3499, 16
      %v3790 = vshll.u32 %v3499, 16
      %v3792 = vrot.slane %v3790, 1
      %v3793 = vor.u32 %v3788, %v3792
      %v3794 = vshll.u32 %v3717, 16
      %v3796 = vrot.slane %v3794, 1
      %v3797 = vsel %vm1517, %v3793, %v3796
      %v3798 = vshrl.u32 %v3501, 16
      %v3800 = vshll.u32 %v3501, 16
      %v3802 = vrot.slane %v3800, 1
      %v3803 = vor.u32 %v3798, %v3802
      %v3804 = vshll.u32 %v3719, 16
      %v3806 = vrot.slane %v3804, 1
      %v3807 = vsel %vm1517, %v3803, %v3806
      %v3808 = vshrl.u32 %v3503, 16
      %v3810 = vshll.u32 %v3503, 16
      %v3812 = vrot.slane %v3810, 1
      %v3813 = vor.u32 %v3808, %v3812
      %v3814 = vshll.u32 %v3721, 16
      %v3816 = vrot.slane %v3814, 1
      %v3817 = vsel %vm1517, %v3813, %v3816
      %v3818 = vshrl.u32 %v3505, 16
      %v3820 = vshll.u32 %v3505, 16
      %v3822 = vrot.slane %v3820, 1
      %v3823 = vor.u32 %v3818, %v3822
      %v3824 = vshll.u32 %v3723, 16
      %v3826 = vrot.slane %v3824, 1
      %v3827 = vsel %vm1517, %v3823, %v3826
      %v3828 = vshrl.u32 %v3507, 16
      %v3830 = vshll.u32 %v3507, 16
      %v3832 = vrot.slane %v3830, 1
      %v3833 = vor.u32 %v3828, %v3832
      %v3834 = vshll.u32 %v3725, 16
      %v3836 = vrot.slane %v3834, 1
      %v3837 = vsel %vm1517, %v3833, %v3836
      %v3838 = vshrl.u32 %v3509, 16
      %v3840 = vshll.u32 %v3509, 16
      %v3842 = vrot.slane %v3840, 1
      %v3843 = vor.u32 %v3838, %v3842
      %v3844 = vshll.u32 %v3727, 16
      %v3846 = vrot.slane %v3844, 1
      %v3847 = vsel %vm1517, %v3843, %v3846
      %v3848 = vshrl.u32 %v3511, 16
      %v3850 = vshll.u32 %v3511, 16
      %v3852 = vrot.slane %v3850, 1
      %v3853 = vor.u32 %v3848, %v3852
      %v3854 = vshll.u32 %v3729, 16
      %v3856 = vrot.slane %v3854, 1
      %v3857 = vsel %vm1517, %v3853, %v3856
      %v3858 = vshrl.u32 %v3513, 16
      %v3860 = vshll.u32 %v3513, 16
      %v3862 = vrot.slane %v3860, 1
      %v3863 = vor.u32 %v3858, %v3862
      %v3864 = vshll.u32 %v3731, 16
      %v3866 = vrot.slane %v3864, 1
      %v3867 = vsel %vm1517, %v3863, %v3866
      %v3868 = vshrl.u32 %v3515, 16
      %v3870 = vshll.u32 %v3515, 16
      %v3872 = vrot.slane %v3870, 1
      %v3873 = vor.u32 %v3868, %v3872
      %v3874 = vshll.u32 %v3733, 16
      %v3876 = vrot.slane %v3874, 1
      %v3877 = vsel %vm1517, %v3873, %v3876
      %v3878 = vshrl.u32 %v3517, 16
      %v3880 = vshll.u32 %v3517, 16
      %v3882 = vrot.slane %v3880, 1
      %v3883 = vor.u32 %v3878, %v3882
      %v3884 = vshll.u32 %v3735, 16
      %v3886 = vrot.slane %v3884, 1
      %v3887 = vsel %vm1517, %v3883, %v3886
      %v3888 = vshrl.u32 %v3519, 16
      %v3890 = vshll.u32 %v3519, 16
      %v3892 = vrot.slane %v3890, 1
      %v3893 = vor.u32 %v3888, %v3892
      %v3894 = vshll.u32 %v3737, 16
      %v3896 = vrot.slane %v3894, 1
      %v3897 = vsel %vm1517, %v3893, %v3896
      %s3898 = scalar_lea.vmem %s3, 8
      %v3899 = vld [vmem:[%s3898] sm:$0xf]
      %v3900 = vld [vmem:[%s3898 + $0x4] sm:$0x3]
      %v3903 = vunpack.c.l.b16 %v3899
      %v3904 = vunpack.c.l.b16 %v3900
      %v3905 = vpack.c.b16 %v3904, %v3903
      %v3907 = vsel %vm1686, %v3747, 0
      %v3910 = vsel %vm1686, %v3757, 0
      %v3913 = vsel %vm1686, %v3767, 0
      %v3916 = vsel %vm1686, %v3777, 0
      %v3919 = vsel %vm1686, %v3787, 0
      %v3922 = vsel %vm1686, %v3797, 0
      %v3925 = vsel %vm1686, %v3807, 0
      %v3928 = vsel %vm1686, %v3817, 0
      %v3931 = vsel %vm1686, %v3827, 0
      %v3934 = vsel %vm1686, %v3837, 0
      %v3937 = vsel %vm1686, %v3847, 0
      %v3940 = vsel %vm1686, %v3857, 0
      %v3943 = vsel %vm1686, %v3867, 0
      %v3946 = vsel %vm1686, %v3877, 0
      %v3949 = vsel %vm1686, %v3887, 0
      %v3952 = vsel %vm1686, %v3897, 0
      %v3955 = vsel %vm1735, %v3905, 0
      %3957 = vmatprep.subr.bf16.mxu0 0
      %3958 = vmatpush1.bf16.msra.mxu0 %v3955
      %3959 = vmatprep.subr.bf16.mxu0 0
      %3960 = vmatpush1.bf16.msra.mxu0 0
      %3961 = vmatprep.subr.bf16.mxu0 0
      %3962 = vmatpush1.bf16.msra.mxu0 0
      %3963 = vmatprep.subr.bf16.mxu0 0
      %3964 = vmatpush1.bf16.msra.mxu0 0
      %3965 = vmatprep.subr.bf16.mxu0 0
      %3966 = vmatpush1.bf16.msra.mxu0 0
      %3967 = vmatprep.subr.bf16.mxu0 0
      %3968 = vmatpush1.bf16.msra.mxu0 0
      %3969 = vmatprep.subr.bf16.mxu0 0
      %3970 = vmatpush1.bf16.msra.mxu0 0
      %3971 = vmatprep.subr.bf16.mxu0 0
      %3972 = vmatpush1.bf16.msra.mxu0 0
      %3973 = vmatprep.subr.bf16.mxu0 0
      %3974 = vmatpush1.bf16.msra.mxu0 0
      %3975 = vmatprep.subr.bf16.mxu0 0
      %3976 = vmatpush1.bf16.msra.mxu0 0
      %3977 = vmatprep.subr.bf16.mxu0 0
      %3978 = vmatpush1.bf16.msra.mxu0 0
      %3979 = vmatprep.subr.bf16.mxu0 0
      %3980 = vmatpush1.bf16.msra.mxu0 0
      %3981 = vmatprep.subr.bf16.mxu0 0
      %3982 = vmatpush1.bf16.msra.mxu0 0
      %3983 = vmatprep.subr.bf16.mxu0 0
      %3984 = vmatpush1.bf16.msra.mxu0 0
      %3985 = vmatprep.subr.bf16.mxu0 0
      %3986 = vmatpush1.bf16.msra.mxu0 0
      %3987 = vmatprep.subr.bf16.mxu0 0
      %3988 = vmatpush1.bf16.msra.mxu0 0
      %3989 = vmatprep.mubr.bf16.mxu0 0
      %3990 = vmatmul.mubr.bf16.gmra.mrb[0].mxu0 %v3907
      %v3991 = vpop.f32.mrb[0].mxu0
      %v3992 = vadd.f32 0.0, %v3991
      %v3993 = vpop.f32.mrb[0].mxu0
      %v3994 = vpop.f32.mrb[0].mxu0
      %v3995 = vadd.f32 0.0, %v3994
      %v3996 = vpop.f32.mrb[0].mxu0
      %3997 = vmatprep.mubr.bf16.mxu0 0
      %3998 = vmatmul.mubr.bf16.gmra.mrb[0].mxu0 %v3910
      %v3999 = vpop.f32.mrb[0].mxu0
      %v4000 = vadd.f32 0.0, %v3999
      %v4001 = vpop.f32.mrb[0].mxu0
      %v4002 = vpop.f32.mrb[0].mxu0
      %v4003 = vadd.f32 0.0, %v4002
      %v4004 = vpop.f32.mrb[0].mxu0
      %4005 = vmatprep.mubr.bf16.mxu0 0
      %4006 = vmatmul.mubr.bf16.gmra.mrb[0].mxu0 %v3913
      %v4007 = vpop.f32.mrb[0].mxu0
      %v4008 = vadd.f32 0.0, %v4007
      %v4009 = vpop.f32.mrb[0].mxu0
      %v4010 = vpop.f32.mrb[0].mxu0
      %v4011 = vadd.f32 0.0, %v4010
      %v4012 = vpop.f32.mrb[0].mxu0
      %4013 = vmatprep.mubr.bf16.mxu0 0
      %4014 = vmatmul.mubr.bf16.gmra.mrb[0].mxu0 %v3916
      %v4015 = vpop.f32.mrb[0].mxu0
      %v4016 = vadd.f32 0.0, %v4015
      %v4017 = vpop.f32.mrb[0].mxu0
      %v4018 = vpop.f32.mrb[0].mxu0
      %v4019 = vadd.f32 0.0, %v4018
      %v4020 = vpop.f32.mrb[0].mxu0
      %4021 = vmatprep.mubr.bf16.mxu0 0
      %4022 = vmatmul.mubr.bf16.gmra.mrb[0].mxu0 %v3919
      %v4023 = vpop.f32.mrb[0].mxu0
      %v4024 = vadd.f32 0.0, %v4023
      %v4025 = vpop.f32.mrb[0].mxu0
      %v4026 = vpop.f32.mrb[0].mxu0
      %v4027 = vadd.f32 0.0, %v4026
      %v4028 = vpop.f32.mrb[0].mxu0
      %4029 = vmatprep.mubr.bf16.mxu0 0
      %4030 = vmatmul.mubr.bf16.gmra.mrb[0].mxu0 %v3922
      %v4031 = vpop.f32.mrb[0].mxu0
      %v4032 = vadd.f32 0.0, %v4031
      %v4033 = vpop.f32.mrb[0].mxu0
      %v4034 = vpop.f32.mrb[0].mxu0
      %v4035 = vadd.f32 0.0, %v4034
      %v4036 = vpop.f32.mrb[0].mxu0
      %4037 = vmatprep.mubr.bf16.mxu0 0
      %4038 = vmatmul.mubr.bf16.gmra.mrb[0].mxu0 %v3925
      %v4039 = vpop.f32.mrb[0].mxu0
      %v4040 = vadd.f32 0.0, %v4039
      %v4041 = vpop.f32.mrb[0].mxu0
      %v4042 = vpop.f32.mrb[0].mxu0
      %v4043 = vadd.f32 0.0, %v4042
      %v4044 = vpop.f32.mrb[0].mxu0
      %4045 = vmatprep.mubr.bf16.mxu0 0
      %4046 = vmatmul.mubr.bf16.gmra.mrb[0].mxu0 %v3928
      %v4047 = vpop.f32.mrb[0].mxu0
      %v4048 = vadd.f32 0.0, %v4047
      %v4049 = vpop.f32.mrb[0].mxu0
      %v4050 = vpop.f32.mrb[0].mxu0
      %v4051 = vadd.f32 0.0, %v4050
      %v4052 = vpop.f32.mrb[0].mxu0
      %4053 = vmatprep.mubr.bf16.mxu0 0
      %4054 = vmatmul.mubr.bf16.gmra.mrb[0].mxu0 %v3931
      %v4055 = vpop.f32.mrb[0].mxu0
      %v4056 = vadd.f32 0.0, %v4055
      %v4057 = vpop.f32.mrb[0].mxu0
      %v4058 = vpop.f32.mrb[0].mxu0
      %v4059 = vadd.f32 0.0, %v4058
      %v4060 = vpop.f32.mrb[0].mxu0
      %4061 = vmatprep.mubr.bf16.mxu0 0
      %4062 = vmatmul.mubr.bf16.gmra.mrb[0].mxu0 %v3934
      %v4063 = vpop.f32.mrb[0].mxu0
      %v4064 = vadd.f32 0.0, %v4063
      %v4065 = vpop.f32.mrb[0].mxu0
      %v4066 = vpop.f32.mrb[0].mxu0
      %v4067 = vadd.f32 0.0, %v4066
      %v4068 = vpop.f32.mrb[0].mxu0
      %4069 = vmatprep.mubr.bf16.mxu0 0
      %4070 = vmatmul.mubr.bf16.gmra.mrb[0].mxu0 %v3937
      %v4071 = vpop.f32.mrb[0].mxu0
      %v4072 = vadd.f32 0.0, %v4071
      %v4073 = vpop.f32.mrb[0].mxu0
      %v4074 = vpop.f32.mrb[0].mxu0
      %v4075 = vadd.f32 0.0, %v4074
      %v4076 = vpop.f32.mrb[0].mxu0
      %4077 = vmatprep.mubr.bf16.mxu0 0
      %4078 = vmatmul.mubr.bf16.gmra.mrb[0].mxu0 %v3940
      %v4079 = vpop.f32.mrb[0].mxu0
      %v4080 = vadd.f32 0.0, %v4079
      %v4081 = vpop.f32.mrb[0].mxu0
      %v4082 = vpop.f32.mrb[0].mxu0
      %v4083 = vadd.f32 0.0, %v4082
      %v4084 = vpop.f32.mrb[0].mxu0
      %4085 = vmatprep.mubr.bf16.mxu0 0
      %4086 = vmatmul.mubr.bf16.gmra.mrb[0].mxu0 %v3943
      %v4087 = vpop.f32.mrb[0].mxu0
      %v4088 = vadd.f32 0.0, %v4087
      %v4089 = vpop.f32.mrb[0].mxu0
      %v4090 = vpop.f32.mrb[0].mxu0
      %v4091 = vadd.f32 0.0, %v4090
      %v4092 = vpop.f32.mrb[0].mxu0
      %4093 = vmatprep.mubr.bf16.mxu0 0
      %4094 = vmatmul.mubr.bf16.gmra.mrb[0].mxu0 %v3946
      %v4095 = vpop.f32.mrb[0].mxu0
      %v4096 = vadd.f32 0.0, %v4095
      %v4097 = vpop.f32.mrb[0].mxu0
      %v4098 = vpop.f32.mrb[0].mxu0
      %v4099 = vadd.f32 0.0, %v4098
      %v4100 = vpop.f32.mrb[0].mxu0
      %4101 = vmatprep.mubr.bf16.mxu0 0
      %4102 = vmatmul.mubr.bf16.gmra.mrb[0].mxu0 %v3949
      %v4103 = vpop.f32.mrb[0].mxu0
      %v4104 = vadd.f32 0.0, %v4103
      %v4105 = vpop.f32.mrb[0].mxu0
      %v4106 = vpop.f32.mrb[0].mxu0
      %v4107 = vadd.f32 0.0, %v4106
      %v4108 = vpop.f32.mrb[0].mxu0
      %4109 = vmatprep.mubr.bf16.mxu0 0
      %4110 = vmatmul.mubr.bf16.gmra.mrb[0].mxu0 %v3952
      %v4111 = vpop.f32.mrb[0].mxu0
      %v4112 = vadd.f32 0.0, %v4111
      %v4113 = vpop.f32.mrb[0].mxu0
      %v4114 = vpop.f32.mrb[0].mxu0
      %v4115 = vadd.f32 0.0, %v4114
      %v4116 = vpop.f32.mrb[0].mxu0
      %4117 = vdwg.mxu0
      %v4120 = vunpack.c.l.b16 %v3520
      %v4121 = vunpack.c.l.b16 %v3521
      %v4122 = vpack.c.b16 %v4121, %v4120
      %v4123 = vsel %vm1686, %v3489, 0
      %v4125 = vsel %vm1686, %v3491, 0
      %v4127 = vsel %vm1686, %v3493, 0
      %v4129 = vsel %vm1686, %v3495, 0
      %v4131 = vsel %vm1686, %v3497, 0
      %v4133 = vsel %vm1686, %v3499, 0
      %v4135 = vsel %vm1686, %v3501, 0
      %v4137 = vsel %vm1686, %v3503, 0
      %v4139 = vsel %vm1686, %v3505, 0
      %v4141 = vsel %vm1686, %v3507, 0
      %v4143 = vsel %vm1686, %v3509, 0
      %v4145 = vsel %vm1686, %v3511, 0
      %v4147 = vsel %vm1686, %v3513, 0
      %v4149 = vsel %vm1686, %v3515, 0
      %v4151 = vsel %vm1686, %v3517, 0
      %v4153 = vsel %vm1686, %v3519, 0
      %v4156 = vsel %vm1735, %v4122, 0
      %4158 = vmatprep.subr.bf16.mxu0 0
      %4159 = vmatpush1.bf16.msra.mxu0 %v4156
      %4160 = vmatprep.subr.bf16.mxu0 0
      %4161 = vmatpush1.bf16.msra.mxu0 0
      %4162 = vmatprep.subr.bf16.mxu0 0
      %4163 = vmatpush1.bf16.msra.mxu0 0
      %4164 = vmatprep.subr.bf16.mxu0 0
      %4165 = vmatpush1.bf16.msra.mxu0 0
      %4166 = vmatprep.subr.bf16.mxu0 0
      %4167 = vmatpush1.bf16.msra.mxu0 0
      %4168 = vmatprep.subr.bf16.mxu0 0
      %4169 = vmatpush1.bf16.msra.mxu0 0
      %4170 = vmatprep.subr.bf16.mxu0 0
      %4171 = vmatpush1.bf16.msra.mxu0 0
      %4172 = vmatprep.subr.bf16.mxu0 0
      %4173 = vmatpush1.bf16.msra.mxu0 0
      %4174 = vmatprep.subr.bf16.mxu0 0
      %4175 = vmatpush1.bf16.msra.mxu0 0
      %4176 = vmatprep.subr.bf16.mxu0 0
      %4177 = vmatpush1.bf16.msra.mxu0 0
      %4178 = vmatprep.subr.bf16.mxu0 0
      %4179 = vmatpush1.bf16.msra.mxu0 0
      %4180 = vmatprep.subr.bf16.mxu0 0
      %4181 = vmatpush1.bf16.msra.mxu0 0
      %4182 = vmatprep.subr.bf16.mxu0 0
      %4183 = vmatpush1.bf16.msra.mxu0 0
      %4184 = vmatprep.subr.bf16.mxu0 0
      %4185 = vmatpush1.bf16.msra.mxu0 0
      %4186 = vmatprep.subr.bf16.mxu0 0
      %4187 = vmatpush1.bf16.msra.mxu0 0
      %4188 = vmatprep.subr.bf16.mxu0 0
      %4189 = vmatpush1.bf16.msra.mxu0 0
      %4190 = vmatprep.mubr.bf16.mxu0 0
      %4191 = vmatmul.mubr.bf16.gmra.mrb[0].mxu0 %v4123
      %v4192 = vpop.f32.mrb[0].mxu0
      %v4193 = vadd.f32 %v3992, %v4192
      %v4194 = vpop.f32.mrb[0].mxu0
      %v4195 = vpop.f32.mrb[0].mxu0
      %v4196 = vadd.f32 %v3995, %v4195
      %v4197 = vpop.f32.mrb[0].mxu0
      %4198 = vmatprep.mubr.bf16.mxu0 0
      %4199 = vmatmul.mubr.bf16.gmra.mrb[0].mxu0 %v4125
      %v4200 = vpop.f32.mrb[0].mxu0
      %v4201 = vadd.f32 %v4000, %v4200
      %v4202 = vpop.f32.mrb[0].mxu0
      %v4203 = vpop.f32.mrb[0].mxu0
      %v4204 = vadd.f32 %v4003, %v4203
      %v4205 = vpop.f32.mrb[0].mxu0
      %4206 = vmatprep.mubr.bf16.mxu0 0
      %4207 = vmatmul.mubr.bf16.gmra.mrb[0].mxu0 %v4127
      %v4208 = vpop.f32.mrb[0].mxu0
      %v4209 = vadd.f32 %v4008, %v4208
      %v4210 = vpop.f32.mrb[0].mxu0
      %v4211 = vpop.f32.mrb[0].mxu0
      %v4212 = vadd.f32 %v4011, %v4211
      %v4213 = vpop.f32.mrb[0].mxu0
      %4214 = vmatprep.mubr.bf16.mxu0 0
      %4215 = vmatmul.mubr.bf16.gmra.mrb[0].mxu0 %v4129
      %v4216 = vpop.f32.mrb[0].mxu0
      %v4217 = vadd.f32 %v4016, %v4216
      %v4218 = vpop.f32.mrb[0].mxu0
      %v4219 = vpop.f32.mrb[0].mxu0
      %v4220 = vadd.f32 %v4019, %v4219
      %v4221 = vpop.f32.mrb[0].mxu0
      %4222 = vmatprep.mubr.bf16.mxu0 0
      %4223 = vmatmul.mubr.bf16.gmra.mrb[0].mxu0 %v4131
      %v4224 = vpop.f32.mrb[0].mxu0
      %v4225 = vadd.f32 %v4024, %v4224
      %v4226 = vpop.f32.mrb[0].mxu0
      %v4227 = vpop.f32.mrb[0].mxu0
      %v4228 = vadd.f32 %v4027, %v4227
      %v4229 = vpop.f32.mrb[0].mxu0
      %4230 = vmatprep.mubr.bf16.mxu0 0
      %4231 = vmatmul.mubr.bf16.gmra.mrb[0].mxu0 %v4133
      %v4232 = vpop.f32.mrb[0].mxu0
      %v4233 = vadd.f32 %v4032, %v4232
      %v4234 = vpop.f32.mrb[0].mxu0
      %v4235 = vpop.f32.mrb[0].mxu0
      %v4236 = vadd.f32 %v4035, %v4235
      %v4237 = vpop.f32.mrb[0].mxu0
      %4238 = vmatprep.mubr.bf16.mxu0 0
      %4239 = vmatmul.mubr.bf16.gmra.mrb[0].mxu0 %v4135
      %v4240 = vpop.f32.mrb[0].mxu0
      %v4241 = vadd.f32 %v4040, %v4240
      %v4242 = vpop.f32.mrb[0].mxu0
      %v4243 = vpop.f32.mrb[0].mxu0
      %v4244 = vadd.f32 %v4043, %v4243
      %v4245 = vpop.f32.mrb[0].mxu0
      %4246 = vmatprep.mubr.bf16.mxu0 0
      %4247 = vmatmul.mubr.bf16.gmra.mrb[0].mxu0 %v4137
      %v4248 = vpop.f32.mrb[0].mxu0
      %v4249 = vadd.f32 %v4048, %v4248
      %v4250 = vpop.f32.mrb[0].mxu0
      %v4251 = vpop.f32.mrb[0].mxu0
      %v4252 = vadd.f32 %v4051, %v4251
      %v4253 = vpop.f32.mrb[0].mxu0
      %4254 = vmatprep.mubr.bf16.mxu0 0
      %4255 = vmatmul.mubr.bf16.gmra.mrb[0].mxu0 %v4139
      %v4256 = vpop.f32.mrb[0].mxu0
      %v4257 = vadd.f32 %v4056, %v4256
      %v4258 = vpop.f32.mrb[0].mxu0
      %v4259 = vpop.f32.mrb[0].mxu0
      %v4260 = vadd.f32 %v4059, %v4259
      %v4261 = vpop.f32.mrb[0].mxu0
      %4262 = vmatprep.mubr.bf16.mxu0 0
      %4263 = vmatmul.mubr.bf16.gmra.mrb[0].mxu0 %v4141
      %v4264 = vpop.f32.mrb[0].mxu0
      %v4265 = vadd.f32 %v4064, %v4264
      %v4266 = vpop.f32.mrb[0].mxu0
      %v4267 = vpop.f32.mrb[0].mxu0
      %v4268 = vadd.f32 %v4067, %v4267
      %v4269 = vpop.f32.mrb[0].mxu0
      %4270 = vmatprep.mubr.bf16.mxu0 0
      %4271 = vmatmul.mubr.bf16.gmra.mrb[0].mxu0 %v4143
      %v4272 = vpop.f32.mrb[0].mxu0
      %v4273 = vadd.f32 %v4072, %v4272
      %v4274 = vpop.f32.mrb[0].mxu0
      %v4275 = vpop.f32.mrb[0].mxu0
      %v4276 = vadd.f32 %v4075, %v4275
      %v4277 = vpop.f32.mrb[0].mxu0
      %4278 = vmatprep.mubr.bf16.mxu0 0
      %4279 = vmatmul.mubr.bf16.gmra.mrb[0].mxu0 %v4145
      %v4280 = vpop.f32.mrb[0].mxu0
      %v4281 = vadd.f32 %v4080, %v4280
      %v4282 = vpop.f32.mrb[0].mxu0
      %v4283 = vpop.f32.mrb[0].mxu0
      %v4284 = vadd.f32 %v4083, %v4283
      %v4285 = vpop.f32.mrb[0].mxu0
      %4286 = vmatprep.mubr.bf16.mxu0 0
      %4287 = vmatmul.mubr.bf16.gmra.mrb[0].mxu0 %v4147
      %v4288 = vpop.f32.mrb[0].mxu0
      %v4289 = vadd.f32 %v4088, %v4288
      %v4290 = vpop.f32.mrb[0].mxu0
      %v4291 = vpop.f32.mrb[0].mxu0
      %v4292 = vadd.f32 %v4091, %v4291
      %v4293 = vpop.f32.mrb[0].mxu0
      %4294 = vmatprep.mubr.bf16.mxu0 0
      %4295 = vmatmul.mubr.bf16.gmra.mrb[0].mxu0 %v4149
      %v4296 = vpop.f32.mrb[0].mxu0
      %v4297 = vadd.f32 %v4096, %v4296
      %v4298 = vpop.f32.mrb[0].mxu0
      %v4299 = vpop.f32.mrb[0].mxu0
      %v4300 = vadd.f32 %v4099, %v4299
      %v4301 = vpop.f32.mrb[0].mxu0
      %4302 = vmatprep.mubr.bf16.mxu0 0
      %4303 = vmatmul.mubr.bf16.gmra.mrb[0].mxu0 %v4151
      %v4304 = vpop.f32.mrb[0].mxu0
      %v4305 = vadd.f32 %v4104, %v4304
      %v4306 = vpop.f32.mrb[0].mxu0
      %v4307 = vpop.f32.mrb[0].mxu0
      %v4308 = vadd.f32 %v4107, %v4307
      %v4309 = vpop.f32.mrb[0].mxu0
      %4310 = vmatprep.mubr.bf16.mxu0 0
      %4311 = vmatmul.mubr.bf16.gmra.mrb[0].mxu0 %v4153
      %v4312 = vpop.f32.mrb[0].mxu0
      %v4313 = vadd.f32 %v4112, %v4312
      %v4314 = vpop.f32.mrb[0].mxu0
      %v4315 = vpop.f32.mrb[0].mxu0
      %v4316 = vadd.f32 %v4115, %v4315
      %v4317 = vpop.f32.mrb[0].mxu0
      %4318 = vdwg.mxu0
      %v4319 = vld [vmem:[#allocation3] sm:$0xe]
      %v4320 = vld [vmem:[#allocation3 + $0xc] sm:$0xe]
      %v4321 = vld [vmem:[#allocation3 + $0x18] sm:$0xe]
      %v4322 = vld [vmem:[#allocation3 + $0x24] sm:$0xe]
      %v4323 = vld [vmem:[#allocation3 + $0x30] sm:$0xe]
      %v4324 = vld [vmem:[#allocation3 + $0x3c] sm:$0xe]
      %v4325 = vld [vmem:[#allocation3 + $0x48] sm:$0xe]
      %v4326 = vld [vmem:[#allocation3 + $0x54] sm:$0xe]
      %v4327 = vld [vmem:[#allocation3 + $0x60] sm:$0xe]
      %v4328 = vld [vmem:[#allocation3 + $0x6c] sm:$0xe]
      %v4329 = vld [vmem:[#allocation3 + $0x78] sm:$0xe]
      %v4330 = vld [vmem:[#allocation3 + $0x84] sm:$0xe]
      %v4331 = vld [vmem:[#allocation3 + $0x90] sm:$0xe]
      %v4332 = vld [vmem:[#allocation3 + $0x9c] sm:$0xe]
      %v4333 = vld [vmem:[#allocation3 + $0xa8] sm:$0xe]
      %v4334 = vld [vmem:[#allocation3 + $0xb4] sm:$0xe]
      %v4335 = vld [vmem:[#allocation3 + $0xc0] sm:$0xe]
      %v4336 = vld [vmem:[#allocation3 + $0xcc] sm:$0xe]
      %v4353 = vunpack.c.l.b16 %v4319
      %v4354 = vunpack.c.l.b16 %v4320
      %v4355 = vunpack.c.l.b16 %v4321
      %v4356 = vunpack.c.l.b16 %v4322
      %v4357 = vunpack.c.l.b16 %v4323
      %v4358 = vunpack.c.l.b16 %v4324
      %v4359 = vunpack.c.l.b16 %v4325
      %v4360 = vunpack.c.l.b16 %v4326
      %v4361 = vunpack.c.l.b16 %v4327
      %v4362 = vunpack.c.l.b16 %v4328
      %v4363 = vunpack.c.l.b16 %v4329
      %v4364 = vunpack.c.l.b16 %v4330
      %v4365 = vunpack.c.l.b16 %v4331
      %v4366 = vunpack.c.l.b16 %v4332
      %v4367 = vunpack.c.l.b16 %v4333
      %v4368 = vunpack.c.l.b16 %v4334
      %v4369 = vpack.c.b16 %v3319, %v4353
      %v4370 = vpack.c.b16 %v3321, %v4354
      %v4371 = vpack.c.b16 %v3323, %v4355
      %v4372 = vpack.c.b16 %v3325, %v4356
      %v4373 = vpack.c.b16 %v3327, %v4357
      %v4374 = vpack.c.b16 %v3329, %v4358
      %v4375 = vpack.c.b16 %v3331, %v4359
      %v4376 = vpack.c.b16 %v3333, %v4360
      %v4377 = vpack.c.b16 %v3335, %v4361
      %v4378 = vpack.c.b16 %v3337, %v4362
      %v4379 = vpack.c.b16 %v3339, %v4363
      %v4380 = vpack.c.b16 %v3341, %v4364
      %v4381 = vpack.c.b16 %v3343, %v4365
      %v4382 = vpack.c.b16 %v3345, %v4366
      %v4383 = vpack.c.b16 %v3347, %v4367
      %v4384 = vpack.c.b16 %v3349, %v4368
      %v4386 = vunpack.c.l.b16 %v4335
      %v4387 = vpack.c.b16 %v3369, %v4386
      %4388 = vrot.lane.b32.xlu0 %v4370, 4
      %v4389 = vpop.permute.xlu0 %4388
      %4390 = vrot.lane.b32.xlu0 %v4371, 4
      %v4391 = vpop.permute.xlu0 %4390
      %4392 = vrot.lane.b32.xlu0 %v4372, 4
      %v4393 = vpop.permute.xlu0 %4392
      %4394 = vrot.lane.b32.xlu0 %v4373, 4
      %v4395 = vpop.permute.xlu0 %4394
      %4396 = vrot.lane.b32.xlu0 %v4374, 4
      %v4397 = vpop.permute.xlu0 %4396
      %4398 = vrot.lane.b32.xlu0 %v4375, 4
      %v4399 = vpop.permute.xlu0 %4398
      %4400 = vrot.lane.b32.xlu0 %v4376, 4
      %v4401 = vpop.permute.xlu0 %4400
      %4402 = vrot.lane.b32.xlu0 %v4377, 4
      %v4403 = vpop.permute.xlu0 %4402
      %4404 = vrot.lane.b32.xlu0 %v4378, 4
      %v4405 = vpop.permute.xlu0 %4404
      %4406 = vrot.lane.b32.xlu0 %v4379, 4
      %v4407 = vpop.permute.xlu0 %4406
      %4408 = vrot.lane.b32.xlu0 %v4380, 4
      %v4409 = vpop.permute.xlu0 %4408
      %4410 = vrot.lane.b32.xlu0 %v4381, 4
      %v4411 = vpop.permute.xlu0 %4410
      %4412 = vrot.lane.b32.xlu0 %v4382, 4
      %v4413 = vpop.permute.xlu0 %4412
      %4414 = vrot.lane.b32.xlu0 %v4383, 4
      %v4415 = vpop.permute.xlu0 %4414
      %4416 = vrot.lane.b32.xlu0 %v4384, 4
      %v4417 = vpop.permute.xlu0 %4416
      %4418 = vrot.lane.b32.xlu0 %v4387, 4
      %v4419 = vpop.permute.xlu0 %4418
      %v4421 = vunpack.c.l.b16 %v4336
      %v4422 = vpack.c.b16 %v3406, %v4421
      %4423 = vrot.lane.b32.xlu0 %v4371, 8
      %v4424 = vpop.permute.xlu0 %4423
      %4425 = vrot.lane.b32.xlu0 %v4372, 8
      %v4426 = vpop.permute.xlu0 %4425
      %4427 = vrot.lane.b32.xlu0 %v4373, 8
      %v4428 = vpop.permute.xlu0 %4427
      %4429 = vrot.lane.b32.xlu0 %v4374, 8
      %v4430 = vpop.permute.xlu0 %4429
      %4431 = vrot.lane.b32.xlu0 %v4375, 8
      %v4432 = vpop.permute.xlu0 %4431
      %4433 = vrot.lane.b32.xlu0 %v4376, 8
      %v4434 = vpop.permute.xlu0 %4433
      %4435 = vrot.lane.b32.xlu0 %v4377, 8
      %v4436 = vpop.permute.xlu0 %4435
      %4437 = vrot.lane.b32.xlu0 %v4378, 8
      %v4438 = vpop.permute.xlu0 %4437
      %4439 = vrot.lane.b32.xlu0 %v4379, 8
      %v4440 = vpop.permute.xlu0 %4439
      %4441 = vrot.lane.b32.xlu0 %v4380, 8
      %v4442 = vpop.permute.xlu0 %4441
      %4443 = vrot.lane.b32.xlu0 %v4381, 8
      %v4444 = vpop.permute.xlu0 %4443
      %4445 = vrot.lane.b32.xlu0 %v4382, 8
      %v4446 = vpop.permute.xlu0 %4445
      %4447 = vrot.lane.b32.xlu0 %v4383, 8
      %v4448 = vpop.permute.xlu0 %4447
      %4449 = vrot.lane.b32.xlu0 %v4384, 8
      %v4450 = vpop.permute.xlu0 %4449
      %4451 = vrot.lane.b32.xlu0 %v4387, 8
      %v4452 = vpop.permute.xlu0 %4451
      %4453 = vrot.lane.b32.xlu0 %v4422, 8
      %v4454 = vpop.permute.xlu0 %4453
      %v4457 = vsel %vm1217, %v4369, %v4389
      %v4460 = vsel %vm1217, %v4370, %v4391
      %v4463 = vsel %vm1217, %v4371, %v4393
      %v4466 = vsel %vm1217, %v4372, %v4395
      %v4469 = vsel %vm1217, %v4373, %v4397
      %v4472 = vsel %vm1217, %v4374, %v4399
      %v4475 = vsel %vm1217, %v4375, %v4401
      %v4478 = vsel %vm1217, %v4376, %v4403
      %v4481 = vsel %vm1217, %v4377, %v4405
      %v4484 = vsel %vm1217, %v4378, %v4407
      %v4487 = vsel %vm1217, %v4379, %v4409
      %v4490 = vsel %vm1217, %v4380, %v4411
      %v4493 = vsel %vm1217, %v4381, %v4413
      %v4496 = vsel %vm1217, %v4382, %v4415
      %v4499 = vsel %vm1217, %v4383, %v4417
      %v4502 = vsel %vm1217, %v4384, %v4419
      %v4504 = vsel %vm1266, %v4457, %v4424
      %v4506 = vsel %vm1266, %v4460, %v4426
      %v4508 = vsel %vm1266, %v4463, %v4428
      %v4510 = vsel %vm1266, %v4466, %v4430
      %v4512 = vsel %vm1266, %v4469, %v4432
      %v4514 = vsel %vm1266, %v4472, %v4434
      %v4516 = vsel %vm1266, %v4475, %v4436
      %v4518 = vsel %vm1266, %v4478, %v4438
      %v4520 = vsel %vm1266, %v4481, %v4440
      %v4522 = vsel %vm1266, %v4484, %v4442
      %v4524 = vsel %vm1266, %v4487, %v4444
      %v4526 = vsel %vm1266, %v4490, %v4446
      %v4528 = vsel %vm1266, %v4493, %v4448
      %v4530 = vsel %vm1266, %v4496, %v4450
      %v4532 = vsel %vm1266, %v4499, %v4452
      %v4534 = vsel %vm1266, %v4502, %v4454
      %v4567 = vrot.slane %v4504, 1
      %v4568 = vrot.slane %v3707, 1
      %v4569 = vsel %vm2349, %v4567, %v4568
      %v4570 = vrot.slane %v4506, 1
      %v4571 = vrot.slane %v3709, 1
      %v4572 = vsel %vm2349, %v4570, %v4571
      %v4573 = vrot.slane %v4508, 1
      %v4574 = vrot.slane %v3711, 1
      %v4575 = vsel %vm2349, %v4573, %v4574
      %v4576 = vrot.slane %v4510, 1
      %v4577 = vrot.slane %v3713, 1
      %v4578 = vsel %vm2349, %v4576, %v4577
      %v4579 = vrot.slane %v4512, 1
      %v4580 = vrot.slane %v3715, 1
      %v4581 = vsel %vm2349, %v4579, %v4580
      %v4582 = vrot.slane %v4514, 1
      %v4583 = vrot.slane %v3717, 1
      %v4584 = vsel %vm2349, %v4582, %v4583
      %v4585 = vrot.slane %v4516, 1
      %v4586 = vrot.slane %v3719, 1
      %v4587 = vsel %vm2349, %v4585, %v4586
      %v4588 = vrot.slane %v4518, 1
      %v4589 = vrot.slane %v3721, 1
      %v4590 = vsel %vm2349, %v4588, %v4589
      %v4591 = vrot.slane %v4520, 1
      %v4592 = vrot.slane %v3723, 1
      %v4593 = vsel %vm2349, %v4591, %v4592
      %v4594 = vrot.slane %v4522, 1
      %v4595 = vrot.slane %v3725, 1
      %v4596 = vsel %vm2349, %v4594, %v4595
      %v4597 = vrot.slane %v4524, 1
      %v4598 = vrot.slane %v3727, 1
      %v4599 = vsel %vm2349, %v4597, %v4598
      %v4600 = vrot.slane %v4526, 1
      %v4601 = vrot.slane %v3729, 1
      %v4602 = vsel %vm2349, %v4600, %v4601
      %v4603 = vrot.slane %v4528, 1
      %v4604 = vrot.slane %v3731, 1
      %v4605 = vsel %vm2349, %v4603, %v4604
      %v4606 = vrot.slane %v4530, 1
      %v4607 = vrot.slane %v3733, 1
      %v4608 = vsel %vm2349, %v4606, %v4607
      %v4609 = vrot.slane %v4532, 1
      %v4610 = vrot.slane %v3735, 1
      %v4611 = vsel %vm2349, %v4609, %v4610
      %v4612 = vrot.slane %v4534, 1
      %v4613 = vrot.slane %v3737, 1
      %v4614 = vsel %vm2349, %v4612, %v4613
      %s4615 = scalar_lea.vmem %s3, 16
      %v4616 = vld [vmem:[%s4615] sm:$0xf]
      %v4617 = vld [vmem:[%s4615 + $0x4] sm:$0x3]
      %v4620 = vunpack.c.l.b16 %v4616
      %v4621 = vunpack.c.l.b16 %v4617
      %v4622 = vpack.c.b16 %v4621, %v4620
      %v4624 = vsel %vm1686, %v4569, 0
      %v4627 = vsel %vm1686, %v4572, 0
      %v4630 = vsel %vm1686, %v4575, 0
      %v4633 = vsel %vm1686, %v4578, 0
      %v4636 = vsel %vm1686, %v4581, 0
      %v4639 = vsel %vm1686, %v4584, 0
      %v4642 = vsel %vm1686, %v4587, 0
      %v4645 = vsel %vm1686, %v4590, 0
      %v4648 = vsel %vm1686, %v4593, 0
      %v4651 = vsel %vm1686, %v4596, 0
      %v4654 = vsel %vm1686, %v4599, 0
      %v4657 = vsel %vm1686, %v4602, 0
      %v4660 = vsel %vm1686, %v4605, 0
      %v4663 = vsel %vm1686, %v4608, 0
      %v4666 = vsel %vm1686, %v4611, 0
      %v4669 = vsel %vm1686, %v4614, 0
      %v4672 = vsel %vm1735, %v4622, 0
      %4674 = vmatprep.subr.bf16.mxu0 0
      %4675 = vmatpush1.bf16.msra.mxu0 %v4672
      %4676 = vmatprep.subr.bf16.mxu0 0
      %4677 = vmatpush1.bf16.msra.mxu0 0
      %4678 = vmatprep.subr.bf16.mxu0 0
      %4679 = vmatpush1.bf16.msra.mxu0 0
      %4680 = vmatprep.subr.bf16.mxu0 0
      %4681 = vmatpush1.bf16.msra.mxu0 0
      %4682 = vmatprep.subr.bf16.mxu0 0
      %4683 = vmatpush1.bf16.msra.mxu0 0
      %4684 = vmatprep.subr.bf16.mxu0 0
      %4685 = vmatpush1.bf16.msra.mxu0 0
      %4686 = vmatprep.subr.bf16.mxu0 0
      %4687 = vmatpush1.bf16.msra.mxu0 0
      %4688 = vmatprep.subr.bf16.mxu0 0
      %4689 = vmatpush1.bf16.msra.mxu0 0
      %4690 = vmatprep.subr.bf16.mxu0 0
      %4691 = vmatpush1.bf16.msra.mxu0 0
      %4692 = vmatprep.subr.bf16.mxu0 0
      %4693 = vmatpush1.bf16.msra.mxu0 0
      %4694 = vmatprep.subr.bf16.mxu0 0
      %4695 = vmatpush1.bf16.msra.mxu0 0
      %4696 = vmatprep.subr.bf16.mxu0 0
      %4697 = vmatpush1.bf16.msra.mxu0 0
      %4698 = vmatprep.subr.bf16.mxu0 0
      %4699 = vmatpush1.bf16.msra.mxu0 0
      %4700 = vmatprep.subr.bf16.mxu0 0
      %4701 = vmatpush1.bf16.msra.mxu0 0
      %4702 = vmatprep.subr.bf16.mxu0 0
      %4703 = vmatpush1.bf16.msra.mxu0 0
      %4704 = vmatprep.subr.bf16.mxu0 0
      %4705 = vmatpush1.bf16.msra.mxu0 0
      %4706 = vmatprep.mubr.bf16.mxu0 0
      %4707 = vmatmul.mubr.bf16.gmra.mrb[0].mxu0 %v4624
      %v4708 = vpop.f32.mrb[0].mxu0
      %v4709 = vadd.f32 0.0, %v4708
      %v4710 = vpop.f32.mrb[0].mxu0
      %v4711 = vpop.f32.mrb[0].mxu0
      %v4712 = vadd.f32 0.0, %v4711
      %v4713 = vpop.f32.mrb[0].mxu0
      %4714 = vmatprep.mubr.bf16.mxu0 0
      %4715 = vmatmul.mubr.bf16.gmra.mrb[0].mxu0 %v4627
      %v4716 = vpop.f32.mrb[0].mxu0
      %v4717 = vadd.f32 0.0, %v4716
      %v4718 = vpop.f32.mrb[0].mxu0
      %v4719 = vpop.f32.mrb[0].mxu0
      %v4720 = vadd.f32 0.0, %v4719
      %v4721 = vpop.f32.mrb[0].mxu0
      %4722 = vmatprep.mubr.bf16.mxu0 0
      %4723 = vmatmul.mubr.bf16.gmra.mrb[0].mxu0 %v4630
      %v4724 = vpop.f32.mrb[0].mxu0
      %v4725 = vadd.f32 0.0, %v4724
      %v4726 = vpop.f32.mrb[0].mxu0
      %v4727 = vpop.f32.mrb[0].mxu0
      %v4728 = vadd.f32 0.0, %v4727
      %v4729 = vpop.f32.mrb[0].mxu0
      %4730 = vmatprep.mubr.bf16.mxu0 0
      %4731 = vmatmul.mubr.bf16.gmra.mrb[0].mxu0 %v4633
      %v4732 = vpop.f32.mrb[0].mxu0
      %v4733 = vadd.f32 0.0, %v4732
      %v4734 = vpop.f32.mrb[0].mxu0
      %v4735 = vpop.f32.mrb[0].mxu0
      %v4736 = vadd.f32 0.0, %v4735
      %v4737 = vpop.f32.mrb[0].mxu0
      %4738 = vmatprep.mubr.bf16.mxu0 0
      %4739 = vmatmul.mubr.bf16.gmra.mrb[0].mxu0 %v4636
      %v4740 = vpop.f32.mrb[0].mxu0
      %v4741 = vadd.f32 0.0, %v4740
      %v4742 = vpop.f32.mrb[0].mxu0
      %v4743 = vpop.f32.mrb[0].mxu0
      %v4744 = vadd.f32 0.0, %v4743
      %v4745 = vpop.f32.mrb[0].mxu0
      %4746 = vmatprep.mubr.bf16.mxu0 0
      %4747 = vmatmul.mubr.bf16.gmra.mrb[0].mxu0 %v4639
      %v4748 = vpop.f32.mrb[0].mxu0
      %v4749 = vadd.f32 0.0, %v4748
      %v4750 = vpop.f32.mrb[0].mxu0
      %v4751 = vpop.f32.mrb[0].mxu0
      %v4752 = vadd.f32 0.0, %v4751
      %v4753 = vpop.f32.mrb[0].mxu0
      %4754 = vmatprep.mubr.bf16.mxu0 0
      %4755 = vmatmul.mubr.bf16.gmra.mrb[0].mxu0 %v4642
      %v4756 = vpop.f32.mrb[0].mxu0
      %v4757 = vadd.f32 0.0, %v4756
      %v4758 = vpop.f32.mrb[0].mxu0
      %v4759 = vpop.f32.mrb[0].mxu0
      %v4760 = vadd.f32 0.0, %v4759
      %v4761 = vpop.f32.mrb[0].mxu0
      %4762 = vmatprep.mubr.bf16.mxu0 0
      %4763 = vmatmul.mubr.bf16.gmra.mrb[0].mxu0 %v4645
      %v4764 = vpop.f32.mrb[0].mxu0
      %v4765 = vadd.f32 0.0, %v4764
      %v4766 = vpop.f32.mrb[0].mxu0
      %v4767 = vpop.f32.mrb[0].mxu0
      %v4768 = vadd.f32 0.0, %v4767
      %v4769 = vpop.f32.mrb[0].mxu0
      %4770 = vmatprep.mubr.bf16.mxu0 0
      %4771 = vmatmul.mubr.bf16.gmra.mrb[0].mxu0 %v4648
      %v4772 = vpop.f32.mrb[0].mxu0
      %v4773 = vadd.f32 0.0, %v4772
      %v4774 = vpop.f32.mrb[0].mxu0
      %v4775 = vpop.f32.mrb[0].mxu0
      %v4776 = vadd.f32 0.0, %v4775
      %v4777 = vpop.f32.mrb[0].mxu0
      %4778 = vmatprep.mubr.bf16.mxu0 0
      %4779 = vmatmul.mubr.bf16.gmra.mrb[0].mxu0 %v4651
      %v4780 = vpop.f32.mrb[0].mxu0
      %v4781 = vadd.f32 0.0, %v4780
      %v4782 = vpop.f32.mrb[0].mxu0
      %v4783 = vpop.f32.mrb[0].mxu0
      %v4784 = vadd.f32 0.0, %v4783
      %v4785 = vpop.f32.mrb[0].mxu0
      %4786 = vmatprep.mubr.bf16.mxu0 0
      %4787 = vmatmul.mubr.bf16.gmra.mrb[0].mxu0 %v4654
      %v4788 = vpop.f32.mrb[0].mxu0
      %v4789 = vadd.f32 0.0, %v4788
      %v4790 = vpop.f32.mrb[0].mxu0
      %v4791 = vpop.f32.mrb[0].mxu0
      %v4792 = vadd.f32 0.0, %v4791
      %v4793 = vpop.f32.mrb[0].mxu0
      %4794 = vmatprep.mubr.bf16.mxu0 0
      %4795 = vmatmul.mubr.bf16.gmra.mrb[0].mxu0 %v4657
      %v4796 = vpop.f32.mrb[0].mxu0
      %v4797 = vadd.f32 0.0, %v4796
      %v4798 = vpop.f32.mrb[0].mxu0
      %v4799 = vpop.f32.mrb[0].mxu0
      %v4800 = vadd.f32 0.0, %v4799
      %v4801 = vpop.f32.mrb[0].mxu0
      %4802 = vmatprep.mubr.bf16.mxu0 0
      %4803 = vmatmul.mubr.bf16.gmra.mrb[0].mxu0 %v4660
      %v4804 = vpop.f32.mrb[0].mxu0
      %v4805 = vadd.f32 0.0, %v4804
      %v4806 = vpop.f32.mrb[0].mxu0
      %v4807 = vpop.f32.mrb[0].mxu0
      %v4808 = vadd.f32 0.0, %v4807
      %v4809 = vpop.f32.mrb[0].mxu0
      %4810 = vmatprep.mubr.bf16.mxu0 0
      %4811 = vmatmul.mubr.bf16.gmra.mrb[0].mxu0 %v4663
      %v4812 = vpop.f32.mrb[0].mxu0
      %v4813 = vadd.f32 0.0, %v4812
      %v4814 = vpop.f32.mrb[0].mxu0
      %v4815 = vpop.f32.mrb[0].mxu0
      %v4816 = vadd.f32 0.0, %v4815
      %v4817 = vpop.f32.mrb[0].mxu0
      %4818 = vmatprep.mubr.bf16.mxu0 0
      %4819 = vmatmul.mubr.bf16.gmra.mrb[0].mxu0 %v4666
      %v4820 = vpop.f32.mrb[0].mxu0
      %v4821 = vadd.f32 0.0, %v4820
      %v4822 = vpop.f32.mrb[0].mxu0
      %v4823 = vpop.f32.mrb[0].mxu0
      %v4824 = vadd.f32 0.0, %v4823
      %v4825 = vpop.f32.mrb[0].mxu0
      %4826 = vmatprep.mubr.bf16.mxu0 0
      %4827 = vmatmul.mubr.bf16.gmra.mrb[0].mxu0 %v4669
      %v4828 = vpop.f32.mrb[0].mxu0
      %v4829 = vadd.f32 0.0, %v4828
      %v4830 = vpop.f32.mrb[0].mxu0
      %v4831 = vpop.f32.mrb[0].mxu0
      %v4832 = vadd.f32 0.0, %v4831
      %v4833 = vpop.f32.mrb[0].mxu0
      %4834 = vdwg.mxu0
      %v4835 = vadd.f32 %v4193, %v4709
      %v4836 = vadd.f32 %v4196, %v4712
      %v4837 = vadd.f32 %v4201, %v4717
      %v4838 = vadd.f32 %v4204, %v4720
      %v4839 = vadd.f32 %v4209, %v4725
      %v4840 = vadd.f32 %v4212, %v4728
      %v4841 = vadd.f32 %v4217, %v4733
      %v4842 = vadd.f32 %v4220, %v4736
      %v4843 = vadd.f32 %v4225, %v4741
      %v4844 = vadd.f32 %v4228, %v4744
      %v4845 = vadd.f32 %v4233, %v4749
      %v4846 = vadd.f32 %v4236, %v4752
      %v4847 = vadd.f32 %v4241, %v4757
      %v4848 = vadd.f32 %v4244, %v4760
      %v4849 = vadd.f32 %v4249, %v4765
      %v4850 = vadd.f32 %v4252, %v4768
      %v4851 = vadd.f32 %v4257, %v4773
      %v4852 = vadd.f32 %v4260, %v4776
      %v4853 = vadd.f32 %v4265, %v4781
      %v4854 = vadd.f32 %v4268, %v4784
      %v4855 = vadd.f32 %v4273, %v4789
      %v4856 = vadd.f32 %v4276, %v4792
      %v4857 = vadd.f32 %v4281, %v4797
      %v4858 = vadd.f32 %v4284, %v4800
      %v4859 = vadd.f32 %v4289, %v4805
      %v4860 = vadd.f32 %v4292, %v4808
      %v4861 = vadd.f32 %v4297, %v4813
      %v4862 = vadd.f32 %v4300, %v4816
      %v4863 = vadd.f32 %v4305, %v4821
      %v4864 = vadd.f32 %v4308, %v4824
      %v4865 = vadd.f32 %v4313, %v4829
      %v4866 = vadd.f32 %v4316, %v4832
      %v4867 = vld [vmem:[%s4] sm:$0x1]
      %v4869 = vlaneseq
      %v4870 = vshrl.u32 %v4869, 7
      %v4871 = vsub.s32 0, %v4870
      %v4872 = vrot.slane %v4867, %v4871
      %v4874 = vadd.f32 %v4835, %v4872
      %v4875 = vadd.f32 %v4836, %v4872
      %v4876 = vadd.f32 %v4837, %v4872
      %v4877 = vadd.f32 %v4838, %v4872
      %v4878 = vadd.f32 %v4839, %v4872
      %v4879 = vadd.f32 %v4840, %v4872
      %v4880 = vadd.f32 %v4841, %v4872
      %v4881 = vadd.f32 %v4842, %v4872
      %v4882 = vadd.f32 %v4843, %v4872
      %v4883 = vadd.f32 %v4844, %v4872
      %v4884 = vadd.f32 %v4845, %v4872
      %v4885 = vadd.f32 %v4846, %v4872
      %v4886 = vadd.f32 %v4847, %v4872
      %v4887 = vadd.f32 %v4848, %v4872
      %v4888 = vadd.f32 %v4849, %v4872
      %v4889 = vadd.f32 %v4850, %v4872
      %v4890 = vadd.f32 %v4851, %v4872
      %v4891 = vadd.f32 %v4852, %v4872
      %v4892 = vadd.f32 %v4853, %v4872
      %v4893 = vadd.f32 %v4854, %v4872
      %v4894 = vadd.f32 %v4855, %v4872
      %v4895 = vadd.f32 %v4856, %v4872
      %v4896 = vadd.f32 %v4857, %v4872
      %v4897 = vadd.f32 %v4858, %v4872
      %v4898 = vadd.f32 %v4859, %v4872
      %v4899 = vadd.f32 %v4860, %v4872
      %v4900 = vadd.f32 %v4861, %v4872
      %v4901 = vadd.f32 %v4862, %v4872
      %v4902 = vadd.f32 %v4863, %v4872
      %v4903 = vadd.f32 %v4864, %v4872
      %v4904 = vadd.f32 %v4865, %v4872
      %v4905 = vadd.f32 %v4866, %v4872
      %v4906 = vadd.f32 %v462, %v4874
      %v4907 = vadd.f32 %v463, %v4875
      %v4908 = vadd.f32 %v464, %v4876
      %v4909 = vadd.f32 %v465, %v4877
      %v4910 = vadd.f32 %v466, %v4878
      %v4911 = vadd.f32 %v467, %v4879
      %v4912 = vadd.f32 %v468, %v4880
      %v4913 = vadd.f32 %v469, %v4881
      %v4914 = vadd.f32 %v470, %v4882
      %v4915 = vadd.f32 %v471, %v4883
      %v4916 = vadd.f32 %v472, %v4884
      %v4917 = vadd.f32 %v473, %v4885
      %v4918 = vadd.f32 %v474, %v4886
      %v4919 = vadd.f32 %v475, %v4887
      %v4920 = vadd.f32 %v476, %v4888
      %v4921 = vadd.f32 %v477, %v4889
      %v4922 = vadd.f32 %v478, %v4890
      %v4923 = vadd.f32 %v479, %v4891
      %v4924 = vadd.f32 %v480, %v4892
      %v4925 = vadd.f32 %v481, %v4893
      %v4926 = vadd.f32 %v482, %v4894
      %v4927 = vadd.f32 %v483, %v4895
      %v4928 = vadd.f32 %v484, %v4896
      %v4929 = vadd.f32 %v485, %v4897
      %v4930 = vadd.f32 %v486, %v4898
      %v4931 = vadd.f32 %v487, %v4899
      %v4932 = vadd.f32 %v488, %v4900
      %v4933 = vadd.f32 %v489, %v4901
      %v4934 = vadd.f32 %v490, %v4902
      %v4935 = vadd.f32 %v491, %v4903
      %v4936 = vadd.f32 %v492, %v4904
      %v4937 = vadd.f32 %v493, %v4905
      %4938 = vst.msk [vmem:[%s224] sm:$0xff] %vm1217, %v4906
      %4939 = vst.msk [vmem:[%s224 + $0x8] sm:$0xff] %vm1217, %v4907
      %4940 = vst.msk [vmem:[%s224 + $0x10] sm:$0xff] %vm1217, %v4908
      %4941 = vst.msk [vmem:[%s224 + $0x18] sm:$0xff] %vm1217, %v4909
      %4942 = vst.msk [vmem:[%s224 + $0x20] sm:$0xff] %vm1217, %v4910
      %4943 = vst.msk [vmem:[%s224 + $0x28] sm:$0xff] %vm1217, %v4911
      %4944 = vst.msk [vmem:[%s224 + $0x30] sm:$0xff] %vm1217, %v4912
      %4945 = vst.msk [vmem:[%s224 + $0x38] sm:$0xff] %vm1217, %v4913
      %4946 = vst.msk [vmem:[%s224 + $0x40] sm:$0xff] %vm1217, %v4914
      %4947 = vst.msk [vmem:[%s224 + $0x48] sm:$0xff] %vm1217, %v4915
      %4948 = vst.msk [vmem:[%s224 + $0x50] sm:$0xff] %vm1217, %v4916
      %4949 = vst.msk [vmem:[%s224 + $0x58] sm:$0xff] %vm1217, %v4917
      %4950 = vst.msk [vmem:[%s224 + $0x60] sm:$0xff] %vm1217, %v4918
      %4951 = vst.msk [vmem:[%s224 + $0x68] sm:$0xff] %vm1217, %v4919
      %4952 = vst.msk [vmem:[%s224 + $0x70] sm:$0xff] %vm1217, %v4920
      %4953 = vst.msk [vmem:[%s224 + $0x78] sm:$0xff] %vm1217, %v4921
      %4954 = vst.msk [vmem:[%s224 + $0x80] sm:$0xff] %vm1217, %v4922
      %4955 = vst.msk [vmem:[%s224 + $0x88] sm:$0xff] %vm1217, %v4923
      %4956 = vst.msk [vmem:[%s224 + $0x90] sm:$0xff] %vm1217, %v4924
      %4957 = vst.msk [vmem:[%s224 + $0x98] sm:$0xff] %vm1217, %v4925
      %4958 = vst.msk [vmem:[%s224 + $0xa0] sm:$0xff] %vm1217, %v4926
      %4959 = vst.msk [vmem:[%s224 + $0xa8] sm:$0xff] %vm1217, %v4927
      %4960 = vst.msk [vmem:[%s224 + $0xb0] sm:$0xff] %vm1217, %v4928
      %4961 = vst.msk [vmem:[%s224 + $0xb8] sm:$0xff] %vm1217, %v4929
      %4962 = vst.msk [vmem:[%s224 + $0xc0] sm:$0xff] %vm1217, %v4930
      %4963 = vst.msk [vmem:[%s224 + $0xc8] sm:$0xff] %vm1217, %v4931
      %4964 = vst.msk [vmem:[%s224 + $0xd0] sm:$0xff] %vm1217, %v4932
      %4965 = vst.msk [vmem:[%s224 + $0xd8] sm:$0xff] %vm1217, %v4933
      %4966 = vst.msk [vmem:[%s224 + $0xe0] sm:$0xff] %vm1217, %v4934
      %4967 = vst.msk [vmem:[%s224 + $0xe8] sm:$0xff] %vm1217, %v4935
      %4968 = vst.msk [vmem:[%s224 + $0xf0] sm:$0xff] %vm1217, %v4936
      %4969 = vst.msk [vmem:[%s224 + $0xf8] sm:$0xff] %vm1217, %v4937
      %p4970 = scmp.lt.s32.totalorder %s16, 1
      %s4971 = scalar_select %p4970, %s16, 1
      %s4972 = smul.addr %s4971, 32
      %s4973 = smul.addr %s4972, 8
      %s4974 = scalar_lea.vmem %s5, %s4973
      // Predicated region
      $region41: #{tpu_custom_call.1} parent=39 // pred_check
        %p4975 = pneg %p144
      $region42: #{tpu_custom_call.1} parent=39 // pred_check_branch
        %4977 = sbr.rel (%p4975) target = $region44
      $region43: #{tpu_custom_call.1} parent=39 // pred_region
        _
      $region44: #{tpu_custom_call.1} parent=39 // pred_fallthru
        _
    $region40: #{tpu_custom_call.1} parent=5 // pred_fallthru
      _
    %p4978 = scmp.le.s32.totalorder 2, %s11
    // Predicated region
    $region45: #{tpu_custom_call.1} parent=5 // pred_check
      %p4979 = pneg %p4978
    $region46: #{tpu_custom_call.1} parent=5 // pred_check_branch
      %4981 = sbr.rel (%p4979) target = $region48
    $region47: #{tpu_custom_call.1} parent=5 // pred_region
      %s4982 = ssub.s32 %s11, 2
      // Predicated region
      $region49: #{tpu_custom_call.1} parent=47 // pred_check
        %p4983 = pneg %p150
      $region50: #{tpu_custom_call.1} parent=47 // pred_check_branch
        %4985 = sbr.rel (%p4983) target = $region52
      $region51: #{tpu_custom_call.1} parent=47 // pred_region
        %p4986 = scmp.lt.s32.totalorder %s17, 1
        %s4987 = scalar_select %p4986, %s17, 1
        %s4988 = smul.addr %s4987, 32
        %s4989 = smul.addr %s4988, 8
        %s4990 = scalar_lea.vmem %s5, %s4989
      $region52: #{tpu_custom_call.1} parent=47 // pred_fallthru
        _
    $region48: #{tpu_custom_call.1} parent=5 // pred_fallthru
      _
  $region6: #{tpu_custom_call.1} parent=0 // loop_footer
    %s15 = sadd.s32 1, %s11
  $region7: #{tpu_custom_call.1} parent=0 // loop_footer_branch
    %10 = sbr.rel target = $region3
  $region8: #{tpu_custom_call.1} parent=0 // loop_exit
    _

</llo_original>
